<compile_context>
chip_gen: v6e
topology: v6e:2x2x1
jax: 0.10.0
libtpu: 0.0.40
codegen_flags: <defaults>
</compile_context>

<pallas_src>
import jax
import jax.numpy as jnp
from jax.experimental import pallas as pl
from jax.experimental.pallas import tpu as pltpu

# logical / padded feature sizes
D_IN, D_H, D_L = 784, 400, 20
D_IN_P, D_H_P, D_L_P = 896, 512, 128   # multiples of 128


# ----------------------------------------------------------------------------
# Kernel
# ----------------------------------------------------------------------------
def vae_kernel(x_ref, eps_ref,
               w1_ref, b1_ref,
               wml_ref, bml_ref,
               w3_ref, b3_ref,
               w4_ref, b4_ref,
               recon_ref, mu_ref, logvar_ref):
    bf16 = jnp.bfloat16
    x = x_ref[...]

    # ---- encoder ----
    h1 = jnp.dot(x.astype(bf16), w1_ref[...],
                 preferred_element_type=jnp.float32) + b1_ref[...]
    h1 = jnp.maximum(h1, 0.0)                                    # F.relu

    # fused mu / logvar projection: lanes [0,128) = mu, [128,256) = logvar
    y = jnp.dot(h1.astype(bf16), wml_ref[...],
                preferred_element_type=jnp.float32) + bml_ref[...]
    mu = y[:, :D_L_P]
    logvar = y[:, D_L_P:]

    # ---- reparametrize:  z = eps * exp(0.5 * logvar) + mu ----
    # padded lanes: eps==0, logvar==0, mu==0  ->  z padded lanes are exactly 0
    z = eps_ref[...] * jnp.exp(0.5 * logvar) + mu

    # ---- decoder ----
    h3 = jnp.dot(z.astype(bf16), w3_ref[...],
                 preferred_element_type=jnp.float32) + b3_ref[...]
    h3 = jnp.maximum(h3, 0.0)                                    # F.relu
    recon = jnp.tanh(jnp.dot(h3.astype(bf16), w4_ref[...],
                             preferred_element_type=jnp.float32) + b4_ref[...])

    recon_ref[...] = recon
    mu_ref[...] = mu
    logvar_ref[...] = logvar


# ----------------------------------------------------------------------------
# Wrapper
# ----------------------------------------------------------------------------
def prepare_padded_params(p):
    """Zero-pad to 128-aligned shapes; weights -> bf16, biases stay f32."""
    f32, bf16 = jnp.float32, jnp.bfloat16
    w1 = jnp.zeros((D_IN_P, D_H_P), f32).at[:D_IN, :D_H].set(p["w1"]).astype(bf16)
    b1 = jnp.zeros((1, D_H_P), f32).at[:, :D_H].set(p["b1"])
    wml = (jnp.zeros((D_H_P, 2 * D_L_P), f32)
           .at[:D_H, :D_L].set(p["w21"])
           .at[:D_H, D_L_P:D_L_P + D_L].set(p["w22"])).astype(bf16)
    bml = (jnp.zeros((1, 2 * D_L_P), f32)
           .at[:, :D_L].set(p["b21"])
           .at[:, D_L_P:D_L_P + D_L].set(p["b22"]))
    w3 = jnp.zeros((D_L_P, D_H_P), f32).at[:D_L, :D_H].set(p["w3"]).astype(bf16)
    b3 = jnp.zeros((1, D_H_P), f32).at[:, :D_H].set(p["b3"])
    w4 = jnp.zeros((D_H_P, D_IN_P), f32).at[:D_H, :D_IN].set(p["w4"]).astype(bf16)
    b4 = jnp.zeros((1, D_IN_P), f32).at[:, :D_IN].set(p["b4"])
    return (w1, b1, wml, bml, w3, b3, w4, b4)


def _choose_batch_tile(batch):
    b8 = ((batch + 7) // 8) * 8            # sublane multiple for f32 activations
    if b8 <= 256:
        return b8                            # single tile
    if b8 % 256 == 0:
        return 256                           # fills the 256-wide v6e/v7x MXU
    return 128
    # note: K (784/400) is NOT split across a grid axis; only batch is tiled.


def vae_forward(x, eps, padded_params):
    B = x.shape[0]
    TB = _choose_batch_tile(B)
    B_pad = -(-B // TB) * TB

    x_p = jnp.zeros((B_pad, D_IN_P), jnp.float32).at[:B, :D_IN].set(x)
    eps_p = jnp.zeros((B_pad, D_L_P), jnp.float32).at[:B, :D_L].set(eps)

    w1, b1, wml, bml, w3, b3, w4, b4 = padded_params

    def row_spec(width):                     # batch-tiled activation / output
        return pl.BlockSpec((TB, width), lambda i: (i, 0))

    def resident(arr):                       # weights stay in VMEM across tiles
        return pl.BlockSpec(arr.shape, lambda i: (0, 0))

    flops = 2 * B_pad * (D_IN_P * D_H_P + D_H_P * 2 * D_L_P
                         + D_L_P * D_H_P + D_H_P * D_IN_P)
    transcendentals = B_pad * (D_L_P + D_IN_P)                  # exp + tanh
    bytes_w = sum(int(a.size) * a.dtype.itemsize
                  for a in (w1, b1, wml, bml, w3, b3, w4, b4))
    bytes_act = 4 * B_pad * (2 * D_IN_P + 3 * D_L_P)

    recon_p, mu_p, logvar_p = pl.pallas_call(
        vae_kernel,
        grid=(B_pad // TB,),
        in_specs=[row_spec(D_IN_P), row_spec(D_L_P),
                  resident(w1), resident(b1),
                  resident(wml), resident(bml),
                  resident(w3), resident(b3),
                  resident(w4), resident(b4)],
        out_specs=(row_spec(D_IN_P), row_spec(D_L_P), row_spec(D_L_P)),
        out_shape=(jax.ShapeDtypeStruct((B_pad, D_IN_P), jnp.float32),
                   jax.ShapeDtypeStruct((B_pad, D_L_P), jnp.float32),
                   jax.ShapeDtypeStruct((B_pad, D_L_P), jnp.float32)),
        compiler_params=pltpu.CompilerParams(
            dimension_semantics=("parallel",)),
        cost_estimate=pl.CostEstimate(flops=flops,
                                      transcendentals=transcendentals,
                                      bytes_accessed=bytes_w + bytes_act),
    )(x_p, eps_p, w1, b1, wml, bml, w3, b3, w4, b4)

    return recon_p[:B, :D_IN], mu_p[:B, :D_L], logvar_p[:B, :D_L]


# ----------------------------------------------------------------------------
# Parameter init (matches PyTorch nn.Linear default) + references
# ----------------------------------------------------------------------------
def _linear_params(key, fan_in, fan_out):
    kw, kb = jax.random.split(key)
    bound = 1.0 / jnp.sqrt(fan_in)
    w = jax.random.uniform(kw, (fan_in, fan_out), jnp.float32, -bound, bound)
    b = jax.random.uniform(kb, (1, fan_out), jnp.float32, -bound, bound)
    return w, b


def make_params(key):
    k1, k21, k22, k3, k4 = jax.random.split(key, 5)
    w1, b1 = _linear_params(k1, 784, 400)
    w21, b21 = _linear_params(k21, 400, 20)
    w22, b22 = _linear_params(k22, 400, 20)
    w3, b3 = _linear_params(k3, 20, 400)
    w4, b4 = _linear_params(k4, 400, 784)
    return dict(w1=w1, b1=b1, w21=w21, b21=b21, w22=w22, b22=b22,
                w3=w3, b3=b3, w4=w4, b4=b4)


def vae_reference_f32(x, eps, p):
    h1 = jnp.maximum(x @ p["w1"] + p["b1"], 0.0)
    mu = h1 @ p["w21"] + p["b21"]
    logvar = h1 @ p["w22"] + p["b22"]
    z = eps * jnp.exp(0.5 * logvar) + mu
    h3 = jnp.maximum(z @ p["w3"] + p["b3"], 0.0)
    recon = jnp.tanh(h3 @ p["w4"] + p["b4"])
    return recon, mu, logvar


def vae_reference_bf16(x, eps, p):
    """Same bf16-operand / f32-accumulate recipe the kernel uses."""
    mm = lambda a, w: jnp.dot(a.astype(jnp.bfloat16), w.astype(jnp.bfloat16),
                              preferred_element_type=jnp.float32)
    h1 = jnp.maximum(mm(x, p["w1"]) + p["b1"], 0.0)
    mu = mm(h1, p["w21"]) + p["b21"]
    logvar = mm(h1, p["w22"]) + p["b22"]
    z = eps * jnp.exp(0.5 * logvar) + mu
    h3 = jnp.maximum(mm(z, p["w3"]) + p["b3"], 0.0)
    recon = jnp.tanh(mm(h3, p["w4"]) + p["b4"])
    return recon, mu, logvar


if __name__ == "__main__":
    key = jax.random.PRNGKey(0)
    k_params, k_x, k_eps = jax.random.split(key, 3)

    B = 8
    params = make_params(k_params)
    padded = prepare_padded_params(params)
    x = jax.random.normal(k_x, (B, 784), jnp.float32)
    eps = jax.random.normal(k_eps, (B, 20), jnp.float32)

    recon, mu, logvar = vae_forward(x, eps, padded)
    jax.block_until_ready((recon, mu, logvar))

    # tight check against a reference using the same bf16-matmul recipe
    r_b, mu_b, lv_b = vae_reference_bf16(x, eps, params)
    assert jnp.allclose(recon, r_b, atol=1e-2, rtol=1e-2)
    assert jnp.allclose(mu, mu_b, atol=1e-2, rtol=1e-2)
    assert jnp.allclose(logvar, lv_b, atol=1e-2, rtol=1e-2)

    # loose check against the full-f32 reference (bf16 weight rounding only)
    r_f, mu_f, lv_f = vae_reference_f32(x, eps, params)
    assert jnp.allclose(recon, r_f, atol=5e-2, rtol=5e-2)
    assert jnp.allclose(mu, mu_f, atol=5e-2, rtol=5e-2)
    assert jnp.allclose(logvar, lv_f, atol=5e-2, rtol=5e-2)

    print("KERNEL_OK")
</pallas_src>

<mosaic_0001>
module attributes {stable_mosaic.version = 11 : i64} {
  func.func @vae_kernel(%arg0: i32, %arg1: memref<8x896xf32, #tpu.memory_space<vmem>>, %arg2: memref<8x128xf32, #tpu.memory_space<vmem>>, %arg3: memref<896x512xbf16, #tpu.memory_space<vmem>>, %arg4: memref<1x512xf32, #tpu.memory_space<vmem>>, %arg5: memref<512x256xbf16, #tpu.memory_space<vmem>>, %arg6: memref<1x256xf32, #tpu.memory_space<vmem>>, %arg7: memref<128x512xbf16, #tpu.memory_space<vmem>>, %arg8: memref<1x512xf32, #tpu.memory_space<vmem>>, %arg9: memref<512x896xbf16, #tpu.memory_space<vmem>>, %arg10: memref<1x896xf32, #tpu.memory_space<vmem>>, %arg11: memref<8x896xf32, #tpu.memory_space<vmem>>, %arg12: memref<8x128xf32, #tpu.memory_space<vmem>>, %arg13: memref<8x128xf32, #tpu.memory_space<vmem>>) attributes {dimension_semantics = [#tpu.dimension_semantics<parallel>], iteration_bounds = array<i64: 1>, scalar_prefetch = 0 : i64, scratch_operands = 0 : i64, tpu.core_type = #tpu.core_type<tc>, window_params = [{transform_indices = @transform_0, window_bounds = array<i64: 8, 896>}, {transform_indices = @transform_1, window_bounds = array<i64: 8, 128>}, {pipeline_mode = #tpu.pipeline_mode<synchronous>, transform_indices = @transform_2, window_bounds = array<i64: 896, 512>}, {pipeline_mode = #tpu.pipeline_mode<synchronous>, transform_indices = @transform_3, window_bounds = array<i64: 1, 512>}, {pipeline_mode = #tpu.pipeline_mode<synchronous>, transform_indices = @transform_4, window_bounds = array<i64: 512, 256>}, {pipeline_mode = #tpu.pipeline_mode<synchronous>, transform_indices = @transform_5, window_bounds = array<i64: 1, 256>}, {pipeline_mode = #tpu.pipeline_mode<synchronous>, transform_indices = @transform_6, window_bounds = array<i64: 128, 512>}, {pipeline_mode = #tpu.pipeline_mode<synchronous>, transform_indices = @transform_7, window_bounds = array<i64: 1, 512>}, {pipeline_mode = #tpu.pipeline_mode<synchronous>, transform_indices = @transform_8, window_bounds = array<i64: 512, 896>}, {pipeline_mode = #tpu.pipeline_mode<synchronous>, transform_indices = @transform_9, window_bounds = array<i64: 1, 896>}, {transform_indices = @transform_10, window_bounds = array<i64: 8, 896>}, {transform_indices = @transform_11, window_bounds = array<i64: 8, 128>}, {transform_indices = @transform_12, window_bounds = array<i64: 8, 128>}]} {
    %c0 = arith.constant 0 : index
    %c0_0 = arith.constant 0 : index
    %0 = vector.load %arg1[%c0, %c0_0] : memref<8x896xf32, #tpu.memory_space<vmem>>, vector<8x896xf32>
    %1 = arith.truncf %0 : vector<8x896xf32> to vector<8x896xbf16>
    %c0_1 = arith.constant 0 : index
    %c0_2 = arith.constant 0 : index
    %2 = vector.load %arg3[%c0_1, %c0_2] : memref<896x512xbf16, #tpu.memory_space<vmem>>, vector<896x512xbf16>
    %cst = arith.constant dense<0.000000e+00> : vector<8x512xf32>
    %3 = tpu.matmul %1, %2, %cst {dimension_numbers = #tpu.dot_dimension_numbers<[1], [0], [0], [1], [0, 0, 1, 1], [], []>} : vector<8x896xbf16>, vector<896x512xbf16>, vector<8x512xf32> -> vector<8x512xf32>
    %c0_3 = arith.constant 0 : index
    %c0_4 = arith.constant 0 : index
    %4 = vector.load %arg4[%c0_3, %c0_4] : memref<1x512xf32, #tpu.memory_space<vmem>>, vector<1x512xf32>
    %5 = vector.broadcast %4 : vector<1x512xf32> to vector<8x512xf32>
    %6 = arith.addf %3, %5 : vector<8x512xf32>
    %cst_5 = arith.constant 0.000000e+00 : f32
    %7 = vector.broadcast %cst_5 : f32 to vector<8x512xf32>
    %8 = arith.maximumf %6, %7 : vector<8x512xf32>
    %9 = arith.truncf %8 : vector<8x512xf32> to vector<8x512xbf16>
    %c0_6 = arith.constant 0 : index
    %c0_7 = arith.constant 0 : index
    %10 = vector.load %arg5[%c0_6, %c0_7] : memref<512x256xbf16, #tpu.memory_space<vmem>>, vector<512x256xbf16>
    %cst_8 = arith.constant dense<0.000000e+00> : vector<8x256xf32>
    %11 = tpu.matmul %9, %10, %cst_8 {dimension_numbers = #tpu.dot_dimension_numbers<[1], [0], [0], [1], [0, 0, 1, 1], [], []>} : vector<8x512xbf16>, vector<512x256xbf16>, vector<8x256xf32> -> vector<8x256xf32>
    %c0_9 = arith.constant 0 : index
    %c0_10 = arith.constant 0 : index
    %12 = vector.load %arg6[%c0_9, %c0_10] : memref<1x256xf32, #tpu.memory_space<vmem>>, vector<1x256xf32>
    %13 = vector.broadcast %12 : vector<1x256xf32> to vector<8x256xf32>
    %14 = arith.addf %11, %13 : vector<8x256xf32>
    %15 = vector.extract_strided_slice %14 {offsets = [0, 0], sizes = [8, 128], strides = [1, 1]} : vector<8x256xf32> to vector<8x128xf32>
    %16 = vector.extract_strided_slice %14 {offsets = [0, 128], sizes = [8, 128], strides = [1, 1]} : vector<8x256xf32> to vector<8x128xf32>
    %c0_11 = arith.constant 0 : index
    %c0_12 = arith.constant 0 : index
    %17 = vector.load %arg2[%c0_11, %c0_12] : memref<8x128xf32, #tpu.memory_space<vmem>>, vector<8x128xf32>
    %cst_13 = arith.constant 5.000000e-01 : f32
    %18 = vector.broadcast %cst_13 : f32 to vector<8x128xf32>
    %19 = arith.mulf %18, %16 : vector<8x128xf32>
    %20 = math.exp %19 : vector<8x128xf32>
    %21 = arith.mulf %17, %20 : vector<8x128xf32>
    %22 = arith.addf %21, %15 : vector<8x128xf32>
    %23 = arith.truncf %22 : vector<8x128xf32> to vector<8x128xbf16>
    %c0_14 = arith.constant 0 : index
    %c0_15 = arith.constant 0 : index
    %24 = vector.load %arg7[%c0_14, %c0_15] : memref<128x512xbf16, #tpu.memory_space<vmem>>, vector<128x512xbf16>
    %cst_16 = arith.constant dense<0.000000e+00> : vector<8x512xf32>
    %25 = tpu.matmul %23, %24, %cst_16 {dimension_numbers = #tpu.dot_dimension_numbers<[1], [0], [0], [1], [0, 0, 1, 1], [], []>} : vector<8x128xbf16>, vector<128x512xbf16>, vector<8x512xf32> -> vector<8x512xf32>
    %c0_17 = arith.constant 0 : index
    %c0_18 = arith.constant 0 : index
    %26 = vector.load %arg8[%c0_17, %c0_18] : memref<1x512xf32, #tpu.memory_space<vmem>>, vector<1x512xf32>
    %27 = vector.broadcast %26 : vector<1x512xf32> to vector<8x512xf32>
    %28 = arith.addf %25, %27 : vector<8x512xf32>
    %cst_19 = arith.constant 0.000000e+00 : f32
    %29 = vector.broadcast %cst_19 : f32 to vector<8x512xf32>
    %30 = arith.maximumf %28, %29 : vector<8x512xf32>
    %31 = arith.truncf %30 : vector<8x512xf32> to vector<8x512xbf16>
    %c0_20 = arith.constant 0 : index
    %c0_21 = arith.constant 0 : index
    %32 = vector.load %arg9[%c0_20, %c0_21] : memref<512x896xbf16, #tpu.memory_space<vmem>>, vector<512x896xbf16>
    %cst_22 = arith.constant dense<0.000000e+00> : vector<8x896xf32>
    %33 = tpu.matmul %31, %32, %cst_22 {dimension_numbers = #tpu.dot_dimension_numbers<[1], [0], [0], [1], [0, 0, 1, 1], [], []>} : vector<8x512xbf16>, vector<512x896xbf16>, vector<8x896xf32> -> vector<8x896xf32>
    %c0_23 = arith.constant 0 : index
    %c0_24 = arith.constant 0 : index
    %34 = vector.load %arg10[%c0_23, %c0_24] : memref<1x896xf32, #tpu.memory_space<vmem>>, vector<1x896xf32>
    %35 = vector.broadcast %34 : vector<1x896xf32> to vector<8x896xf32>
    %36 = arith.addf %33, %35 : vector<8x896xf32>
    %37 = math.tanh %36 : vector<8x896xf32>
    %c0_25 = arith.constant 0 : index
    %c0_26 = arith.constant 0 : index
    %38 = vector.load %arg11[%c0_25, %c0_26] : memref<8x896xf32, #tpu.memory_space<vmem>>, vector<8x896xf32>
    tpu.vector_store %arg11[%c0_25, %c0_26], %37 {strides = array<i32>} : memref<8x896xf32, #tpu.memory_space<vmem>>, vector<8x896xf32>,
    %c0_27 = arith.constant 0 : index
    %c0_28 = arith.constant 0 : index
    %39 = vector.load %arg12[%c0_27, %c0_28] : memref<8x128xf32, #tpu.memory_space<vmem>>, vector<8x128xf32>
    tpu.vector_store %arg12[%c0_27, %c0_28], %15 {strides = array<i32>} : memref<8x128xf32, #tpu.memory_space<vmem>>, vector<8x128xf32>,
    %c0_29 = arith.constant 0 : index
    %c0_30 = arith.constant 0 : index
    %40 = vector.load %arg13[%c0_29, %c0_30] : memref<8x128xf32, #tpu.memory_space<vmem>>, vector<8x128xf32>
    tpu.vector_store %arg13[%c0_29, %c0_30], %16 {strides = array<i32>} : memref<8x128xf32, #tpu.memory_space<vmem>>, vector<8x128xf32>,
    return
  }
  func.func @transform_0(%arg0: i32) -> (i32, i32) {
    %c0_i32 = arith.constant 0 : i32
    %c0_i32_0 = arith.constant 0 : i32
    return %arg0, %c0_i32 : i32, i32
  }
  func.func @transform_1(%arg0: i32) -> (i32, i32) {
    %c0_i32 = arith.constant 0 : i32
    %c0_i32_0 = arith.constant 0 : i32
    return %arg0, %c0_i32 : i32, i32
  }
  func.func @transform_2(%arg0: i32) -> (i32, i32) {
    %c0_i32 = arith.constant 0 : i32
    %c0_i32_0 = arith.constant 0 : i32
    %c0_i32_1 = arith.constant 0 : i32
    return %c0_i32, %c0_i32_0 : i32, i32
  }
  func.func @transform_3(%arg0: i32) -> (i32, i32) {
    %c0_i32 = arith.constant 0 : i32
    %c0_i32_0 = arith.constant 0 : i32
    %c0_i32_1 = arith.constant 0 : i32
    return %c0_i32, %c0_i32_0 : i32, i32
  }
  func.func @transform_4(%arg0: i32) -> (i32, i32) {
    %c0_i32 = arith.constant 0 : i32
    %c0_i32_0 = arith.constant 0 : i32
    %c0_i32_1 = arith.constant 0 : i32
    return %c0_i32, %c0_i32_0 : i32, i32
  }
  func.func @transform_5(%arg0: i32) -> (i32, i32) {
    %c0_i32 = arith.constant 0 : i32
    %c0_i32_0 = arith.constant 0 : i32
    %c0_i32_1 = arith.constant 0 : i32
    return %c0_i32, %c0_i32_0 : i32, i32
  }
  func.func @transform_6(%arg0: i32) -> (i32, i32) {
    %c0_i32 = arith.constant 0 : i32
    %c0_i32_0 = arith.constant 0 : i32
    %c0_i32_1 = arith.constant 0 : i32
    return %c0_i32, %c0_i32_0 : i32, i32
  }
  func.func @transform_7(%arg0: i32) -> (i32, i32) {
    %c0_i32 = arith.constant 0 : i32
    %c0_i32_0 = arith.constant 0 : i32
    %c0_i32_1 = arith.constant 0 : i32
    return %c0_i32, %c0_i32_0 : i32, i32
  }
  func.func @transform_8(%arg0: i32) -> (i32, i32) {
    %c0_i32 = arith.constant 0 : i32
    %c0_i32_0 = arith.constant 0 : i32
    %c0_i32_1 = arith.constant 0 : i32
    return %c0_i32, %c0_i32_0 : i32, i32
  }
  func.func @transform_9(%arg0: i32) -> (i32, i32) {
    %c0_i32 = arith.constant 0 : i32
    %c0_i32_0 = arith.constant 0 : i32
    %c0_i32_1 = arith.constant 0 : i32
    return %c0_i32, %c0_i32_0 : i32, i32
  }
  func.func @transform_10(%arg0: i32) -> (i32, i32) {
    %c0_i32 = arith.constant 0 : i32
    %c0_i32_0 = arith.constant 0 : i32
    return %arg0, %c0_i32 : i32, i32
  }
  func.func @transform_11(%arg0: i32) -> (i32, i32) {
    %c0_i32 = arith.constant 0 : i32
    %c0_i32_0 = arith.constant 0 : i32
    return %arg0, %c0_i32 : i32, i32
  }
  func.func @transform_12(%arg0: i32) -> (i32, i32) {
    %c0_i32 = arith.constant 0 : i32
    %c0_i32_0 = arith.constant 0 : i32
    return %arg0, %c0_i32 : i32, i32
  }
}

</mosaic_0001>

<llo_original>
// kernel: tpu_custom_call.1
$region0: #{tpu_custom_call.1}
  #allocation0 [shape = 'u32[]', space=smem, size = 0x4, offset = 0x4, fixed_abs, tag = 'smem constant byte address 0x4 - core index']
  #allocation1 [shape = 'u32[144,128]{1,0:T(1,128)}', space=vmem, size = 0x12000, scoped, tag = 'internal scratch']
  %s0 = inlined_call_operand.hbm [shape: f32[8,896], index: 0, kind: input, shape index: {}]
  %s1 = inlined_call_operand.hbm [shape: f32[8,128], index: 1, kind: input, shape index: {}]
  %s2 = inlined_call_operand.hbm [shape: bf16[896,512], index: 2, kind: input, shape index: {}]
  %s3 = inlined_call_operand.vmem [shape: f32[1,512], index: 3, kind: input, shape index: {}]
  %s4 = inlined_call_operand.hbm [shape: bf16[512,256], index: 4, kind: input, shape index: {}]
  %s5 = inlined_call_operand.vmem [shape: f32[1,256], index: 5, kind: input, shape index: {}]
  %s6 = inlined_call_operand.hbm [shape: bf16[128,512], index: 6, kind: input, shape index: {}]
  %s7 = inlined_call_operand.hbm [shape: f32[1,512], index: 7, kind: input, shape index: {}]
  %s8 = inlined_call_operand.hbm [shape: bf16[512,896], index: 8, kind: input, shape index: {}]
  %s9 = inlined_call_operand.vmem [shape: f32[1,896], index: 9, kind: input, shape index: {}]
  %s10 = inlined_call_operand.hbm [shape: f32[8,896], index: 10, kind: output, shape index: {0}]
  %s11 = inlined_call_operand.hbm [shape: f32[8,128], index: 11, kind: output, shape index: {1}]
  %s12 = inlined_call_operand.hbm [shape: f32[8,128], index: 12, kind: output, shape index: {2}]
  %13 = xla_tuple %s10, %s11, %s12
  %s14 = sld [smem:[#allocation0]]
  $region94: #{tpu_custom_call.1} parent=0
    _
  %s16 = ssub.s32 1, %s14
  %s17 = scalar_select 0, %s16, %s14
  $region1: #{tpu_custom_call.1} parent=0
    #allocation2 [shape = 'u8[28672]{0}', space=vmem, size = 0x7000, scoped, tag = 'input window, operand 0, single buffered']
    #allocation3 [shape = 's32[1]{0}', space=sflag, size = 0x4, scoped, tag = 'scoped memory for tpu_custom_call.1']
    #allocation4 [shape = 's32[1]{0}', space=sflag, size = 0x4, scoped, tag = 'scoped memory for tpu_custom_call.1']
    #allocation5 [shape = 'u8[4096]{0}', space=vmem, size = 0x1000, scoped, tag = 'input window, operand 1, single buffered']
    #allocation6 [shape = 's32[1]{0}', space=sflag, size = 0x4, scoped, tag = 'scoped memory for tpu_custom_call.1']
    #allocation7 [shape = 'u8[917504]{0}', space=vmem, size = 0xe0000, scoped, tag = 'input window, operand 2, single buffered']
    #allocation8 [shape = 'u8[262144]{0}', space=vmem, size = 0x40000, scoped, tag = 'input window, operand 4, single buffered']
    #allocation9 [shape = 's32[1]{0}', space=sflag, size = 0x4, scoped, tag = 'scoped memory for tpu_custom_call.1']
    #allocation10 [shape = 'u8[131072]{0}', space=vmem, size = 0x20000, scoped, tag = 'input window, operand 6, single buffered']
    #allocation11 [shape = 'u8[2048]{0}', space=vmem, size = 0x800, scoped, tag = 'input window, operand 7, single buffered']
    #allocation12 [shape = 's32[1]{0}', space=sflag, size = 0x4, scoped, tag = 'scoped memory for tpu_custom_call.1']
    #allocation13 [shape = 'u8[917504]{0}', space=vmem, size = 0xe0000, scoped, tag = 'input window, operand 8, single buffered']
    #allocation14 [shape = 'u8[28672]{0}', space=vmem, size = 0x7000, scoped, tag = 'output window, operand 0, single buffered']
    #allocation15 [shape = 'u8[4096]{0}', space=vmem, size = 0x1000, scoped, tag = 'output window, operand 1, single buffered']
    #allocation16 [shape = 's32[1]{0}', space=sflag, size = 0x4, scoped, tag = 'scoped memory for tpu_custom_call.1']
    #allocation17 [shape = 'u8[4096]{0}', space=vmem, size = 0x1000, scoped, tag = 'output window, operand 2, single buffered']
    %18 = vsyncpa [#allocation3], 0
    %19 = vsyncpa [#allocation6], 0
    %20 = vsyncpa [#allocation9], 0
    %21 = vsyncpa [#allocation12], 0
    %22 = vsyncpa [#allocation4], 0
    %23 = vsyncpa [#allocation16], 0
    // Predicated region
    $region2: #{tpu_custom_call.1} parent=1 // pred_check
      _
    $region3: #{tpu_custom_call.1} parent=1 // pred_check_branch
      %25 = sbr.rel (0) target = $region5
    $region4: #{tpu_custom_call.1} parent=1 // pred_region
      %s27 = ssub.s32 896, 896
      %28 = vsyncadd [#allocation3], %s27
      %s30 = sshll.u32 [#allocation2], 4
      %s31 = int_to_ptr.vmem [resolvable:$true] %s30
      %33 = dma.hbm_to_vmem [thread:$0]  %s0, 896, %s31, [#allocation3]
    $region5: #{tpu_custom_call.1} parent=1 // pred_fallthru
      _
    // Predicated region
    $region6: #{tpu_custom_call.1} parent=1 // pred_check
      _
    $region7: #{tpu_custom_call.1} parent=1 // pred_check_branch
      %35 = sbr.rel (0) target = $region9
    $region8: #{tpu_custom_call.1} parent=1 // pred_region
      %s37 = ssub.s32 128, 128
      %38 = vsyncadd [#allocation6], %s37
      %s40 = sshll.u32 [#allocation5], 4
      %s41 = int_to_ptr.vmem [resolvable:$true] %s40
      %43 = dma.hbm_to_vmem [thread:$0]  %s1, 128, %s41, [#allocation6]
    $region9: #{tpu_custom_call.1} parent=1 // pred_fallthru
      _
    // Predicated region
    $region10: #{tpu_custom_call.1} parent=1 // pred_check
      _
    $region11: #{tpu_custom_call.1} parent=1 // pred_check_branch
      %45 = sbr.rel (0) target = $region13
    $region12: #{tpu_custom_call.1} parent=1 // pred_region
      %s47 = ssub.s32 28672, 28672
      %48 = vsyncadd [#allocation6], %s47
      %s49 = sshll.u32 [#allocation7], 4
      %s50 = int_to_ptr.vmem [resolvable:$true] %s49
      %55 = dma.hbm_to_vmem [thread:$0]  %s2, 28672, %s50, [#allocation6], 256, 256, 16
    $region13: #{tpu_custom_call.1} parent=1 // pred_fallthru
      _
    // Predicated region
    $region14: #{tpu_custom_call.1} parent=1 // pred_check
      _
    $region15: #{tpu_custom_call.1} parent=1 // pred_check_branch
      %57 = sbr.rel (0) target = $region17
    $region16: #{tpu_custom_call.1} parent=1 // pred_region
      _
    $region17: #{tpu_custom_call.1} parent=1 // pred_fallthru
      _
    // Predicated region
    $region18: #{tpu_custom_call.1} parent=1 // pred_check
      _
    $region19: #{tpu_custom_call.1} parent=1 // pred_check_branch
      %59 = sbr.rel (0) target = $region21
    $region20: #{tpu_custom_call.1} parent=1 // pred_region
      %s61 = ssub.s32 8192, 8192
      %62 = vsyncadd [#allocation9], %s61
      %s63 = sshll.u32 [#allocation8], 4
      %s64 = int_to_ptr.vmem [resolvable:$true] %s63
      %69 = dma.hbm_to_vmem [thread:$0]  %s4, 8192, %s64, [#allocation9], 128, 128, 8
    $region21: #{tpu_custom_call.1} parent=1 // pred_fallthru
      _
    // Predicated region
    $region22: #{tpu_custom_call.1} parent=1 // pred_check
      _
    $region23: #{tpu_custom_call.1} parent=1 // pred_check_branch
      %71 = sbr.rel (0) target = $region25
    $region24: #{tpu_custom_call.1} parent=1 // pred_region
      _
    $region25: #{tpu_custom_call.1} parent=1 // pred_fallthru
      _
    // Predicated region
    $region26: #{tpu_custom_call.1} parent=1 // pred_check
      _
    $region27: #{tpu_custom_call.1} parent=1 // pred_check_branch
      %73 = sbr.rel (0) target = $region29
    $region28: #{tpu_custom_call.1} parent=1 // pred_region
      %s75 = ssub.s32 4096, 4096
      %76 = vsyncadd [#allocation9], %s75
      %s77 = sshll.u32 [#allocation10], 4
      %s78 = int_to_ptr.vmem [resolvable:$true] %s77
      %83 = dma.hbm_to_vmem [thread:$0]  %s6, 4096, %s78, [#allocation9], 256, 256, 16
    $region29: #{tpu_custom_call.1} parent=1 // pred_fallthru
      _
    // Predicated region
    $region30: #{tpu_custom_call.1} parent=1 // pred_check
      _
    $region31: #{tpu_custom_call.1} parent=1 // pred_check_branch
      %85 = sbr.rel (0) target = $region33
    $region32: #{tpu_custom_call.1} parent=1 // pred_region
      %s87 = ssub.s32 64, 64
      %88 = vsyncadd [#allocation12], %s87
      %s90 = sshll.u32 [#allocation11], 4
      %s91 = int_to_ptr.vmem [resolvable:$true] %s90
      %93 = dma.hbm_to_vmem [thread:$0]  %s7, 64, %s91, [#allocation12]
    $region33: #{tpu_custom_call.1} parent=1 // pred_fallthru
      _
    // Predicated region
    $region34: #{tpu_custom_call.1} parent=1 // pred_check
      _
    $region35: #{tpu_custom_call.1} parent=1 // pred_check_branch
      %95 = sbr.rel (0) target = $region37
    $region36: #{tpu_custom_call.1} parent=1 // pred_region
      %s97 = ssub.s32 28672, 28672
      %98 = vsyncadd [#allocation12], %s97
      %s99 = sshll.u32 [#allocation13], 4
      %s100 = int_to_ptr.vmem [resolvable:$true] %s99
      %105 = dma.hbm_to_vmem [thread:$0]  %s8, 28672, %s100, [#allocation12], 448, 448, 28
    $region37: #{tpu_custom_call.1} parent=1 // pred_fallthru
      _
    // Predicated region
    $region38: #{tpu_custom_call.1} parent=1 // pred_check
      _
    $region39: #{tpu_custom_call.1} parent=1 // pred_check_branch
      %107 = sbr.rel (0) target = $region41
    $region40: #{tpu_custom_call.1} parent=1 // pred_region
      _
    $region41: #{tpu_custom_call.1} parent=1 // pred_fallthru
      _
    // Predicated region
    $region42: #{tpu_custom_call.1} parent=1 // pred_check
      _
    $region43: #{tpu_custom_call.1} parent=1 // pred_check_branch
      %109 = sbr.rel (0) target = $region45
    $region44: #{tpu_custom_call.1} parent=1 // pred_region
      %110 = dma.done [#allocation3], 896
    $region45: #{tpu_custom_call.1} parent=1 // pred_fallthru
      _
    // Predicated region
    $region46: #{tpu_custom_call.1} parent=1 // pred_check
      _
    $region47: #{tpu_custom_call.1} parent=1 // pred_check_branch
      %112 = sbr.rel (0) target = $region49
    $region48: #{tpu_custom_call.1} parent=1 // pred_region
      %113 = dma.done [#allocation6], 128
    $region49: #{tpu_custom_call.1} parent=1 // pred_fallthru
      _
    // Predicated region
    $region50: #{tpu_custom_call.1} parent=1 // pred_check
      _
    $region51: #{tpu_custom_call.1} parent=1 // pred_check_branch
      %115 = sbr.rel (0) target = $region53
    $region52: #{tpu_custom_call.1} parent=1 // pred_region
      %116 = dma.done [#allocation6], 28672
    $region53: #{tpu_custom_call.1} parent=1 // pred_fallthru
      _
    // Predicated region
    $region54: #{tpu_custom_call.1} parent=1 // pred_check
      _
    $region55: #{tpu_custom_call.1} parent=1 // pred_check_branch
      %118 = sbr.rel (0) target = $region57
    $region56: #{tpu_custom_call.1} parent=1 // pred_region
      %119 = dma.done [#allocation9], 8192
    $region57: #{tpu_custom_call.1} parent=1 // pred_fallthru
      _
    // Predicated region
    $region58: #{tpu_custom_call.1} parent=1 // pred_check
      _
    $region59: #{tpu_custom_call.1} parent=1 // pred_check_branch
      %121 = sbr.rel (0) target = $region61
    $region60: #{tpu_custom_call.1} parent=1 // pred_region
      %122 = dma.done [#allocation9], 4096
    $region61: #{tpu_custom_call.1} parent=1 // pred_fallthru
      _
    // Predicated region
    $region62: #{tpu_custom_call.1} parent=1 // pred_check
      _
    $region63: #{tpu_custom_call.1} parent=1 // pred_check_branch
      %124 = sbr.rel (0) target = $region65
    $region64: #{tpu_custom_call.1} parent=1 // pred_region
      %125 = dma.done [#allocation12], 64
    $region65: #{tpu_custom_call.1} parent=1 // pred_fallthru
      _
    // Predicated region
    $region66: #{tpu_custom_call.1} parent=1 // pred_check
      _
    $region67: #{tpu_custom_call.1} parent=1 // pred_check_branch
      %127 = sbr.rel (0) target = $region69
    $region68: #{tpu_custom_call.1} parent=1 // pred_region
      %128 = dma.done [#allocation12], 28672
    $region69: #{tpu_custom_call.1} parent=1 // pred_fallthru
      _
    %v130 = vld [vmem:[#allocation2] sm:$0xff]
    %v131 = vld [vmem:[#allocation2 + $0x8] sm:$0xff]
    %v132 = vld [vmem:[#allocation2 + $0x10] sm:$0xff]
    %v133 = vld [vmem:[#allocation2 + $0x18] sm:$0xff]
    %v134 = vld [vmem:[#allocation2 + $0x20] sm:$0xff]
    %v135 = vld [vmem:[#allocation2 + $0x28] sm:$0xff]
    %v136 = vld [vmem:[#allocation2 + $0x30] sm:$0xff]
    %v137 = vpack.c.bf16 %v130, %v130
    %v138 = vpack.c.bf16 %v131, %v131
    %v139 = vpack.c.bf16 %v132, %v132
    %v140 = vpack.c.bf16 %v133, %v133
    %v141 = vpack.c.bf16 %v134, %v134
    %v142 = vpack.c.bf16 %v135, %v135
    %v143 = vpack.c.bf16 %v136, %v136
    %v144 = vld [vmem:[#allocation7] sm:$0xff]
    %v145 = vld [vmem:[#allocation7 + $0x8] sm:$0xff]
    %v146 = vld [vmem:[#allocation7 + $0x10] sm:$0xff]
    %v147 = vld [vmem:[#allocation7 + $0x18] sm:$0xff]
    %v148 = vld [vmem:[#allocation7 + $0x20] sm:$0xff]
    %v149 = vld [vmem:[#allocation7 + $0x28] sm:$0xff]
    %v150 = vld [vmem:[#allocation7 + $0x30] sm:$0xff]
    %v151 = vld [vmem:[#allocation7 + $0x38] sm:$0xff]
    %v152 = vld [vmem:[#allocation7 + $0x40] sm:$0xff]
    %v153 = vld [vmem:[#allocation7 + $0x48] sm:$0xff]
    %v154 = vld [vmem:[#allocation7 + $0x50] sm:$0xff]
    %v155 = vld [vmem:[#allocation7 + $0x58] sm:$0xff]
    %v156 = vld [vmem:[#allocation7 + $0x60] sm:$0xff]
    %v157 = vld [vmem:[#allocation7 + $0x68] sm:$0xff]
    %v158 = vld [vmem:[#allocation7 + $0x70] sm:$0xff]
    %v159 = vld [vmem:[#allocation7 + $0x78] sm:$0xff]
    %v160 = vld [vmem:[#allocation7 + $0x80] sm:$0xff]
    %v161 = vld [vmem:[#allocation7 + $0x88] sm:$0xff]
    %v162 = vld [vmem:[#allocation7 + $0x90] sm:$0xff]
    %v163 = vld [vmem:[#allocation7 + $0x98] sm:$0xff]
    %v164 = vld [vmem:[#allocation7 + $0xa0] sm:$0xff]
    %v165 = vld [vmem:[#allocation7 + $0xa8] sm:$0xff]
    %v166 = vld [vmem:[#allocation7 + $0xb0] sm:$0xff]
    %v167 = vld [vmem:[#allocation7 + $0xb8] sm:$0xff]
    %v168 = vld [vmem:[#allocation7 + $0xc0] sm:$0xff]
    %v169 = vld [vmem:[#allocation7 + $0xc8] sm:$0xff]
    %v170 = vld [vmem:[#allocation7 + $0xd0] sm:$0xff]
    %v171 = vld [vmem:[#allocation7 + $0xd8] sm:$0xff]
    %v172 = vld [vmem:[#allocation7 + $0xe0] sm:$0xff]
    %v173 = vld [vmem:[#allocation7 + $0xe8] sm:$0xff]
    %v174 = vld [vmem:[#allocation7 + $0xf0] sm:$0xff]
    %v175 = vld [vmem:[#allocation7 + $0xf8] sm:$0xff]
    %v176 = vld [vmem:[#allocation7 + $0x100] sm:$0xff]
    %v177 = vld [vmem:[#allocation7 + $0x108] sm:$0xff]
    %v178 = vld [vmem:[#allocation7 + $0x110] sm:$0xff]
    %v179 = vld [vmem:[#allocation7 + $0x118] sm:$0xff]
    %v180 = vld [vmem:[#allocation7 + $0x120] sm:$0xff]
    %v181 = vld [vmem:[#allocation7 + $0x128] sm:$0xff]
    %v182 = vld [vmem:[#allocation7 + $0x130] sm:$0xff]
    %v183 = vld [vmem:[#allocation7 + $0x138] sm:$0xff]
    %v184 = vld [vmem:[#allocation7 + $0x140] sm:$0xff]
    %v185 = vld [vmem:[#allocation7 + $0x148] sm:$0xff]
    %v186 = vld [vmem:[#allocation7 + $0x150] sm:$0xff]
    %v187 = vld [vmem:[#allocation7 + $0x158] sm:$0xff]
    %v188 = vld [vmem:[#allocation7 + $0x160] sm:$0xff]
    %v189 = vld [vmem:[#allocation7 + $0x168] sm:$0xff]
    %v190 = vld [vmem:[#allocation7 + $0x170] sm:$0xff]
    %v191 = vld [vmem:[#allocation7 + $0x178] sm:$0xff]
    %v192 = vld [vmem:[#allocation7 + $0x180] sm:$0xff]
    %v193 = vld [vmem:[#allocation7 + $0x188] sm:$0xff]
    %v194 = vld [vmem:[#allocation7 + $0x190] sm:$0xff]
    %v195 = vld [vmem:[#allocation7 + $0x198] sm:$0xff]
    %v196 = vld [vmem:[#allocation7 + $0x1a0] sm:$0xff]
    %v197 = vld [vmem:[#allocation7 + $0x1a8] sm:$0xff]
    %v198 = vld [vmem:[#allocation7 + $0x1b0] sm:$0xff]
    %v199 = vld [vmem:[#allocation7 + $0x1b8] sm:$0xff]
    %v200 = vld [vmem:[#allocation7 + $0x1c0] sm:$0xff]
    %v201 = vld [vmem:[#allocation7 + $0x1c8] sm:$0xff]
    %v202 = vld [vmem:[#allocation7 + $0x1d0] sm:$0xff]
    %v203 = vld [vmem:[#allocation7 + $0x1d8] sm:$0xff]
    %v204 = vld [vmem:[#allocation7 + $0x1e0] sm:$0xff]
    %v205 = vld [vmem:[#allocation7 + $0x1e8] sm:$0xff]
    %v206 = vld [vmem:[#allocation7 + $0x1f0] sm:$0xff]
    %v207 = vld [vmem:[#allocation7 + $0x1f8] sm:$0xff]
    %v208 = vld [vmem:[#allocation7 + $0x200] sm:$0xff]
    %v209 = vld [vmem:[#allocation7 + $0x208] sm:$0xff]
    %v210 = vld [vmem:[#allocation7 + $0x210] sm:$0xff]
    %v211 = vld [vmem:[#allocation7 + $0x218] sm:$0xff]
    %v212 = vld [vmem:[#allocation7 + $0x220] sm:$0xff]
    %v213 = vld [vmem:[#allocation7 + $0x228] sm:$0xff]
    %v214 = vld [vmem:[#allocation7 + $0x230] sm:$0xff]
    %v215 = vld [vmem:[#allocation7 + $0x238] sm:$0xff]
    %v216 = vld [vmem:[#allocation7 + $0x240] sm:$0xff]
    %v217 = vld [vmem:[#allocation7 + $0x248] sm:$0xff]
    %v218 = vld [vmem:[#allocation7 + $0x250] sm:$0xff]
    %v219 = vld [vmem:[#allocation7 + $0x258] sm:$0xff]
    %v220 = vld [vmem:[#allocation7 + $0x260] sm:$0xff]
    %v221 = vld [vmem:[#allocation7 + $0x268] sm:$0xff]
    %v222 = vld [vmem:[#allocation7 + $0x270] sm:$0xff]
    %v223 = vld [vmem:[#allocation7 + $0x278] sm:$0xff]
    %v224 = vld [vmem:[#allocation7 + $0x280] sm:$0xff]
    %v225 = vld [vmem:[#allocation7 + $0x288] sm:$0xff]
    %v226 = vld [vmem:[#allocation7 + $0x290] sm:$0xff]
    %v227 = vld [vmem:[#allocation7 + $0x298] sm:$0xff]
    %v228 = vld [vmem:[#allocation7 + $0x2a0] sm:$0xff]
    %v229 = vld [vmem:[#allocation7 + $0x2a8] sm:$0xff]
    %v230 = vld [vmem:[#allocation7 + $0x2b0] sm:$0xff]
    %v231 = vld [vmem:[#allocation7 + $0x2b8] sm:$0xff]
    %v232 = vld [vmem:[#allocation7 + $0x2c0] sm:$0xff]
    %v233 = vld [vmem:[#allocation7 + $0x2c8] sm:$0xff]
    %v234 = vld [vmem:[#allocation7 + $0x2d0] sm:$0xff]
    %v235 = vld [vmem:[#allocation7 + $0x2d8] sm:$0xff]
    %v236 = vld [vmem:[#allocation7 + $0x2e0] sm:$0xff]
    %v237 = vld [vmem:[#allocation7 + $0x2e8] sm:$0xff]
    %v238 = vld [vmem:[#allocation7 + $0x2f0] sm:$0xff]
    %v239 = vld [vmem:[#allocation7 + $0x2f8] sm:$0xff]
    %v240 = vld [vmem:[#allocation7 + $0x300] sm:$0xff]
    %v241 = vld [vmem:[#allocation7 + $0x308] sm:$0xff]
    %v242 = vld [vmem:[#allocation7 + $0x310] sm:$0xff]
    %v243 = vld [vmem:[#allocation7 + $0x318] sm:$0xff]
    %v244 = vld [vmem:[#allocation7 + $0x320] sm:$0xff]
    %v245 = vld [vmem:[#allocation7 + $0x328] sm:$0xff]
    %v246 = vld [vmem:[#allocation7 + $0x330] sm:$0xff]
    %v247 = vld [vmem:[#allocation7 + $0x338] sm:$0xff]
    %v248 = vld [vmem:[#allocation7 + $0x340] sm:$0xff]
    %v249 = vld [vmem:[#allocation7 + $0x348] sm:$0xff]
    %v250 = vld [vmem:[#allocation7 + $0x350] sm:$0xff]
    %v251 = vld [vmem:[#allocation7 + $0x358] sm:$0xff]
    %v252 = vld [vmem:[#allocation7 + $0x360] sm:$0xff]
    %v253 = vld [vmem:[#allocation7 + $0x368] sm:$0xff]
    %v254 = vld [vmem:[#allocation7 + $0x370] sm:$0xff]
    %v255 = vld [vmem:[#allocation7 + $0x378] sm:$0xff]
    %v256 = vld [vmem:[#allocation7 + $0x380] sm:$0xff]
    %v257 = vld [vmem:[#allocation7 + $0x388] sm:$0xff]
    %v258 = vld [vmem:[#allocation7 + $0x390] sm:$0xff]
    %v259 = vld [vmem:[#allocation7 + $0x398] sm:$0xff]
    %v260 = vld [vmem:[#allocation7 + $0x3a0] sm:$0xff]
    %v261 = vld [vmem:[#allocation7 + $0x3a8] sm:$0xff]
    %v262 = vld [vmem:[#allocation7 + $0x3b0] sm:$0xff]
    %v263 = vld [vmem:[#allocation7 + $0x3b8] sm:$0xff]
    %v264 = vld [vmem:[#allocation7 + $0x3c0] sm:$0xff]
    %v265 = vld [vmem:[#allocation7 + $0x3c8] sm:$0xff]
    %v266 = vld [vmem:[#allocation7 + $0x3d0] sm:$0xff]
    %v267 = vld [vmem:[#allocation7 + $0x3d8] sm:$0xff]
    %v268 = vld [vmem:[#allocation7 + $0x3e0] sm:$0xff]
    %v269 = vld [vmem:[#allocation7 + $0x3e8] sm:$0xff]
    %v270 = vld [vmem:[#allocation7 + $0x3f0] sm:$0xff]
    %v271 = vld [vmem:[#allocation7 + $0x3f8] sm:$0xff]
    %v272 = vld [vmem:[#allocation7 + $0x400] sm:$0xff]
    %v273 = vld [vmem:[#allocation7 + $0x408] sm:$0xff]
    %v274 = vld [vmem:[#allocation7 + $0x410] sm:$0xff]
    %v275 = vld [vmem:[#allocation7 + $0x418] sm:$0xff]
    %v276 = vld [vmem:[#allocation7 + $0x420] sm:$0xff]
    %v277 = vld [vmem:[#allocation7 + $0x428] sm:$0xff]
    %v278 = vld [vmem:[#allocation7 + $0x430] sm:$0xff]
    %v279 = vld [vmem:[#allocation7 + $0x438] sm:$0xff]
    %v280 = vld [vmem:[#allocation7 + $0x440] sm:$0xff]
    %v281 = vld [vmem:[#allocation7 + $0x448] sm:$0xff]
    %v282 = vld [vmem:[#allocation7 + $0x450] sm:$0xff]
    %v283 = vld [vmem:[#allocation7 + $0x458] sm:$0xff]
    %v284 = vld [vmem:[#allocation7 + $0x460] sm:$0xff]
    %v285 = vld [vmem:[#allocation7 + $0x468] sm:$0xff]
    %v286 = vld [vmem:[#allocation7 + $0x470] sm:$0xff]
    %v287 = vld [vmem:[#allocation7 + $0x478] sm:$0xff]
    %v288 = vld [vmem:[#allocation7 + $0x480] sm:$0xff]
    %v289 = vld [vmem:[#allocation7 + $0x488] sm:$0xff]
    %v290 = vld [vmem:[#allocation7 + $0x490] sm:$0xff]
    %v291 = vld [vmem:[#allocation7 + $0x498] sm:$0xff]
    %v292 = vld [vmem:[#allocation7 + $0x4a0] sm:$0xff]
    %v293 = vld [vmem:[#allocation7 + $0x4a8] sm:$0xff]
    %v294 = vld [vmem:[#allocation7 + $0x4b0] sm:$0xff]
    %v295 = vld [vmem:[#allocation7 + $0x4b8] sm:$0xff]
    %v296 = vld [vmem:[#allocation7 + $0x4c0] sm:$0xff]
    %v297 = vld [vmem:[#allocation7 + $0x4c8] sm:$0xff]
    %v298 = vld [vmem:[#allocation7 + $0x4d0] sm:$0xff]
    %v299 = vld [vmem:[#allocation7 + $0x4d8] sm:$0xff]
    %v300 = vld [vmem:[#allocation7 + $0x4e0] sm:$0xff]
    %v301 = vld [vmem:[#allocation7 + $0x4e8] sm:$0xff]
    %v302 = vld [vmem:[#allocation7 + $0x4f0] sm:$0xff]
    %v303 = vld [vmem:[#allocation7 + $0x4f8] sm:$0xff]
    %v304 = vld [vmem:[#allocation7 + $0x500] sm:$0xff]
    %v305 = vld [vmem:[#allocation7 + $0x508] sm:$0xff]
    %v306 = vld [vmem:[#allocation7 + $0x510] sm:$0xff]
    %v307 = vld [vmem:[#allocation7 + $0x518] sm:$0xff]
    %v308 = vld [vmem:[#allocation7 + $0x520] sm:$0xff]
    %v309 = vld [vmem:[#allocation7 + $0x528] sm:$0xff]
    %v310 = vld [vmem:[#allocation7 + $0x530] sm:$0xff]
    %v311 = vld [vmem:[#allocation7 + $0x538] sm:$0xff]
    %v312 = vld [vmem:[#allocation7 + $0x540] sm:$0xff]
    %v313 = vld [vmem:[#allocation7 + $0x548] sm:$0xff]
    %v314 = vld [vmem:[#allocation7 + $0x550] sm:$0xff]
    %v315 = vld [vmem:[#allocation7 + $0x558] sm:$0xff]
    %v316 = vld [vmem:[#allocation7 + $0x560] sm:$0xff]
    %v317 = vld [vmem:[#allocation7 + $0x568] sm:$0xff]
    %v318 = vld [vmem:[#allocation7 + $0x570] sm:$0xff]
    %v319 = vld [vmem:[#allocation7 + $0x578] sm:$0xff]
    %v320 = vld [vmem:[#allocation7 + $0x580] sm:$0xff]
    %v321 = vld [vmem:[#allocation7 + $0x588] sm:$0xff]
    %v322 = vld [vmem:[#allocation7 + $0x590] sm:$0xff]
    %v323 = vld [vmem:[#allocation7 + $0x598] sm:$0xff]
    %v324 = vld [vmem:[#allocation7 + $0x5a0] sm:$0xff]
    %v325 = vld [vmem:[#allocation7 + $0x5a8] sm:$0xff]
    %v326 = vld [vmem:[#allocation7 + $0x5b0] sm:$0xff]
    %v327 = vld [vmem:[#allocation7 + $0x5b8] sm:$0xff]
    %v328 = vld [vmem:[#allocation7 + $0x5c0] sm:$0xff]
    %v329 = vld [vmem:[#allocation7 + $0x5c8] sm:$0xff]
    %v330 = vld [vmem:[#allocation7 + $0x5d0] sm:$0xff]
    %v331 = vld [vmem:[#allocation7 + $0x5d8] sm:$0xff]
    %v332 = vld [vmem:[#allocation7 + $0x5e0] sm:$0xff]
    %v333 = vld [vmem:[#allocation7 + $0x5e8] sm:$0xff]
    %v334 = vld [vmem:[#allocation7 + $0x5f0] sm:$0xff]
    %v335 = vld [vmem:[#allocation7 + $0x5f8] sm:$0xff]
    %v336 = vld [vmem:[#allocation7 + $0x600] sm:$0xff]
    %v337 = vld [vmem:[#allocation7 + $0x608] sm:$0xff]
    %v338 = vld [vmem:[#allocation7 + $0x610] sm:$0xff]
    %v339 = vld [vmem:[#allocation7 + $0x618] sm:$0xff]
    %v340 = vld [vmem:[#allocation7 + $0x620] sm:$0xff]
    %v341 = vld [vmem:[#allocation7 + $0x628] sm:$0xff]
    %v342 = vld [vmem:[#allocation7 + $0x630] sm:$0xff]
    %v343 = vld [vmem:[#allocation7 + $0x638] sm:$0xff]
    %v344 = vld [vmem:[#allocation7 + $0x640] sm:$0xff]
    %v345 = vld [vmem:[#allocation7 + $0x648] sm:$0xff]
    %v346 = vld [vmem:[#allocation7 + $0x650] sm:$0xff]
    %v347 = vld [vmem:[#allocation7 + $0x658] sm:$0xff]
    %v348 = vld [vmem:[#allocation7 + $0x660] sm:$0xff]
    %v349 = vld [vmem:[#allocation7 + $0x668] sm:$0xff]
    %v350 = vld [vmem:[#allocation7 + $0x670] sm:$0xff]
    %v351 = vld [vmem:[#allocation7 + $0x678] sm:$0xff]
    %v352 = vld [vmem:[#allocation7 + $0x680] sm:$0xff]
    %v353 = vld [vmem:[#allocation7 + $0x688] sm:$0xff]
    %v354 = vld [vmem:[#allocation7 + $0x690] sm:$0xff]
    %v355 = vld [vmem:[#allocation7 + $0x698] sm:$0xff]
    %v356 = vld [vmem:[#allocation7 + $0x6a0] sm:$0xff]
    %v357 = vld [vmem:[#allocation7 + $0x6a8] sm:$0xff]
    %v358 = vld [vmem:[#allocation7 + $0x6b0] sm:$0xff]
    %v359 = vld [vmem:[#allocation7 + $0x6b8] sm:$0xff]
    %v360 = vld [vmem:[#allocation7 + $0x6c0] sm:$0xff]
    %v361 = vld [vmem:[#allocation7 + $0x6c8] sm:$0xff]
    %v362 = vld [vmem:[#allocation7 + $0x6d0] sm:$0xff]
    %v363 = vld [vmem:[#allocation7 + $0x6d8] sm:$0xff]
    %v364 = vld [vmem:[#allocation7 + $0x6e0] sm:$0xff]
    %v365 = vld [vmem:[#allocation7 + $0x6e8] sm:$0xff]
    %v366 = vld [vmem:[#allocation7 + $0x6f0] sm:$0xff]
    %v367 = vld [vmem:[#allocation7 + $0x6f8] sm:$0xff]
    %v368 = vld [vmem:[%s3] sm:$0xf]
    %v370 = vlaneseq
    %v371 = vshrl.u32 %v370, 7
    %v372 = vsub.s32 0, %v371
    %v373 = vrot.slane %v368, %v372
    %v374 = vlaneseq
    %v375 = vshrl.u32 %v374, 7
    %v376 = vsub.s32 1, %v375
    %v377 = vrot.slane %v368, %v376
    %v378 = vlaneseq
    %v379 = vshrl.u32 %v378, 7
    %v380 = vsub.s32 2, %v379
    %v381 = vrot.slane %v368, %v380
    %v382 = vlaneseq
    %v383 = vshrl.u32 %v382, 7
    %v384 = vsub.s32 3, %v383
    %v385 = vrot.slane %v368, %v384
    %v614 = vunpack.c.l.b16 %v144
    %v615 = vunpack.c.h.b16 %v144
    %v616 = vunpack.c.l.b16 %v145
    %v617 = vunpack.c.h.b16 %v145
    %v618 = vunpack.c.l.b16 %v146
    %v619 = vunpack.c.h.b16 %v146
    %v620 = vunpack.c.l.b16 %v147
    %v621 = vunpack.c.h.b16 %v147
    %v622 = vunpack.c.l.b16 %v148
    %v623 = vunpack.c.h.b16 %v148
    %v624 = vunpack.c.l.b16 %v149
    %v625 = vunpack.c.h.b16 %v149
    %v626 = vunpack.c.l.b16 %v150
    %v627 = vunpack.c.h.b16 %v150
    %v628 = vunpack.c.l.b16 %v151
    %v629 = vunpack.c.h.b16 %v151
    %v630 = vunpack.c.l.b16 %v152
    %v631 = vunpack.c.h.b16 %v152
    %v632 = vunpack.c.l.b16 %v153
    %v633 = vunpack.c.h.b16 %v153
    %v634 = vunpack.c.l.b16 %v154
    %v635 = vunpack.c.h.b16 %v154
    %v636 = vunpack.c.l.b16 %v155
    %v637 = vunpack.c.h.b16 %v155
    %v638 = vunpack.c.l.b16 %v156
    %v639 = vunpack.c.h.b16 %v156
    %v640 = vunpack.c.l.b16 %v157
    %v641 = vunpack.c.h.b16 %v157
    %v642 = vunpack.c.l.b16 %v158
    %v643 = vunpack.c.h.b16 %v158
    %v644 = vunpack.c.l.b16 %v159
    %v645 = vunpack.c.h.b16 %v159
    %v646 = vunpack.c.l.b16 %v160
    %v647 = vunpack.c.h.b16 %v160
    %v648 = vunpack.c.l.b16 %v161
    %v649 = vunpack.c.h.b16 %v161
    %v650 = vunpack.c.l.b16 %v162
    %v651 = vunpack.c.h.b16 %v162
    %v652 = vunpack.c.l.b16 %v163
    %v653 = vunpack.c.h.b16 %v163
    %v654 = vunpack.c.l.b16 %v164
    %v655 = vunpack.c.h.b16 %v164
    %v656 = vunpack.c.l.b16 %v165
    %v657 = vunpack.c.h.b16 %v165
    %v658 = vunpack.c.l.b16 %v166
    %v659 = vunpack.c.h.b16 %v166
    %v660 = vunpack.c.l.b16 %v167
    %v661 = vunpack.c.h.b16 %v167
    %v662 = vunpack.c.l.b16 %v168
    %v663 = vunpack.c.h.b16 %v168
    %v664 = vunpack.c.l.b16 %v169
    %v665 = vunpack.c.h.b16 %v169
    %v666 = vunpack.c.l.b16 %v170
    %v667 = vunpack.c.h.b16 %v170
    %v668 = vunpack.c.l.b16 %v171
    %v669 = vunpack.c.h.b16 %v171
    %v670 = vunpack.c.l.b16 %v172
    %v671 = vunpack.c.h.b16 %v172
    %v672 = vunpack.c.l.b16 %v173
    %v673 = vunpack.c.h.b16 %v173
    %v674 = vunpack.c.l.b16 %v174
    %v675 = vunpack.c.h.b16 %v174
    %v676 = vunpack.c.l.b16 %v175
    %v677 = vunpack.c.h.b16 %v175
    %v678 = vunpack.c.l.b16 %v176
    %v679 = vunpack.c.h.b16 %v176
    %v680 = vunpack.c.l.b16 %v177
    %v681 = vunpack.c.h.b16 %v177
    %v682 = vunpack.c.l.b16 %v178
    %v683 = vunpack.c.h.b16 %v178
    %v684 = vunpack.c.l.b16 %v179
    %v685 = vunpack.c.h.b16 %v179
    %v686 = vunpack.c.l.b16 %v180
    %v687 = vunpack.c.h.b16 %v180
    %v688 = vunpack.c.l.b16 %v181
    %v689 = vunpack.c.h.b16 %v181
    %v690 = vunpack.c.l.b16 %v182
    %v691 = vunpack.c.h.b16 %v182
    %v692 = vunpack.c.l.b16 %v183
    %v693 = vunpack.c.h.b16 %v183
    %v694 = vunpack.c.l.b16 %v184
    %v695 = vunpack.c.h.b16 %v184
    %v696 = vunpack.c.l.b16 %v185
    %v697 = vunpack.c.h.b16 %v185
    %v698 = vunpack.c.l.b16 %v186
    %v699 = vunpack.c.h.b16 %v186
    %v700 = vunpack.c.l.b16 %v187
    %v701 = vunpack.c.h.b16 %v187
    %v702 = vunpack.c.l.b16 %v188
    %v703 = vunpack.c.h.b16 %v188
    %v704 = vunpack.c.l.b16 %v189
    %v705 = vunpack.c.h.b16 %v189
    %v706 = vunpack.c.l.b16 %v190
    %v707 = vunpack.c.h.b16 %v190
    %v708 = vunpack.c.l.b16 %v191
    %v709 = vunpack.c.h.b16 %v191
    %v710 = vunpack.c.l.b16 %v192
    %v711 = vunpack.c.h.b16 %v192
    %v712 = vunpack.c.l.b16 %v193
    %v713 = vunpack.c.h.b16 %v193
    %v714 = vunpack.c.l.b16 %v194
    %v715 = vunpack.c.h.b16 %v194
    %v716 = vunpack.c.l.b16 %v195
    %v717 = vunpack.c.h.b16 %v195
    %v718 = vunpack.c.l.b16 %v196
    %v719 = vunpack.c.h.b16 %v196
    %v720 = vunpack.c.l.b16 %v197
    %v721 = vunpack.c.h.b16 %v197
    %v722 = vunpack.c.l.b16 %v198
    %v723 = vunpack.c.h.b16 %v198
    %v724 = vunpack.c.l.b16 %v199
    %v725 = vunpack.c.h.b16 %v199
    %v726 = vunpack.c.l.b16 %v200
    %v727 = vunpack.c.h.b16 %v200
    %v728 = vunpack.c.l.b16 %v201
    %v729 = vunpack.c.h.b16 %v201
    %v730 = vunpack.c.l.b16 %v202
    %v731 = vunpack.c.h.b16 %v202
    %v732 = vunpack.c.l.b16 %v203
    %v733 = vunpack.c.h.b16 %v203
    %v734 = vunpack.c.l.b16 %v204
    %v735 = vunpack.c.h.b16 %v204
    %v736 = vunpack.c.l.b16 %v205
    %v737 = vunpack.c.h.b16 %v205
    %v738 = vunpack.c.l.b16 %v206
    %v739 = vunpack.c.h.b16 %v206
    %v740 = vunpack.c.l.b16 %v207
    %v741 = vunpack.c.h.b16 %v207
    %v742 = vunpack.c.l.b16 %v208
    %v743 = vunpack.c.h.b16 %v208
    %v744 = vunpack.c.l.b16 %v209
    %v745 = vunpack.c.h.b16 %v209
    %v746 = vunpack.c.l.b16 %v210
    %v747 = vunpack.c.h.b16 %v210
    %v748 = vunpack.c.l.b16 %v211
    %v749 = vunpack.c.h.b16 %v211
    %v750 = vunpack.c.l.b16 %v212
    %v751 = vunpack.c.h.b16 %v212
    %v752 = vunpack.c.l.b16 %v213
    %v753 = vunpack.c.h.b16 %v213
    %v754 = vunpack.c.l.b16 %v214
    %v755 = vunpack.c.h.b16 %v214
    %v756 = vunpack.c.l.b16 %v215
    %v757 = vunpack.c.h.b16 %v215
    %v758 = vunpack.c.l.b16 %v216
    %v759 = vunpack.c.h.b16 %v216
    %v760 = vunpack.c.l.b16 %v217
    %v761 = vunpack.c.h.b16 %v217
    %v762 = vunpack.c.l.b16 %v218
    %v763 = vunpack.c.h.b16 %v218
    %v764 = vunpack.c.l.b16 %v219
    %v765 = vunpack.c.h.b16 %v219
    %v766 = vunpack.c.l.b16 %v220
    %v767 = vunpack.c.h.b16 %v220
    %v768 = vunpack.c.l.b16 %v221
    %v769 = vunpack.c.h.b16 %v221
    %v770 = vunpack.c.l.b16 %v222
    %v771 = vunpack.c.h.b16 %v222
    %v772 = vunpack.c.l.b16 %v223
    %v773 = vunpack.c.h.b16 %v223
    %v774 = vunpack.c.l.b16 %v224
    %v775 = vunpack.c.h.b16 %v224
    %v776 = vunpack.c.l.b16 %v225
    %v777 = vunpack.c.h.b16 %v225
    %v778 = vunpack.c.l.b16 %v226
    %v779 = vunpack.c.h.b16 %v226
    %v780 = vunpack.c.l.b16 %v227
    %v781 = vunpack.c.h.b16 %v227
    %v782 = vunpack.c.l.b16 %v228
    %v783 = vunpack.c.h.b16 %v228
    %v784 = vunpack.c.l.b16 %v229
    %v785 = vunpack.c.h.b16 %v229
    %v786 = vunpack.c.l.b16 %v230
    %v787 = vunpack.c.h.b16 %v230
    %v788 = vunpack.c.l.b16 %v231
    %v789 = vunpack.c.h.b16 %v231
    %v790 = vunpack.c.l.b16 %v232
    %v791 = vunpack.c.h.b16 %v232
    %v792 = vunpack.c.l.b16 %v233
    %v793 = vunpack.c.h.b16 %v233
    %v794 = vunpack.c.l.b16 %v234
    %v795 = vunpack.c.h.b16 %v234
    %v796 = vunpack.c.l.b16 %v235
    %v797 = vunpack.c.h.b16 %v235
    %v798 = vunpack.c.l.b16 %v236
    %v799 = vunpack.c.h.b16 %v236
    %v800 = vunpack.c.l.b16 %v237
    %v801 = vunpack.c.h.b16 %v237
    %v802 = vunpack.c.l.b16 %v238
    %v803 = vunpack.c.h.b16 %v238
    %v804 = vunpack.c.l.b16 %v239
    %v805 = vunpack.c.h.b16 %v239
    %v806 = vunpack.c.l.b16 %v240
    %v807 = vunpack.c.h.b16 %v240
    %v808 = vunpack.c.l.b16 %v241
    %v809 = vunpack.c.h.b16 %v241
    %v810 = vunpack.c.l.b16 %v242
    %v811 = vunpack.c.h.b16 %v242
    %v812 = vunpack.c.l.b16 %v243
    %v813 = vunpack.c.h.b16 %v243
    %v814 = vunpack.c.l.b16 %v244
    %v815 = vunpack.c.h.b16 %v244
    %v816 = vunpack.c.l.b16 %v245
    %v817 = vunpack.c.h.b16 %v245
    %v818 = vunpack.c.l.b16 %v246
    %v819 = vunpack.c.h.b16 %v246
    %v820 = vunpack.c.l.b16 %v247
    %v821 = vunpack.c.h.b16 %v247
    %v822 = vunpack.c.l.b16 %v248
    %v823 = vunpack.c.h.b16 %v248
    %v824 = vunpack.c.l.b16 %v249
    %v825 = vunpack.c.h.b16 %v249
    %v826 = vunpack.c.l.b16 %v250
    %v827 = vunpack.c.h.b16 %v250
    %v828 = vunpack.c.l.b16 %v251
    %v829 = vunpack.c.h.b16 %v251
    %v830 = vunpack.c.l.b16 %v252
    %v831 = vunpack.c.h.b16 %v252
    %v832 = vunpack.c.l.b16 %v253
    %v833 = vunpack.c.h.b16 %v253
    %v834 = vunpack.c.l.b16 %v254
    %v835 = vunpack.c.h.b16 %v254
    %v836 = vunpack.c.l.b16 %v255
    %v837 = vunpack.c.h.b16 %v255
    %v838 = vunpack.c.l.b16 %v256
    %v839 = vunpack.c.h.b16 %v256
    %v840 = vunpack.c.l.b16 %v257
    %v841 = vunpack.c.h.b16 %v257
    %v842 = vunpack.c.l.b16 %v258
    %v843 = vunpack.c.h.b16 %v258
    %v844 = vunpack.c.l.b16 %v259
    %v845 = vunpack.c.h.b16 %v259
    %v846 = vunpack.c.l.b16 %v260
    %v847 = vunpack.c.h.b16 %v260
    %v848 = vunpack.c.l.b16 %v261
    %v849 = vunpack.c.h.b16 %v261
    %v850 = vunpack.c.l.b16 %v262
    %v851 = vunpack.c.h.b16 %v262
    %v852 = vunpack.c.l.b16 %v263
    %v853 = vunpack.c.h.b16 %v263
    %v854 = vunpack.c.l.b16 %v264
    %v855 = vunpack.c.h.b16 %v264
    %v856 = vunpack.c.l.b16 %v265
    %v857 = vunpack.c.h.b16 %v265
    %v858 = vunpack.c.l.b16 %v266
    %v859 = vunpack.c.h.b16 %v266
    %v860 = vunpack.c.l.b16 %v267
    %v861 = vunpack.c.h.b16 %v267
    %v862 = vunpack.c.l.b16 %v268
    %v863 = vunpack.c.h.b16 %v268
    %v864 = vunpack.c.l.b16 %v269
    %v865 = vunpack.c.h.b16 %v269
    %v866 = vunpack.c.l.b16 %v270
    %v867 = vunpack.c.h.b16 %v270
    %v868 = vunpack.c.l.b16 %v271
    %v869 = vunpack.c.h.b16 %v271
    %v870 = vunpack.c.l.b16 %v272
    %v871 = vunpack.c.h.b16 %v272
    %v872 = vunpack.c.l.b16 %v273
    %v873 = vunpack.c.h.b16 %v273
    %v874 = vunpack.c.l.b16 %v274
    %v875 = vunpack.c.h.b16 %v274
    %v876 = vunpack.c.l.b16 %v275
    %v877 = vunpack.c.h.b16 %v275
    %v878 = vunpack.c.l.b16 %v276
    %v879 = vunpack.c.h.b16 %v276
    %v880 = vunpack.c.l.b16 %v277
    %v881 = vunpack.c.h.b16 %v277
    %v882 = vunpack.c.l.b16 %v278
    %v883 = vunpack.c.h.b16 %v278
    %v884 = vunpack.c.l.b16 %v279
    %v885 = vunpack.c.h.b16 %v279
    %v886 = vunpack.c.l.b16 %v280
    %v887 = vunpack.c.h.b16 %v280
    %v888 = vunpack.c.l.b16 %v281
    %v889 = vunpack.c.h.b16 %v281
    %v890 = vunpack.c.l.b16 %v282
    %v891 = vunpack.c.h.b16 %v282
    %v892 = vunpack.c.l.b16 %v283
    %v893 = vunpack.c.h.b16 %v283
    %v894 = vunpack.c.l.b16 %v284
    %v895 = vunpack.c.h.b16 %v284
    %v896 = vunpack.c.l.b16 %v285
    %v897 = vunpack.c.h.b16 %v285
    %v898 = vunpack.c.l.b16 %v286
    %v899 = vunpack.c.h.b16 %v286
    %v900 = vunpack.c.l.b16 %v287
    %v901 = vunpack.c.h.b16 %v287
    %v902 = vunpack.c.l.b16 %v288
    %v903 = vunpack.c.h.b16 %v288
    %v904 = vunpack.c.l.b16 %v289
    %v905 = vunpack.c.h.b16 %v289
    %v906 = vunpack.c.l.b16 %v290
    %v907 = vunpack.c.h.b16 %v290
    %v908 = vunpack.c.l.b16 %v291
    %v909 = vunpack.c.h.b16 %v291
    %v910 = vunpack.c.l.b16 %v292
    %v911 = vunpack.c.h.b16 %v292
    %v912 = vunpack.c.l.b16 %v293
    %v913 = vunpack.c.h.b16 %v293
    %v914 = vunpack.c.l.b16 %v294
    %v915 = vunpack.c.h.b16 %v294
    %v916 = vunpack.c.l.b16 %v295
    %v917 = vunpack.c.h.b16 %v295
    %v918 = vunpack.c.l.b16 %v296
    %v919 = vunpack.c.h.b16 %v296
    %v920 = vunpack.c.l.b16 %v297
    %v921 = vunpack.c.h.b16 %v297
    %v922 = vunpack.c.l.b16 %v298
    %v923 = vunpack.c.h.b16 %v298
    %v924 = vunpack.c.l.b16 %v299
    %v925 = vunpack.c.h.b16 %v299
    %v926 = vunpack.c.l.b16 %v300
    %v927 = vunpack.c.h.b16 %v300
    %v928 = vunpack.c.l.b16 %v301
    %v929 = vunpack.c.h.b16 %v301
    %v930 = vunpack.c.l.b16 %v302
    %v931 = vunpack.c.h.b16 %v302
    %v932 = vunpack.c.l.b16 %v303
    %v933 = vunpack.c.h.b16 %v303
    %v934 = vunpack.c.l.b16 %v304
    %v935 = vunpack.c.h.b16 %v304
    %v936 = vunpack.c.l.b16 %v305
    %v937 = vunpack.c.h.b16 %v305
    %v938 = vunpack.c.l.b16 %v306
    %v939 = vunpack.c.h.b16 %v306
    %v940 = vunpack.c.l.b16 %v307
    %v941 = vunpack.c.h.b16 %v307
    %v942 = vunpack.c.l.b16 %v308
    %v943 = vunpack.c.h.b16 %v308
    %v944 = vunpack.c.l.b16 %v309
    %v945 = vunpack.c.h.b16 %v309
    %v946 = vunpack.c.l.b16 %v310
    %v947 = vunpack.c.h.b16 %v310
    %v948 = vunpack.c.l.b16 %v311
    %v949 = vunpack.c.h.b16 %v311
    %v950 = vunpack.c.l.b16 %v312
    %v951 = vunpack.c.h.b16 %v312
    %v952 = vunpack.c.l.b16 %v313
    %v953 = vunpack.c.h.b16 %v313
    %v954 = vunpack.c.l.b16 %v314
    %v955 = vunpack.c.h.b16 %v314
    %v956 = vunpack.c.l.b16 %v315
    %v957 = vunpack.c.h.b16 %v315
    %v958 = vunpack.c.l.b16 %v316
    %v959 = vunpack.c.h.b16 %v316
    %v960 = vunpack.c.l.b16 %v317
    %v961 = vunpack.c.h.b16 %v317
    %v962 = vunpack.c.l.b16 %v318
    %v963 = vunpack.c.h.b16 %v318
    %v964 = vunpack.c.l.b16 %v319
    %v965 = vunpack.c.h.b16 %v319
    %v966 = vunpack.c.l.b16 %v320
    %v967 = vunpack.c.h.b16 %v320
    %v968 = vunpack.c.l.b16 %v321
    %v969 = vunpack.c.h.b16 %v321
    %v970 = vunpack.c.l.b16 %v322
    %v971 = vunpack.c.h.b16 %v322
    %v972 = vunpack.c.l.b16 %v323
    %v973 = vunpack.c.h.b16 %v323
    %v974 = vunpack.c.l.b16 %v324
    %v975 = vunpack.c.h.b16 %v324
    %v976 = vunpack.c.l.b16 %v325
    %v977 = vunpack.c.h.b16 %v325
    %v978 = vunpack.c.l.b16 %v326
    %v979 = vunpack.c.h.b16 %v326
    %v980 = vunpack.c.l.b16 %v327
    %v981 = vunpack.c.h.b16 %v327
    %v982 = vunpack.c.l.b16 %v328
    %v983 = vunpack.c.h.b16 %v328
    %v984 = vunpack.c.l.b16 %v329
    %v985 = vunpack.c.h.b16 %v329
    %v986 = vunpack.c.l.b16 %v330
    %v987 = vunpack.c.h.b16 %v330
    %v988 = vunpack.c.l.b16 %v331
    %v989 = vunpack.c.h.b16 %v331
    %v990 = vunpack.c.l.b16 %v332
    %v991 = vunpack.c.h.b16 %v332
    %v992 = vunpack.c.l.b16 %v333
    %v993 = vunpack.c.h.b16 %v333
    %v994 = vunpack.c.l.b16 %v334
    %v995 = vunpack.c.h.b16 %v334
    %v996 = vunpack.c.l.b16 %v335
    %v997 = vunpack.c.h.b16 %v335
    %v998 = vunpack.c.l.b16 %v336
    %v999 = vunpack.c.h.b16 %v336
    %v1000 = vunpack.c.l.b16 %v337
    %v1001 = vunpack.c.h.b16 %v337
    %v1002 = vunpack.c.l.b16 %v338
    %v1003 = vunpack.c.h.b16 %v338
    %v1004 = vunpack.c.l.b16 %v339
    %v1005 = vunpack.c.h.b16 %v339
    %v1006 = vunpack.c.l.b16 %v340
    %v1007 = vunpack.c.h.b16 %v340
    %v1008 = vunpack.c.l.b16 %v341
    %v1009 = vunpack.c.h.b16 %v341
    %v1010 = vunpack.c.l.b16 %v342
    %v1011 = vunpack.c.h.b16 %v342
    %v1012 = vunpack.c.l.b16 %v343
    %v1013 = vunpack.c.h.b16 %v343
    %v1014 = vunpack.c.l.b16 %v344
    %v1015 = vunpack.c.h.b16 %v344
    %v1016 = vunpack.c.l.b16 %v345
    %v1017 = vunpack.c.h.b16 %v345
    %v1018 = vunpack.c.l.b16 %v346
    %v1019 = vunpack.c.h.b16 %v346
    %v1020 = vunpack.c.l.b16 %v347
    %v1021 = vunpack.c.h.b16 %v347
    %v1022 = vunpack.c.l.b16 %v348
    %v1023 = vunpack.c.h.b16 %v348
    %v1024 = vunpack.c.l.b16 %v349
    %v1025 = vunpack.c.h.b16 %v349
    %v1026 = vunpack.c.l.b16 %v350
    %v1027 = vunpack.c.h.b16 %v350
    %v1028 = vunpack.c.l.b16 %v351
    %v1029 = vunpack.c.h.b16 %v351
    %v1030 = vunpack.c.l.b16 %v352
    %v1031 = vunpack.c.h.b16 %v352
    %v1032 = vunpack.c.l.b16 %v353
    %v1033 = vunpack.c.h.b16 %v353
    %v1034 = vunpack.c.l.b16 %v354
    %v1035 = vunpack.c.h.b16 %v354
    %v1036 = vunpack.c.l.b16 %v355
    %v1037 = vunpack.c.h.b16 %v355
    %v1038 = vunpack.c.l.b16 %v356
    %v1039 = vunpack.c.h.b16 %v356
    %v1040 = vunpack.c.l.b16 %v357
    %v1041 = vunpack.c.h.b16 %v357
    %v1042 = vunpack.c.l.b16 %v358
    %v1043 = vunpack.c.h.b16 %v358
    %v1044 = vunpack.c.l.b16 %v359
    %v1045 = vunpack.c.h.b16 %v359
    %v1046 = vunpack.c.l.b16 %v360
    %v1047 = vunpack.c.h.b16 %v360
    %v1048 = vunpack.c.l.b16 %v361
    %v1049 = vunpack.c.h.b16 %v361
    %v1050 = vunpack.c.l.b16 %v362
    %v1051 = vunpack.c.h.b16 %v362
    %v1052 = vunpack.c.l.b16 %v363
    %v1053 = vunpack.c.h.b16 %v363
    %v1054 = vunpack.c.l.b16 %v364
    %v1055 = vunpack.c.h.b16 %v364
    %v1056 = vunpack.c.l.b16 %v365
    %v1057 = vunpack.c.h.b16 %v365
    %v1058 = vunpack.c.l.b16 %v366
    %v1059 = vunpack.c.h.b16 %v366
    %v1060 = vunpack.c.l.b16 %v367
    %v1061 = vunpack.c.h.b16 %v367
    %v1062 = vpack.c.b16 %v618, %v614
    %v1063 = vpack.c.b16 %v619, %v615
    %v1064 = vpack.c.b16 %v620, %v616
    %v1065 = vpack.c.b16 %v621, %v617
    %v1066 = vpack.c.b16 %v626, %v622
    %v1067 = vpack.c.b16 %v627, %v623
    %v1068 = vpack.c.b16 %v628, %v624
    %v1069 = vpack.c.b16 %v629, %v625
    %v1070 = vpack.c.b16 %v634, %v630
    %v1071 = vpack.c.b16 %v635, %v631
    %v1072 = vpack.c.b16 %v636, %v632
    %v1073 = vpack.c.b16 %v637, %v633
    %v1074 = vpack.c.b16 %v642, %v638
    %v1075 = vpack.c.b16 %v643, %v639
    %v1076 = vpack.c.b16 %v644, %v640
    %v1077 = vpack.c.b16 %v645, %v641
    %v1078 = vpack.c.b16 %v650, %v646
    %v1079 = vpack.c.b16 %v651, %v647
    %v1080 = vpack.c.b16 %v652, %v648
    %v1081 = vpack.c.b16 %v653, %v649
    %v1082 = vpack.c.b16 %v658, %v654
    %v1083 = vpack.c.b16 %v659, %v655
    %v1084 = vpack.c.b16 %v660, %v656
    %v1085 = vpack.c.b16 %v661, %v657
    %v1086 = vpack.c.b16 %v666, %v662
    %v1087 = vpack.c.b16 %v667, %v663
    %v1088 = vpack.c.b16 %v668, %v664
    %v1089 = vpack.c.b16 %v669, %v665
    %v1090 = vpack.c.b16 %v674, %v670
    %v1091 = vpack.c.b16 %v675, %v671
    %v1092 = vpack.c.b16 %v676, %v672
    %v1093 = vpack.c.b16 %v677, %v673
    %v1094 = vpack.c.b16 %v682, %v678
    %v1095 = vpack.c.b16 %v683, %v679
    %v1096 = vpack.c.b16 %v684, %v680
    %v1097 = vpack.c.b16 %v685, %v681
    %v1098 = vpack.c.b16 %v690, %v686
    %v1099 = vpack.c.b16 %v691, %v687
    %v1100 = vpack.c.b16 %v692, %v688
    %v1101 = vpack.c.b16 %v693, %v689
    %v1102 = vpack.c.b16 %v698, %v694
    %v1103 = vpack.c.b16 %v699, %v695
    %v1104 = vpack.c.b16 %v700, %v696
    %v1105 = vpack.c.b16 %v701, %v697
    %v1106 = vpack.c.b16 %v706, %v702
    %v1107 = vpack.c.b16 %v707, %v703
    %v1108 = vpack.c.b16 %v708, %v704
    %v1109 = vpack.c.b16 %v709, %v705
    %v1110 = vpack.c.b16 %v714, %v710
    %v1111 = vpack.c.b16 %v715, %v711
    %v1112 = vpack.c.b16 %v716, %v712
    %v1113 = vpack.c.b16 %v717, %v713
    %v1114 = vpack.c.b16 %v722, %v718
    %v1115 = vpack.c.b16 %v723, %v719
    %v1116 = vpack.c.b16 %v724, %v720
    %v1117 = vpack.c.b16 %v725, %v721
    %v1118 = vpack.c.b16 %v730, %v726
    %v1119 = vpack.c.b16 %v731, %v727
    %v1120 = vpack.c.b16 %v732, %v728
    %v1121 = vpack.c.b16 %v733, %v729
    %v1122 = vpack.c.b16 %v738, %v734
    %v1123 = vpack.c.b16 %v739, %v735
    %v1124 = vpack.c.b16 %v740, %v736
    %v1125 = vpack.c.b16 %v741, %v737
    %v1126 = vpack.c.b16 %v746, %v742
    %v1127 = vpack.c.b16 %v747, %v743
    %v1128 = vpack.c.b16 %v748, %v744
    %v1129 = vpack.c.b16 %v749, %v745
    %v1130 = vpack.c.b16 %v754, %v750
    %v1131 = vpack.c.b16 %v755, %v751
    %v1132 = vpack.c.b16 %v756, %v752
    %v1133 = vpack.c.b16 %v757, %v753
    %v1134 = vpack.c.b16 %v762, %v758
    %v1135 = vpack.c.b16 %v763, %v759
    %v1136 = vpack.c.b16 %v764, %v760
    %v1137 = vpack.c.b16 %v765, %v761
    %v1138 = vpack.c.b16 %v770, %v766
    %v1139 = vpack.c.b16 %v771, %v767
    %v1140 = vpack.c.b16 %v772, %v768
    %v1141 = vpack.c.b16 %v773, %v769
    %v1142 = vpack.c.b16 %v778, %v774
    %v1143 = vpack.c.b16 %v779, %v775
    %v1144 = vpack.c.b16 %v780, %v776
    %v1145 = vpack.c.b16 %v781, %v777
    %v1146 = vpack.c.b16 %v786, %v782
    %v1147 = vpack.c.b16 %v787, %v783
    %v1148 = vpack.c.b16 %v788, %v784
    %v1149 = vpack.c.b16 %v789, %v785
    %v1150 = vpack.c.b16 %v794, %v790
    %v1151 = vpack.c.b16 %v795, %v791
    %v1152 = vpack.c.b16 %v796, %v792
    %v1153 = vpack.c.b16 %v797, %v793
    %v1154 = vpack.c.b16 %v802, %v798
    %v1155 = vpack.c.b16 %v803, %v799
    %v1156 = vpack.c.b16 %v804, %v800
    %v1157 = vpack.c.b16 %v805, %v801
    %v1158 = vpack.c.b16 %v810, %v806
    %v1159 = vpack.c.b16 %v811, %v807
    %v1160 = vpack.c.b16 %v812, %v808
    %v1161 = vpack.c.b16 %v813, %v809
    %v1162 = vpack.c.b16 %v818, %v814
    %v1163 = vpack.c.b16 %v819, %v815
    %v1164 = vpack.c.b16 %v820, %v816
    %v1165 = vpack.c.b16 %v821, %v817
    %v1166 = vpack.c.b16 %v826, %v822
    %v1167 = vpack.c.b16 %v827, %v823
    %v1168 = vpack.c.b16 %v828, %v824
    %v1169 = vpack.c.b16 %v829, %v825
    %v1170 = vpack.c.b16 %v834, %v830
    %v1171 = vpack.c.b16 %v835, %v831
    %v1172 = vpack.c.b16 %v836, %v832
    %v1173 = vpack.c.b16 %v837, %v833
    %v1174 = vpack.c.b16 %v842, %v838
    %v1175 = vpack.c.b16 %v843, %v839
    %v1176 = vpack.c.b16 %v844, %v840
    %v1177 = vpack.c.b16 %v845, %v841
    %v1178 = vpack.c.b16 %v850, %v846
    %v1179 = vpack.c.b16 %v851, %v847
    %v1180 = vpack.c.b16 %v852, %v848
    %v1181 = vpack.c.b16 %v853, %v849
    %v1182 = vpack.c.b16 %v858, %v854
    %v1183 = vpack.c.b16 %v859, %v855
    %v1184 = vpack.c.b16 %v860, %v856
    %v1185 = vpack.c.b16 %v861, %v857
    %v1186 = vpack.c.b16 %v866, %v862
    %v1187 = vpack.c.b16 %v867, %v863
    %v1188 = vpack.c.b16 %v868, %v864
    %v1189 = vpack.c.b16 %v869, %v865
    %v1190 = vpack.c.b16 %v874, %v870
    %v1191 = vpack.c.b16 %v875, %v871
    %v1192 = vpack.c.b16 %v876, %v872
    %v1193 = vpack.c.b16 %v877, %v873
    %v1194 = vpack.c.b16 %v882, %v878
    %v1195 = vpack.c.b16 %v883, %v879
    %v1196 = vpack.c.b16 %v884, %v880
    %v1197 = vpack.c.b16 %v885, %v881
    %v1198 = vpack.c.b16 %v890, %v886
    %v1199 = vpack.c.b16 %v891, %v887
    %v1200 = vpack.c.b16 %v892, %v888
    %v1201 = vpack.c.b16 %v893, %v889
    %v1202 = vpack.c.b16 %v898, %v894
    %v1203 = vpack.c.b16 %v899, %v895
    %v1204 = vpack.c.b16 %v900, %v896
    %v1205 = vpack.c.b16 %v901, %v897
    %v1206 = vpack.c.b16 %v906, %v902
    %v1207 = vpack.c.b16 %v907, %v903
    %v1208 = vpack.c.b16 %v908, %v904
    %v1209 = vpack.c.b16 %v909, %v905
    %v1210 = vpack.c.b16 %v914, %v910
    %v1211 = vpack.c.b16 %v915, %v911
    %v1212 = vpack.c.b16 %v916, %v912
    %v1213 = vpack.c.b16 %v917, %v913
    %v1214 = vpack.c.b16 %v922, %v918
    %v1215 = vpack.c.b16 %v923, %v919
    %v1216 = vpack.c.b16 %v924, %v920
    %v1217 = vpack.c.b16 %v925, %v921
    %v1218 = vpack.c.b16 %v930, %v926
    %v1219 = vpack.c.b16 %v931, %v927
    %v1220 = vpack.c.b16 %v932, %v928
    %v1221 = vpack.c.b16 %v933, %v929
    %v1222 = vpack.c.b16 %v938, %v934
    %v1223 = vpack.c.b16 %v939, %v935
    %v1224 = vpack.c.b16 %v940, %v936
    %v1225 = vpack.c.b16 %v941, %v937
    %v1226 = vpack.c.b16 %v946, %v942
    %v1227 = vpack.c.b16 %v947, %v943
    %v1228 = vpack.c.b16 %v948, %v944
    %v1229 = vpack.c.b16 %v949, %v945
    %v1230 = vpack.c.b16 %v954, %v950
    %v1231 = vpack.c.b16 %v955, %v951
    %v1232 = vpack.c.b16 %v956, %v952
    %v1233 = vpack.c.b16 %v957, %v953
    %v1234 = vpack.c.b16 %v962, %v958
    %v1235 = vpack.c.b16 %v963, %v959
    %v1236 = vpack.c.b16 %v964, %v960
    %v1237 = vpack.c.b16 %v965, %v961
    %v1238 = vpack.c.b16 %v970, %v966
    %v1239 = vpack.c.b16 %v971, %v967
    %v1240 = vpack.c.b16 %v972, %v968
    %v1241 = vpack.c.b16 %v973, %v969
    %v1242 = vpack.c.b16 %v978, %v974
    %v1243 = vpack.c.b16 %v979, %v975
    %v1244 = vpack.c.b16 %v980, %v976
    %v1245 = vpack.c.b16 %v981, %v977
    %v1246 = vpack.c.b16 %v986, %v982
    %v1247 = vpack.c.b16 %v987, %v983
    %v1248 = vpack.c.b16 %v988, %v984
    %v1249 = vpack.c.b16 %v989, %v985
    %v1250 = vpack.c.b16 %v994, %v990
    %v1251 = vpack.c.b16 %v995, %v991
    %v1252 = vpack.c.b16 %v996, %v992
    %v1253 = vpack.c.b16 %v997, %v993
    %v1254 = vpack.c.b16 %v1002, %v998
    %v1255 = vpack.c.b16 %v1003, %v999
    %v1256 = vpack.c.b16 %v1004, %v1000
    %v1257 = vpack.c.b16 %v1005, %v1001
    %v1258 = vpack.c.b16 %v1010, %v1006
    %v1259 = vpack.c.b16 %v1011, %v1007
    %v1260 = vpack.c.b16 %v1012, %v1008
    %v1261 = vpack.c.b16 %v1013, %v1009
    %v1262 = vpack.c.b16 %v1018, %v1014
    %v1263 = vpack.c.b16 %v1019, %v1015
    %v1264 = vpack.c.b16 %v1020, %v1016
    %v1265 = vpack.c.b16 %v1021, %v1017
    %v1266 = vpack.c.b16 %v1026, %v1022
    %v1267 = vpack.c.b16 %v1027, %v1023
    %v1268 = vpack.c.b16 %v1028, %v1024
    %v1269 = vpack.c.b16 %v1029, %v1025
    %v1270 = vpack.c.b16 %v1034, %v1030
    %v1271 = vpack.c.b16 %v1035, %v1031
    %v1272 = vpack.c.b16 %v1036, %v1032
    %v1273 = vpack.c.b16 %v1037, %v1033
    %v1274 = vpack.c.b16 %v1042, %v1038
    %v1275 = vpack.c.b16 %v1043, %v1039
    %v1276 = vpack.c.b16 %v1044, %v1040
    %v1277 = vpack.c.b16 %v1045, %v1041
    %v1278 = vpack.c.b16 %v1050, %v1046
    %v1279 = vpack.c.b16 %v1051, %v1047
    %v1280 = vpack.c.b16 %v1052, %v1048
    %v1281 = vpack.c.b16 %v1053, %v1049
    %v1282 = vpack.c.b16 %v1058, %v1054
    %v1283 = vpack.c.b16 %v1059, %v1055
    %v1284 = vpack.c.b16 %v1060, %v1056
    %v1285 = vpack.c.b16 %v1061, %v1057
    %1510 = vmatprep.subr.bf16.mxu0 %v1091
    %1511 = vmatpush1.bf16.msra.mxu0 %v1090
    %1512 = vmatprep.subr.bf16.mxu0 %v1087
    %1513 = vmatpush1.bf16.msra.mxu0 %v1086
    %1514 = vmatprep.subr.bf16.mxu0 %v1083
    %1515 = vmatpush1.bf16.msra.mxu0 %v1082
    %1516 = vmatprep.subr.bf16.mxu0 %v1079
    %1517 = vmatpush1.bf16.msra.mxu0 %v1078
    %1518 = vmatprep.subr.bf16.mxu0 %v1075
    %1519 = vmatpush1.bf16.msra.mxu0 %v1074
    %1520 = vmatprep.subr.bf16.mxu0 %v1071
    %1521 = vmatpush1.bf16.msra.mxu0 %v1070
    %1522 = vmatprep.subr.bf16.mxu0 %v1067
    %1523 = vmatpush1.bf16.msra.mxu0 %v1066
    %1524 = vmatprep.subr.bf16.mxu0 %v1063
    %1525 = vmatpush1.bf16.msra.mxu0 %v1062
    %1526 = vmatprep.subr.bf16.mxu0 %v1123
    %1527 = vmatpush2.bf16.msra.mxu0 %v1122
    %1528 = vmatprep.subr.bf16.mxu0 %v1119
    %1529 = vmatpush2.bf16.msra.mxu0 %v1118
    %1530 = vmatprep.subr.bf16.mxu0 %v1115
    %1531 = vmatpush2.bf16.msra.mxu0 %v1114
    %1532 = vmatprep.subr.bf16.mxu0 %v1111
    %1533 = vmatpush2.bf16.msra.mxu0 %v1110
    %1534 = vmatprep.subr.bf16.mxu0 %v1107
    %1535 = vmatpush2.bf16.msra.mxu0 %v1106
    %1536 = vmatprep.subr.bf16.mxu0 %v1103
    %1537 = vmatpush2.bf16.msra.mxu0 %v1102
    %1538 = vmatprep.subr.bf16.mxu0 %v1099
    %1539 = vmatpush2.bf16.msra.mxu0 %v1098
    %1540 = vmatprep.subr.bf16.mxu0 %v1095
    %1541 = vmatpush2.bf16.msra.mxu0 %v1094
    %1542 = vmatprep.mubr.bf16.mxu0 %v138
    %1543 = vmatmul.mubr.bf16.gmra.mxu0 %v137
    %v1544 = vpop.f32.mrf.mxu0
    %v1545 = vadd.f32 %v373, %v1544
    %v1546 = vpop.f32.mrf.mxu0
    %v1547 = vadd.f32 %v377, %v1546
    %v1548 = vpop.f32.mrf.mxu0
    %v1549 = vpop.f32.mrf.mxu0
    %1550 = vdwg.mxu0
    %1551 = vmatprep.subr.bf16.mxu0 %v1155
    %1552 = vmatpush1.bf16.msra.mxu0 %v1154
    %1553 = vmatprep.subr.bf16.mxu0 %v1151
    %1554 = vmatpush1.bf16.msra.mxu0 %v1150
    %1555 = vmatprep.subr.bf16.mxu0 %v1147
    %1556 = vmatpush1.bf16.msra.mxu0 %v1146
    %1557 = vmatprep.subr.bf16.mxu0 %v1143
    %1558 = vmatpush1.bf16.msra.mxu0 %v1142
    %1559 = vmatprep.subr.bf16.mxu0 %v1139
    %1560 = vmatpush1.bf16.msra.mxu0 %v1138
    %1561 = vmatprep.subr.bf16.mxu0 %v1135
    %1562 = vmatpush1.bf16.msra.mxu0 %v1134
    %1563 = vmatprep.subr.bf16.mxu0 %v1131
    %1564 = vmatpush1.bf16.msra.mxu0 %v1130
    %1565 = vmatprep.subr.bf16.mxu0 %v1127
    %1566 = vmatpush1.bf16.msra.mxu0 %v1126
    %1567 = vmatprep.subr.bf16.mxu0 %v1187
    %1568 = vmatpush2.bf16.msra.mxu0 %v1186
    %1569 = vmatprep.subr.bf16.mxu0 %v1183
    %1570 = vmatpush2.bf16.msra.mxu0 %v1182
    %1571 = vmatprep.subr.bf16.mxu0 %v1179
    %1572 = vmatpush2.bf16.msra.mxu0 %v1178
    %1573 = vmatprep.subr.bf16.mxu0 %v1175
    %1574 = vmatpush2.bf16.msra.mxu0 %v1174
    %1575 = vmatprep.subr.bf16.mxu0 %v1171
    %1576 = vmatpush2.bf16.msra.mxu0 %v1170
    %1577 = vmatprep.subr.bf16.mxu0 %v1167
    %1578 = vmatpush2.bf16.msra.mxu0 %v1166
    %1579 = vmatprep.subr.bf16.mxu0 %v1163
    %1580 = vmatpush2.bf16.msra.mxu0 %v1162
    %1581 = vmatprep.subr.bf16.mxu0 %v1159
    %1582 = vmatpush2.bf16.msra.mxu0 %v1158
    %1583 = vmatprep.mubr.bf16.mxu0 %v140
    %1584 = vmatmul.mubr.bf16.gmra.mxu0 %v139
    %v1585 = vpop.f32.mrf.mxu0
    %v1586 = vadd.f32 %v1545, %v1585
    %v1587 = vpop.f32.mrf.mxu0
    %v1588 = vadd.f32 %v1547, %v1587
    %v1589 = vpop.f32.mrf.mxu0
    %v1590 = vpop.f32.mrf.mxu0
    %1591 = vdwg.mxu0
    %1592 = vmatprep.subr.bf16.mxu0 %v1219
    %1593 = vmatpush1.bf16.msra.mxu0 %v1218
    %1594 = vmatprep.subr.bf16.mxu0 %v1215
    %1595 = vmatpush1.bf16.msra.mxu0 %v1214
    %1596 = vmatprep.subr.bf16.mxu0 %v1211
    %1597 = vmatpush1.bf16.msra.mxu0 %v1210
    %1598 = vmatprep.subr.bf16.mxu0 %v1207
    %1599 = vmatpush1.bf16.msra.mxu0 %v1206
    %1600 = vmatprep.subr.bf16.mxu0 %v1203
    %1601 = vmatpush1.bf16.msra.mxu0 %v1202
    %1602 = vmatprep.subr.bf16.mxu0 %v1199
    %1603 = vmatpush1.bf16.msra.mxu0 %v1198
    %1604 = vmatprep.subr.bf16.mxu0 %v1195
    %1605 = vmatpush1.bf16.msra.mxu0 %v1194
    %1606 = vmatprep.subr.bf16.mxu0 %v1191
    %1607 = vmatpush1.bf16.msra.mxu0 %v1190
    %1608 = vmatprep.subr.bf16.mxu0 %v1251
    %1609 = vmatpush2.bf16.msra.mxu0 %v1250
    %1610 = vmatprep.subr.bf16.mxu0 %v1247
    %1611 = vmatpush2.bf16.msra.mxu0 %v1246
    %1612 = vmatprep.subr.bf16.mxu0 %v1243
    %1613 = vmatpush2.bf16.msra.mxu0 %v1242
    %1614 = vmatprep.subr.bf16.mxu0 %v1239
    %1615 = vmatpush2.bf16.msra.mxu0 %v1238
    %1616 = vmatprep.subr.bf16.mxu0 %v1235
    %1617 = vmatpush2.bf16.msra.mxu0 %v1234
    %1618 = vmatprep.subr.bf16.mxu0 %v1231
    %1619 = vmatpush2.bf16.msra.mxu0 %v1230
    %1620 = vmatprep.subr.bf16.mxu0 %v1227
    %1621 = vmatpush2.bf16.msra.mxu0 %v1226
    %1622 = vmatprep.subr.bf16.mxu0 %v1223
    %1623 = vmatpush2.bf16.msra.mxu0 %v1222
    %1624 = vmatprep.mubr.bf16.mxu0 %v142
    %1625 = vmatmul.mubr.bf16.gmra.mxu0 %v141
    %v1626 = vpop.f32.mrf.mxu0
    %v1627 = vadd.f32 %v1586, %v1626
    %v1628 = vpop.f32.mrf.mxu0
    %v1629 = vadd.f32 %v1588, %v1628
    %v1630 = vpop.f32.mrf.mxu0
    %v1631 = vpop.f32.mrf.mxu0
    %1632 = vdwg.mxu0
    %1633 = vmatprep.subr.bf16.mxu0 %v1283
    %1634 = vmatpush1.bf16.msra.mxu0 %v1282
    %1635 = vmatprep.subr.bf16.mxu0 %v1279
    %1636 = vmatpush1.bf16.msra.mxu0 %v1278
    %1637 = vmatprep.subr.bf16.mxu0 %v1275
    %1638 = vmatpush1.bf16.msra.mxu0 %v1274
    %1639 = vmatprep.subr.bf16.mxu0 %v1271
    %1640 = vmatpush1.bf16.msra.mxu0 %v1270
    %1641 = vmatprep.subr.bf16.mxu0 %v1267
    %1642 = vmatpush1.bf16.msra.mxu0 %v1266
    %1643 = vmatprep.subr.bf16.mxu0 %v1263
    %1644 = vmatpush1.bf16.msra.mxu0 %v1262
    %1645 = vmatprep.subr.bf16.mxu0 %v1259
    %1646 = vmatpush1.bf16.msra.mxu0 %v1258
    %1647 = vmatprep.subr.bf16.mxu0 %v1255
    %1648 = vmatpush1.bf16.msra.mxu0 %v1254
    %1649 = vmatprep.subr.bf16.mxu0 0
    %1650 = vmatpush2.bf16.msra.mxu0 0
    %1651 = vmatprep.subr.bf16.mxu0 0
    %1652 = vmatpush2.bf16.msra.mxu0 0
    %1653 = vmatprep.subr.bf16.mxu0 0
    %1654 = vmatpush2.bf16.msra.mxu0 0
    %1655 = vmatprep.subr.bf16.mxu0 0
    %1656 = vmatpush2.bf16.msra.mxu0 0
    %1657 = vmatprep.subr.bf16.mxu0 0
    %1658 = vmatpush2.bf16.msra.mxu0 0
    %1659 = vmatprep.subr.bf16.mxu0 0
    %1660 = vmatpush2.bf16.msra.mxu0 0
    %1661 = vmatprep.subr.bf16.mxu0 0
    %1662 = vmatpush2.bf16.msra.mxu0 0
    %1663 = vmatprep.subr.bf16.mxu0 0
    %1664 = vmatpush2.bf16.msra.mxu0 0
    %1665 = vmatprep.mubr.bf16.mxu0 0
    %1666 = vmatmul.mubr.bf16.gmra.mxu0 %v143
    %v1667 = vpop.f32.mrf.mxu0
    %v1668 = vadd.f32 %v1627, %v1667
    %v1669 = vpop.f32.mrf.mxu0
    %v1670 = vadd.f32 %v1629, %v1669
    %v1671 = vpop.f32.mrf.mxu0
    %v1672 = vpop.f32.mrf.mxu0
    %1673 = vdwg.mxu0
    %1674 = vmatprep.subr.bf16.mxu0 %v1093
    %1675 = vmatpush1.bf16.msra.mxu0 %v1092
    %1676 = vmatprep.subr.bf16.mxu0 %v1089
    %1677 = vmatpush1.bf16.msra.mxu0 %v1088
    %1678 = vmatprep.subr.bf16.mxu0 %v1085
    %1679 = vmatpush1.bf16.msra.mxu0 %v1084
    %1680 = vmatprep.subr.bf16.mxu0 %v1081
    %1681 = vmatpush1.bf16.msra.mxu0 %v1080
    %1682 = vmatprep.subr.bf16.mxu0 %v1077
    %1683 = vmatpush1.bf16.msra.mxu0 %v1076
    %1684 = vmatprep.subr.bf16.mxu0 %v1073
    %1685 = vmatpush1.bf16.msra.mxu0 %v1072
    %1686 = vmatprep.subr.bf16.mxu0 %v1069
    %1687 = vmatpush1.bf16.msra.mxu0 %v1068
    %1688 = vmatprep.subr.bf16.mxu0 %v1065
    %1689 = vmatpush1.bf16.msra.mxu0 %v1064
    %1690 = vmatprep.subr.bf16.mxu0 %v1125
    %1691 = vmatpush2.bf16.msra.mxu0 %v1124
    %1692 = vmatprep.subr.bf16.mxu0 %v1121
    %1693 = vmatpush2.bf16.msra.mxu0 %v1120
    %1694 = vmatprep.subr.bf16.mxu0 %v1117
    %1695 = vmatpush2.bf16.msra.mxu0 %v1116
    %1696 = vmatprep.subr.bf16.mxu0 %v1113
    %1697 = vmatpush2.bf16.msra.mxu0 %v1112
    %1698 = vmatprep.subr.bf16.mxu0 %v1109
    %1699 = vmatpush2.bf16.msra.mxu0 %v1108
    %1700 = vmatprep.subr.bf16.mxu0 %v1105
    %1701 = vmatpush2.bf16.msra.mxu0 %v1104
    %1702 = vmatprep.subr.bf16.mxu0 %v1101
    %1703 = vmatpush2.bf16.msra.mxu0 %v1100
    %1704 = vmatprep.subr.bf16.mxu0 %v1097
    %1705 = vmatpush2.bf16.msra.mxu0 %v1096
    %1706 = vmatprep.mubr.bf16.mxu0 %v138
    %1707 = vmatmul.mubr.bf16.gmra.mxu0 %v137
    %v1708 = vpop.f32.mrf.mxu0
    %v1709 = vadd.f32 %v381, %v1708
    %v1710 = vpop.f32.mrf.mxu0
    %v1711 = vadd.f32 %v385, %v1710
    %v1712 = vpop.f32.mrf.mxu0
    %v1713 = vpop.f32.mrf.mxu0
    %1714 = vdwg.mxu0
    %1715 = vmatprep.subr.bf16.mxu0 %v1157
    %1716 = vmatpush1.bf16.msra.mxu0 %v1156
    %1717 = vmatprep.subr.bf16.mxu0 %v1153
    %1718 = vmatpush1.bf16.msra.mxu0 %v1152
    %1719 = vmatprep.subr.bf16.mxu0 %v1149
    %1720 = vmatpush1.bf16.msra.mxu0 %v1148
    %1721 = vmatprep.subr.bf16.mxu0 %v1145
    %1722 = vmatpush1.bf16.msra.mxu0 %v1144
    %1723 = vmatprep.subr.bf16.mxu0 %v1141
    %1724 = vmatpush1.bf16.msra.mxu0 %v1140
    %1725 = vmatprep.subr.bf16.mxu0 %v1137
    %1726 = vmatpush1.bf16.msra.mxu0 %v1136
    %1727 = vmatprep.subr.bf16.mxu0 %v1133
    %1728 = vmatpush1.bf16.msra.mxu0 %v1132
    %1729 = vmatprep.subr.bf16.mxu0 %v1129
    %1730 = vmatpush1.bf16.msra.mxu0 %v1128
    %1731 = vmatprep.subr.bf16.mxu0 %v1189
    %1732 = vmatpush2.bf16.msra.mxu0 %v1188
    %1733 = vmatprep.subr.bf16.mxu0 %v1185
    %1734 = vmatpush2.bf16.msra.mxu0 %v1184
    %1735 = vmatprep.subr.bf16.mxu0 %v1181
    %1736 = vmatpush2.bf16.msra.mxu0 %v1180
    %1737 = vmatprep.subr.bf16.mxu0 %v1177
    %1738 = vmatpush2.bf16.msra.mxu0 %v1176
    %1739 = vmatprep.subr.bf16.mxu0 %v1173
    %1740 = vmatpush2.bf16.msra.mxu0 %v1172
    %1741 = vmatprep.subr.bf16.mxu0 %v1169
    %1742 = vmatpush2.bf16.msra.mxu0 %v1168
    %1743 = vmatprep.subr.bf16.mxu0 %v1165
    %1744 = vmatpush2.bf16.msra.mxu0 %v1164
    %1745 = vmatprep.subr.bf16.mxu0 %v1161
    %1746 = vmatpush2.bf16.msra.mxu0 %v1160
    %1747 = vmatprep.mubr.bf16.mxu0 %v140
    %1748 = vmatmul.mubr.bf16.gmra.mxu0 %v139
    %v1749 = vpop.f32.mrf.mxu0
    %v1750 = vadd.f32 %v1709, %v1749
    %v1751 = vpop.f32.mrf.mxu0
    %v1752 = vadd.f32 %v1711, %v1751
    %v1753 = vpop.f32.mrf.mxu0
    %v1754 = vpop.f32.mrf.mxu0
    %1755 = vdwg.mxu0
    %1756 = vmatprep.subr.bf16.mxu0 %v1221
    %1757 = vmatpush1.bf16.msra.mxu0 %v1220
    %1758 = vmatprep.subr.bf16.mxu0 %v1217
    %1759 = vmatpush1.bf16.msra.mxu0 %v1216
    %1760 = vmatprep.subr.bf16.mxu0 %v1213
    %1761 = vmatpush1.bf16.msra.mxu0 %v1212
    %1762 = vmatprep.subr.bf16.mxu0 %v1209
    %1763 = vmatpush1.bf16.msra.mxu0 %v1208
    %1764 = vmatprep.subr.bf16.mxu0 %v1205
    %1765 = vmatpush1.bf16.msra.mxu0 %v1204
    %1766 = vmatprep.subr.bf16.mxu0 %v1201
    %1767 = vmatpush1.bf16.msra.mxu0 %v1200
    %1768 = vmatprep.subr.bf16.mxu0 %v1197
    %1769 = vmatpush1.bf16.msra.mxu0 %v1196
    %1770 = vmatprep.subr.bf16.mxu0 %v1193
    %1771 = vmatpush1.bf16.msra.mxu0 %v1192
    %1772 = vmatprep.subr.bf16.mxu0 %v1253
    %1773 = vmatpush2.bf16.msra.mxu0 %v1252
    %1774 = vmatprep.subr.bf16.mxu0 %v1249
    %1775 = vmatpush2.bf16.msra.mxu0 %v1248
    %1776 = vmatprep.subr.bf16.mxu0 %v1245
    %1777 = vmatpush2.bf16.msra.mxu0 %v1244
    %1778 = vmatprep.subr.bf16.mxu0 %v1241
    %1779 = vmatpush2.bf16.msra.mxu0 %v1240
    %1780 = vmatprep.subr.bf16.mxu0 %v1237
    %1781 = vmatpush2.bf16.msra.mxu0 %v1236
    %1782 = vmatprep.subr.bf16.mxu0 %v1233
    %1783 = vmatpush2.bf16.msra.mxu0 %v1232
    %1784 = vmatprep.subr.bf16.mxu0 %v1229
    %1785 = vmatpush2.bf16.msra.mxu0 %v1228
    %1786 = vmatprep.subr.bf16.mxu0 %v1225
    %1787 = vmatpush2.bf16.msra.mxu0 %v1224
    %1788 = vmatprep.mubr.bf16.mxu0 %v142
    %1789 = vmatmul.mubr.bf16.gmra.mxu0 %v141
    %v1790 = vpop.f32.mrf.mxu0
    %v1791 = vadd.f32 %v1750, %v1790
    %v1792 = vpop.f32.mrf.mxu0
    %v1793 = vadd.f32 %v1752, %v1792
    %v1794 = vpop.f32.mrf.mxu0
    %v1795 = vpop.f32.mrf.mxu0
    %1796 = vdwg.mxu0
    %1797 = vmatprep.subr.bf16.mxu0 %v1285
    %1798 = vmatpush1.bf16.msra.mxu0 %v1284
    %1799 = vmatprep.subr.bf16.mxu0 %v1281
    %1800 = vmatpush1.bf16.msra.mxu0 %v1280
    %1801 = vmatprep.subr.bf16.mxu0 %v1277
    %1802 = vmatpush1.bf16.msra.mxu0 %v1276
    %1803 = vmatprep.subr.bf16.mxu0 %v1273
    %1804 = vmatpush1.bf16.msra.mxu0 %v1272
    %1805 = vmatprep.subr.bf16.mxu0 %v1269
    %1806 = vmatpush1.bf16.msra.mxu0 %v1268
    %1807 = vmatprep.subr.bf16.mxu0 %v1265
    %1808 = vmatpush1.bf16.msra.mxu0 %v1264
    %1809 = vmatprep.subr.bf16.mxu0 %v1261
    %1810 = vmatpush1.bf16.msra.mxu0 %v1260
    %1811 = vmatprep.subr.bf16.mxu0 %v1257
    %1812 = vmatpush1.bf16.msra.mxu0 %v1256
    %1813 = vmatprep.subr.bf16.mxu0 0
    %1814 = vmatpush2.bf16.msra.mxu0 0
    %1815 = vmatprep.subr.bf16.mxu0 0
    %1816 = vmatpush2.bf16.msra.mxu0 0
    %1817 = vmatprep.subr.bf16.mxu0 0
    %1818 = vmatpush2.bf16.msra.mxu0 0
    %1819 = vmatprep.subr.bf16.mxu0 0
    %1820 = vmatpush2.bf16.msra.mxu0 0
    %1821 = vmatprep.subr.bf16.mxu0 0
    %1822 = vmatpush2.bf16.msra.mxu0 0
    %1823 = vmatprep.subr.bf16.mxu0 0
    %1824 = vmatpush2.bf16.msra.mxu0 0
    %1825 = vmatprep.subr.bf16.mxu0 0
    %1826 = vmatpush2.bf16.msra.mxu0 0
    %1827 = vmatprep.subr.bf16.mxu0 0
    %1828 = vmatpush2.bf16.msra.mxu0 0
    %1829 = vmatprep.mubr.bf16.mxu0 0
    %1830 = vmatmul.mubr.bf16.gmra.mxu0 %v143
    %v1831 = vpop.f32.mrf.mxu0
    %v1832 = vadd.f32 %v1791, %v1831
    %v1833 = vpop.f32.mrf.mxu0
    %v1834 = vadd.f32 %v1793, %v1833
    %v1835 = vpop.f32.mrf.mxu0
    %v1836 = vpop.f32.mrf.mxu0
    %1837 = vdwg.mxu0
    %v1838 = vmax.f32 %v1668, 0.0
    %v1839 = vmax.f32 %v1670, 0.0
    %v1840 = vmax.f32 %v1832, 0.0
    %v1841 = vmax.f32 %v1834, 0.0
    %v1842 = vpack.c.bf16 %v1838, %v1838
    %v1843 = vpack.c.bf16 %v1839, %v1839
    %v1844 = vpack.c.bf16 %v1840, %v1840
    %v1845 = vpack.c.bf16 %v1841, %v1841
    %v1846 = vld [vmem:[#allocation8] sm:$0xff]
    %v1847 = vld [vmem:[#allocation8 + $0x8] sm:$0xff]
    %v1848 = vld [vmem:[#allocation8 + $0x10] sm:$0xff]
    %v1849 = vld [vmem:[#allocation8 + $0x18] sm:$0xff]
    %v1850 = vld [vmem:[#allocation8 + $0x20] sm:$0xff]
    %v1851 = vld [vmem:[#allocation8 + $0x28] sm:$0xff]
    %v1852 = vld [vmem:[#allocation8 + $0x30] sm:$0xff]
    %v1853 = vld [vmem:[#allocation8 + $0x38] sm:$0xff]
    %v1854 = vld [vmem:[#allocation8 + $0x40] sm:$0xff]
    %v1855 = vld [vmem:[#allocation8 + $0x48] sm:$0xff]
    %v1856 = vld [vmem:[#allocation8 + $0x50] sm:$0xff]
    %v1857 = vld [vmem:[#allocation8 + $0x58] sm:$0xff]
    %v1858 = vld [vmem:[#allocation8 + $0x60] sm:$0xff]
    %v1859 = vld [vmem:[#allocation8 + $0x68] sm:$0xff]
    %v1860 = vld [vmem:[#allocation8 + $0x70] sm:$0xff]
    %v1861 = vld [vmem:[#allocation8 + $0x78] sm:$0xff]
    %v1862 = vld [vmem:[#allocation8 + $0x80] sm:$0xff]
    %v1863 = vld [vmem:[#allocation8 + $0x88] sm:$0xff]
    %v1864 = vld [vmem:[#allocation8 + $0x90] sm:$0xff]
    %v1865 = vld [vmem:[#allocation8 + $0x98] sm:$0xff]
    %v1866 = vld [vmem:[#allocation8 + $0xa0] sm:$0xff]
    %v1867 = vld [vmem:[#allocation8 + $0xa8] sm:$0xff]
    %v1868 = vld [vmem:[#allocation8 + $0xb0] sm:$0xff]
    %v1869 = vld [vmem:[#allocation8 + $0xb8] sm:$0xff]
    %v1870 = vld [vmem:[#allocation8 + $0xc0] sm:$0xff]
    %v1871 = vld [vmem:[#allocation8 + $0xc8] sm:$0xff]
    %v1872 = vld [vmem:[#allocation8 + $0xd0] sm:$0xff]
    %v1873 = vld [vmem:[#allocation8 + $0xd8] sm:$0xff]
    %v1874 = vld [vmem:[#allocation8 + $0xe0] sm:$0xff]
    %v1875 = vld [vmem:[#allocation8 + $0xe8] sm:$0xff]
    %v1876 = vld [vmem:[#allocation8 + $0xf0] sm:$0xff]
    %v1877 = vld [vmem:[#allocation8 + $0xf8] sm:$0xff]
    %v1878 = vld [vmem:[#allocation8 + $0x100] sm:$0xff]
    %v1879 = vld [vmem:[#allocation8 + $0x108] sm:$0xff]
    %v1880 = vld [vmem:[#allocation8 + $0x110] sm:$0xff]
    %v1881 = vld [vmem:[#allocation8 + $0x118] sm:$0xff]
    %v1882 = vld [vmem:[#allocation8 + $0x120] sm:$0xff]
    %v1883 = vld [vmem:[#allocation8 + $0x128] sm:$0xff]
    %v1884 = vld [vmem:[#allocation8 + $0x130] sm:$0xff]
    %v1885 = vld [vmem:[#allocation8 + $0x138] sm:$0xff]
    %v1886 = vld [vmem:[#allocation8 + $0x140] sm:$0xff]
    %v1887 = vld [vmem:[#allocation8 + $0x148] sm:$0xff]
    %v1888 = vld [vmem:[#allocation8 + $0x150] sm:$0xff]
    %v1889 = vld [vmem:[#allocation8 + $0x158] sm:$0xff]
    %v1890 = vld [vmem:[#allocation8 + $0x160] sm:$0xff]
    %v1891 = vld [vmem:[#allocation8 + $0x168] sm:$0xff]
    %v1892 = vld [vmem:[#allocation8 + $0x170] sm:$0xff]
    %v1893 = vld [vmem:[#allocation8 + $0x178] sm:$0xff]
    %v1894 = vld [vmem:[#allocation8 + $0x180] sm:$0xff]
    %v1895 = vld [vmem:[#allocation8 + $0x188] sm:$0xff]
    %v1896 = vld [vmem:[#allocation8 + $0x190] sm:$0xff]
    %v1897 = vld [vmem:[#allocation8 + $0x198] sm:$0xff]
    %v1898 = vld [vmem:[#allocation8 + $0x1a0] sm:$0xff]
    %v1899 = vld [vmem:[#allocation8 + $0x1a8] sm:$0xff]
    %v1900 = vld [vmem:[#allocation8 + $0x1b0] sm:$0xff]
    %v1901 = vld [vmem:[#allocation8 + $0x1b8] sm:$0xff]
    %v1902 = vld [vmem:[#allocation8 + $0x1c0] sm:$0xff]
    %v1903 = vld [vmem:[#allocation8 + $0x1c8] sm:$0xff]
    %v1904 = vld [vmem:[#allocation8 + $0x1d0] sm:$0xff]
    %v1905 = vld [vmem:[#allocation8 + $0x1d8] sm:$0xff]
    %v1906 = vld [vmem:[#allocation8 + $0x1e0] sm:$0xff]
    %v1907 = vld [vmem:[#allocation8 + $0x1e8] sm:$0xff]
    %v1908 = vld [vmem:[#allocation8 + $0x1f0] sm:$0xff]
    %v1909 = vld [vmem:[#allocation8 + $0x1f8] sm:$0xff]
    %v1910 = vld [vmem:[%s5] sm:$0x3]
    %v1912 = vlaneseq
    %v1913 = vshrl.u32 %v1912, 7
    %v1914 = vsub.s32 0, %v1913
    %v1915 = vrot.slane %v1910, %v1914
    %v1916 = vlaneseq
    %v1917 = vshrl.u32 %v1916, 7
    %v1918 = vsub.s32 1, %v1917
    %v1919 = vrot.slane %v1910, %v1918
    %v1986 = vunpack.c.l.b16 %v1846
    %v1987 = vunpack.c.h.b16 %v1846
    %v1988 = vunpack.c.l.b16 %v1847
    %v1989 = vunpack.c.h.b16 %v1847
    %v1990 = vunpack.c.l.b16 %v1848
    %v1991 = vunpack.c.h.b16 %v1848
    %v1992 = vunpack.c.l.b16 %v1849
    %v1993 = vunpack.c.h.b16 %v1849
    %v1994 = vunpack.c.l.b16 %v1850
    %v1995 = vunpack.c.h.b16 %v1850
    %v1996 = vunpack.c.l.b16 %v1851
    %v1997 = vunpack.c.h.b16 %v1851
    %v1998 = vunpack.c.l.b16 %v1852
    %v1999 = vunpack.c.h.b16 %v1852
    %v2000 = vunpack.c.l.b16 %v1853
    %v2001 = vunpack.c.h.b16 %v1853
    %v2002 = vunpack.c.l.b16 %v1854
    %v2003 = vunpack.c.h.b16 %v1854
    %v2004 = vunpack.c.l.b16 %v1855
    %v2005 = vunpack.c.h.b16 %v1855
    %v2006 = vunpack.c.l.b16 %v1856
    %v2007 = vunpack.c.h.b16 %v1856
    %v2008 = vunpack.c.l.b16 %v1857
    %v2009 = vunpack.c.h.b16 %v1857
    %v2010 = vunpack.c.l.b16 %v1858
    %v2011 = vunpack.c.h.b16 %v1858
    %v2012 = vunpack.c.l.b16 %v1859
    %v2013 = vunpack.c.h.b16 %v1859
    %v2014 = vunpack.c.l.b16 %v1860
    %v2015 = vunpack.c.h.b16 %v1860
    %v2016 = vunpack.c.l.b16 %v1861
    %v2017 = vunpack.c.h.b16 %v1861
    %v2018 = vunpack.c.l.b16 %v1862
    %v2019 = vunpack.c.h.b16 %v1862
    %v2020 = vunpack.c.l.b16 %v1863
    %v2021 = vunpack.c.h.b16 %v1863
    %v2022 = vunpack.c.l.b16 %v1864
    %v2023 = vunpack.c.h.b16 %v1864
    %v2024 = vunpack.c.l.b16 %v1865
    %v2025 = vunpack.c.h.b16 %v1865
    %v2026 = vunpack.c.l.b16 %v1866
    %v2027 = vunpack.c.h.b16 %v1866
    %v2028 = vunpack.c.l.b16 %v1867
    %v2029 = vunpack.c.h.b16 %v1867
    %v2030 = vunpack.c.l.b16 %v1868
    %v2031 = vunpack.c.h.b16 %v1868
    %v2032 = vunpack.c.l.b16 %v1869
    %v2033 = vunpack.c.h.b16 %v1869
    %v2034 = vunpack.c.l.b16 %v1870
    %v2035 = vunpack.c.h.b16 %v1870
    %v2036 = vunpack.c.l.b16 %v1871
    %v2037 = vunpack.c.h.b16 %v1871
    %v2038 = vunpack.c.l.b16 %v1872
    %v2039 = vunpack.c.h.b16 %v1872
    %v2040 = vunpack.c.l.b16 %v1873
    %v2041 = vunpack.c.h.b16 %v1873
    %v2042 = vunpack.c.l.b16 %v1874
    %v2043 = vunpack.c.h.b16 %v1874
    %v2044 = vunpack.c.l.b16 %v1875
    %v2045 = vunpack.c.h.b16 %v1875
    %v2046 = vunpack.c.l.b16 %v1876
    %v2047 = vunpack.c.h.b16 %v1876
    %v2048 = vunpack.c.l.b16 %v1877
    %v2049 = vunpack.c.h.b16 %v1877
    %v2050 = vunpack.c.l.b16 %v1878
    %v2051 = vunpack.c.h.b16 %v1878
    %v2052 = vunpack.c.l.b16 %v1879
    %v2053 = vunpack.c.h.b16 %v1879
    %v2054 = vunpack.c.l.b16 %v1880
    %v2055 = vunpack.c.h.b16 %v1880
    %v2056 = vunpack.c.l.b16 %v1881
    %v2057 = vunpack.c.h.b16 %v1881
    %v2058 = vunpack.c.l.b16 %v1882
    %v2059 = vunpack.c.h.b16 %v1882
    %v2060 = vunpack.c.l.b16 %v1883
    %v2061 = vunpack.c.h.b16 %v1883
    %v2062 = vunpack.c.l.b16 %v1884
    %v2063 = vunpack.c.h.b16 %v1884
    %v2064 = vunpack.c.l.b16 %v1885
    %v2065 = vunpack.c.h.b16 %v1885
    %v2066 = vunpack.c.l.b16 %v1886
    %v2067 = vunpack.c.h.b16 %v1886
    %v2068 = vunpack.c.l.b16 %v1887
    %v2069 = vunpack.c.h.b16 %v1887
    %v2070 = vunpack.c.l.b16 %v1888
    %v2071 = vunpack.c.h.b16 %v1888
    %v2072 = vunpack.c.l.b16 %v1889
    %v2073 = vunpack.c.h.b16 %v1889
    %v2074 = vunpack.c.l.b16 %v1890
    %v2075 = vunpack.c.h.b16 %v1890
    %v2076 = vunpack.c.l.b16 %v1891
    %v2077 = vunpack.c.h.b16 %v1891
    %v2078 = vunpack.c.l.b16 %v1892
    %v2079 = vunpack.c.h.b16 %v1892
    %v2080 = vunpack.c.l.b16 %v1893
    %v2081 = vunpack.c.h.b16 %v1893
    %v2082 = vunpack.c.l.b16 %v1894
    %v2083 = vunpack.c.h.b16 %v1894
    %v2084 = vunpack.c.l.b16 %v1895
    %v2085 = vunpack.c.h.b16 %v1895
    %v2086 = vunpack.c.l.b16 %v1896
    %v2087 = vunpack.c.h.b16 %v1896
    %v2088 = vunpack.c.l.b16 %v1897
    %v2089 = vunpack.c.h.b16 %v1897
    %v2090 = vunpack.c.l.b16 %v1898
    %v2091 = vunpack.c.h.b16 %v1898
    %v2092 = vunpack.c.l.b16 %v1899
    %v2093 = vunpack.c.h.b16 %v1899
    %v2094 = vunpack.c.l.b16 %v1900
    %v2095 = vunpack.c.h.b16 %v1900
    %v2096 = vunpack.c.l.b16 %v1901
    %v2097 = vunpack.c.h.b16 %v1901
    %v2098 = vunpack.c.l.b16 %v1902
    %v2099 = vunpack.c.h.b16 %v1902
    %v2100 = vunpack.c.l.b16 %v1903
    %v2101 = vunpack.c.h.b16 %v1903
    %v2102 = vunpack.c.l.b16 %v1904
    %v2103 = vunpack.c.h.b16 %v1904
    %v2104 = vunpack.c.l.b16 %v1905
    %v2105 = vunpack.c.h.b16 %v1905
    %v2106 = vunpack.c.l.b16 %v1906
    %v2107 = vunpack.c.h.b16 %v1906
    %v2108 = vunpack.c.l.b16 %v1907
    %v2109 = vunpack.c.h.b16 %v1907
    %v2110 = vunpack.c.l.b16 %v1908
    %v2111 = vunpack.c.h.b16 %v1908
    %v2112 = vunpack.c.l.b16 %v1909
    %v2113 = vunpack.c.h.b16 %v1909
    %v2114 = vpack.c.b16 %v1988, %v1986
    %v2115 = vpack.c.b16 %v1989, %v1987
    %v2116 = vpack.c.b16 %v1992, %v1990
    %v2117 = vpack.c.b16 %v1993, %v1991
    %v2118 = vpack.c.b16 %v1996, %v1994
    %v2119 = vpack.c.b16 %v1997, %v1995
    %v2120 = vpack.c.b16 %v2000, %v1998
    %v2121 = vpack.c.b16 %v2001, %v1999
    %v2122 = vpack.c.b16 %v2004, %v2002
    %v2123 = vpack.c.b16 %v2005, %v2003
    %v2124 = vpack.c.b16 %v2008, %v2006
    %v2125 = vpack.c.b16 %v2009, %v2007
    %v2126 = vpack.c.b16 %v2012, %v2010
    %v2127 = vpack.c.b16 %v2013, %v2011
    %v2128 = vpack.c.b16 %v2016, %v2014
    %v2129 = vpack.c.b16 %v2017, %v2015
    %v2130 = vpack.c.b16 %v2020, %v2018
    %v2131 = vpack.c.b16 %v2021, %v2019
    %v2132 = vpack.c.b16 %v2024, %v2022
    %v2133 = vpack.c.b16 %v2025, %v2023
    %v2134 = vpack.c.b16 %v2028, %v2026
    %v2135 = vpack.c.b16 %v2029, %v2027
    %v2136 = vpack.c.b16 %v2032, %v2030
    %v2137 = vpack.c.b16 %v2033, %v2031
    %v2138 = vpack.c.b16 %v2036, %v2034
    %v2139 = vpack.c.b16 %v2037, %v2035
    %v2140 = vpack.c.b16 %v2040, %v2038
    %v2141 = vpack.c.b16 %v2041, %v2039
    %v2142 = vpack.c.b16 %v2044, %v2042
    %v2143 = vpack.c.b16 %v2045, %v2043
    %v2144 = vpack.c.b16 %v2048, %v2046
    %v2145 = vpack.c.b16 %v2049, %v2047
    %v2146 = vpack.c.b16 %v2052, %v2050
    %v2147 = vpack.c.b16 %v2053, %v2051
    %v2148 = vpack.c.b16 %v2056, %v2054
    %v2149 = vpack.c.b16 %v2057, %v2055
    %v2150 = vpack.c.b16 %v2060, %v2058
    %v2151 = vpack.c.b16 %v2061, %v2059
    %v2152 = vpack.c.b16 %v2064, %v2062
    %v2153 = vpack.c.b16 %v2065, %v2063
    %v2154 = vpack.c.b16 %v2068, %v2066
    %v2155 = vpack.c.b16 %v2069, %v2067
    %v2156 = vpack.c.b16 %v2072, %v2070
    %v2157 = vpack.c.b16 %v2073, %v2071
    %v2158 = vpack.c.b16 %v2076, %v2074
    %v2159 = vpack.c.b16 %v2077, %v2075
    %v2160 = vpack.c.b16 %v2080, %v2078
    %v2161 = vpack.c.b16 %v2081, %v2079
    %v2162 = vpack.c.b16 %v2084, %v2082
    %v2163 = vpack.c.b16 %v2085, %v2083
    %v2164 = vpack.c.b16 %v2088, %v2086
    %v2165 = vpack.c.b16 %v2089, %v2087
    %v2166 = vpack.c.b16 %v2092, %v2090
    %v2167 = vpack.c.b16 %v2093, %v2091
    %v2168 = vpack.c.b16 %v2096, %v2094
    %v2169 = vpack.c.b16 %v2097, %v2095
    %v2170 = vpack.c.b16 %v2100, %v2098
    %v2171 = vpack.c.b16 %v2101, %v2099
    %v2172 = vpack.c.b16 %v2104, %v2102
    %v2173 = vpack.c.b16 %v2105, %v2103
    %v2174 = vpack.c.b16 %v2108, %v2106
    %v2175 = vpack.c.b16 %v2109, %v2107
    %v2176 = vpack.c.b16 %v2112, %v2110
    %v2177 = vpack.c.b16 %v2113, %v2111
    %2242 = vmatprep.subr.bf16.mxu0 %v2129
    %2243 = vmatpush1.bf16.msra.mxu0 %v2128
    %2244 = vmatprep.subr.bf16.mxu0 %v2127
    %2245 = vmatpush1.bf16.msra.mxu0 %v2126
    %2246 = vmatprep.subr.bf16.mxu0 %v2125
    %2247 = vmatpush1.bf16.msra.mxu0 %v2124
    %2248 = vmatprep.subr.bf16.mxu0 %v2123
    %2249 = vmatpush1.bf16.msra.mxu0 %v2122
    %2250 = vmatprep.subr.bf16.mxu0 %v2121
    %2251 = vmatpush1.bf16.msra.mxu0 %v2120
    %2252 = vmatprep.subr.bf16.mxu0 %v2119
    %2253 = vmatpush1.bf16.msra.mxu0 %v2118
    %2254 = vmatprep.subr.bf16.mxu0 %v2117
    %2255 = vmatpush1.bf16.msra.mxu0 %v2116
    %2256 = vmatprep.subr.bf16.mxu0 %v2115
    %2257 = vmatpush1.bf16.msra.mxu0 %v2114
    %2258 = vmatprep.subr.bf16.mxu0 %v2145
    %2259 = vmatpush2.bf16.msra.mxu0 %v2144
    %2260 = vmatprep.subr.bf16.mxu0 %v2143
    %2261 = vmatpush2.bf16.msra.mxu0 %v2142
    %2262 = vmatprep.subr.bf16.mxu0 %v2141
    %2263 = vmatpush2.bf16.msra.mxu0 %v2140
    %2264 = vmatprep.subr.bf16.mxu0 %v2139
    %2265 = vmatpush2.bf16.msra.mxu0 %v2138
    %2266 = vmatprep.subr.bf16.mxu0 %v2137
    %2267 = vmatpush2.bf16.msra.mxu0 %v2136
    %2268 = vmatprep.subr.bf16.mxu0 %v2135
    %2269 = vmatpush2.bf16.msra.mxu0 %v2134
    %2270 = vmatprep.subr.bf16.mxu0 %v2133
    %2271 = vmatpush2.bf16.msra.mxu0 %v2132
    %2272 = vmatprep.subr.bf16.mxu0 %v2131
    %2273 = vmatpush2.bf16.msra.mxu0 %v2130
    %2274 = vmatprep.mubr.bf16.mxu0 %v1843
    %2275 = vmatmul.mubr.bf16.gmra.mxu0 %v1842
    %v2276 = vpop.f32.mrf.mxu0
    %v2277 = vadd.f32 %v1915, %v2276
    %v2278 = vpop.f32.mrf.mxu0
    %v2279 = vadd.f32 %v1919, %v2278
    %v2280 = vpop.f32.mrf.mxu0
    %v2281 = vpop.f32.mrf.mxu0
    %2282 = vdwg.mxu0
    %2283 = vmatprep.subr.bf16.mxu0 %v2161
    %2284 = vmatpush1.bf16.msra.mxu0 %v2160
    %2285 = vmatprep.subr.bf16.mxu0 %v2159
    %2286 = vmatpush1.bf16.msra.mxu0 %v2158
    %2287 = vmatprep.subr.bf16.mxu0 %v2157
    %2288 = vmatpush1.bf16.msra.mxu0 %v2156
    %2289 = vmatprep.subr.bf16.mxu0 %v2155
    %2290 = vmatpush1.bf16.msra.mxu0 %v2154
    %2291 = vmatprep.subr.bf16.mxu0 %v2153
    %2292 = vmatpush1.bf16.msra.mxu0 %v2152
    %2293 = vmatprep.subr.bf16.mxu0 %v2151
    %2294 = vmatpush1.bf16.msra.mxu0 %v2150
    %2295 = vmatprep.subr.bf16.mxu0 %v2149
    %2296 = vmatpush1.bf16.msra.mxu0 %v2148
    %2297 = vmatprep.subr.bf16.mxu0 %v2147
    %2298 = vmatpush1.bf16.msra.mxu0 %v2146
    %2299 = vmatprep.subr.bf16.mxu0 %v2177
    %2300 = vmatpush2.bf16.msra.mxu0 %v2176
    %2301 = vmatprep.subr.bf16.mxu0 %v2175
    %2302 = vmatpush2.bf16.msra.mxu0 %v2174
    %2303 = vmatprep.subr.bf16.mxu0 %v2173
    %2304 = vmatpush2.bf16.msra.mxu0 %v2172
    %2305 = vmatprep.subr.bf16.mxu0 %v2171
    %2306 = vmatpush2.bf16.msra.mxu0 %v2170
    %2307 = vmatprep.subr.bf16.mxu0 %v2169
    %2308 = vmatpush2.bf16.msra.mxu0 %v2168
    %2309 = vmatprep.subr.bf16.mxu0 %v2167
    %2310 = vmatpush2.bf16.msra.mxu0 %v2166
    %2311 = vmatprep.subr.bf16.mxu0 %v2165
    %2312 = vmatpush2.bf16.msra.mxu0 %v2164
    %2313 = vmatprep.subr.bf16.mxu0 %v2163
    %2314 = vmatpush2.bf16.msra.mxu0 %v2162
    %2315 = vmatprep.mubr.bf16.mxu0 %v1845
    %2316 = vmatmul.mubr.bf16.gmra.mxu0 %v1844
    %v2317 = vpop.f32.mrf.mxu0
    %v2318 = vadd.f32 %v2277, %v2317
    %v2319 = vpop.f32.mrf.mxu0
    %v2320 = vadd.f32 %v2279, %v2319
    %v2321 = vpop.f32.mrf.mxu0
    %v2322 = vpop.f32.mrf.mxu0
    %2323 = vdwg.mxu0
    %v2324 = vld [vmem:[#allocation5] sm:$0xff]
    %v2325 = vmul.f32 %v2320, 0.5
    %v2326 = vmul.f32 %v2325, 1.442695
    %v2327 = vpow.pop %v2326
    %v2328 = vmul.f32 %v2324, %v2327
    %v2329 = vadd.f32 %v2328, %v2318
    %v2330 = vpack.c.bf16 %v2329, %v2329
    %v2331 = vld [vmem:[#allocation10] sm:$0xff]
    %v2332 = vld [vmem:[#allocation10 + $0x8] sm:$0xff]
    %v2333 = vld [vmem:[#allocation10 + $0x10] sm:$0xff]
    %v2334 = vld [vmem:[#allocation10 + $0x18] sm:$0xff]
    %v2335 = vld [vmem:[#allocation10 + $0x20] sm:$0xff]
    %v2336 = vld [vmem:[#allocation10 + $0x28] sm:$0xff]
    %v2337 = vld [vmem:[#allocation10 + $0x30] sm:$0xff]
    %v2338 = vld [vmem:[#allocation10 + $0x38] sm:$0xff]
    %v2339 = vld [vmem:[#allocation10 + $0x40] sm:$0xff]
    %v2340 = vld [vmem:[#allocation10 + $0x48] sm:$0xff]
    %v2341 = vld [vmem:[#allocation10 + $0x50] sm:$0xff]
    %v2342 = vld [vmem:[#allocation10 + $0x58] sm:$0xff]
    %v2343 = vld [vmem:[#allocation10 + $0x60] sm:$0xff]
    %v2344 = vld [vmem:[#allocation10 + $0x68] sm:$0xff]
    %v2345 = vld [vmem:[#allocation10 + $0x70] sm:$0xff]
    %v2346 = vld [vmem:[#allocation10 + $0x78] sm:$0xff]
    %v2347 = vld [vmem:[#allocation10 + $0x80] sm:$0xff]
    %v2348 = vld [vmem:[#allocation10 + $0x88] sm:$0xff]
    %v2349 = vld [vmem:[#allocation10 + $0x90] sm:$0xff]
    %v2350 = vld [vmem:[#allocation10 + $0x98] sm:$0xff]
    %v2351 = vld [vmem:[#allocation10 + $0xa0] sm:$0xff]
    %v2352 = vld [vmem:[#allocation10 + $0xa8] sm:$0xff]
    %v2353 = vld [vmem:[#allocation10 + $0xb0] sm:$0xff]
    %v2354 = vld [vmem:[#allocation10 + $0xb8] sm:$0xff]
    %v2355 = vld [vmem:[#allocation10 + $0xc0] sm:$0xff]
    %v2356 = vld [vmem:[#allocation10 + $0xc8] sm:$0xff]
    %v2357 = vld [vmem:[#allocation10 + $0xd0] sm:$0xff]
    %v2358 = vld [vmem:[#allocation10 + $0xd8] sm:$0xff]
    %v2359 = vld [vmem:[#allocation10 + $0xe0] sm:$0xff]
    %v2360 = vld [vmem:[#allocation10 + $0xe8] sm:$0xff]
    %v2361 = vld [vmem:[#allocation10 + $0xf0] sm:$0xff]
    %v2362 = vld [vmem:[#allocation10 + $0xf8] sm:$0xff]
    %v2363 = vld [vmem:[#allocation11] sm:$0xf]
    %v2365 = vlaneseq
    %v2366 = vshrl.u32 %v2365, 7
    %v2367 = vsub.s32 0, %v2366
    %v2368 = vrot.slane %v2363, %v2367
    %v2369 = vlaneseq
    %v2370 = vshrl.u32 %v2369, 7
    %v2371 = vsub.s32 1, %v2370
    %v2372 = vrot.slane %v2363, %v2371
    %v2373 = vlaneseq
    %v2374 = vshrl.u32 %v2373, 7
    %v2375 = vsub.s32 2, %v2374
    %v2376 = vrot.slane %v2363, %v2375
    %v2377 = vlaneseq
    %v2378 = vshrl.u32 %v2377, 7
    %v2379 = vsub.s32 3, %v2378
    %v2380 = vrot.slane %v2363, %v2379
    %v2417 = vunpack.c.l.b16 %v2331
    %v2418 = vunpack.c.h.b16 %v2331
    %v2419 = vunpack.c.l.b16 %v2332
    %v2420 = vunpack.c.h.b16 %v2332
    %v2421 = vunpack.c.l.b16 %v2333
    %v2422 = vunpack.c.h.b16 %v2333
    %v2423 = vunpack.c.l.b16 %v2334
    %v2424 = vunpack.c.h.b16 %v2334
    %v2425 = vunpack.c.l.b16 %v2335
    %v2426 = vunpack.c.h.b16 %v2335
    %v2427 = vunpack.c.l.b16 %v2336
    %v2428 = vunpack.c.h.b16 %v2336
    %v2429 = vunpack.c.l.b16 %v2337
    %v2430 = vunpack.c.h.b16 %v2337
    %v2431 = vunpack.c.l.b16 %v2338
    %v2432 = vunpack.c.h.b16 %v2338
    %v2433 = vunpack.c.l.b16 %v2339
    %v2434 = vunpack.c.h.b16 %v2339
    %v2435 = vunpack.c.l.b16 %v2340
    %v2436 = vunpack.c.h.b16 %v2340
    %v2437 = vunpack.c.l.b16 %v2341
    %v2438 = vunpack.c.h.b16 %v2341
    %v2439 = vunpack.c.l.b16 %v2342
    %v2440 = vunpack.c.h.b16 %v2342
    %v2441 = vunpack.c.l.b16 %v2343
    %v2442 = vunpack.c.h.b16 %v2343
    %v2443 = vunpack.c.l.b16 %v2344
    %v2444 = vunpack.c.h.b16 %v2344
    %v2445 = vunpack.c.l.b16 %v2345
    %v2446 = vunpack.c.h.b16 %v2345
    %v2447 = vunpack.c.l.b16 %v2346
    %v2448 = vunpack.c.h.b16 %v2346
    %v2449 = vunpack.c.l.b16 %v2347
    %v2450 = vunpack.c.h.b16 %v2347
    %v2451 = vunpack.c.l.b16 %v2348
    %v2452 = vunpack.c.h.b16 %v2348
    %v2453 = vunpack.c.l.b16 %v2349
    %v2454 = vunpack.c.h.b16 %v2349
    %v2455 = vunpack.c.l.b16 %v2350
    %v2456 = vunpack.c.h.b16 %v2350
    %v2457 = vunpack.c.l.b16 %v2351
    %v2458 = vunpack.c.h.b16 %v2351
    %v2459 = vunpack.c.l.b16 %v2352
    %v2460 = vunpack.c.h.b16 %v2352
    %v2461 = vunpack.c.l.b16 %v2353
    %v2462 = vunpack.c.h.b16 %v2353
    %v2463 = vunpack.c.l.b16 %v2354
    %v2464 = vunpack.c.h.b16 %v2354
    %v2465 = vunpack.c.l.b16 %v2355
    %v2466 = vunpack.c.h.b16 %v2355
    %v2467 = vunpack.c.l.b16 %v2356
    %v2468 = vunpack.c.h.b16 %v2356
    %v2469 = vunpack.c.l.b16 %v2357
    %v2470 = vunpack.c.h.b16 %v2357
    %v2471 = vunpack.c.l.b16 %v2358
    %v2472 = vunpack.c.h.b16 %v2358
    %v2473 = vunpack.c.l.b16 %v2359
    %v2474 = vunpack.c.h.b16 %v2359
    %v2475 = vunpack.c.l.b16 %v2360
    %v2476 = vunpack.c.h.b16 %v2360
    %v2477 = vunpack.c.l.b16 %v2361
    %v2478 = vunpack.c.h.b16 %v2361
    %v2479 = vunpack.c.l.b16 %v2362
    %v2480 = vunpack.c.h.b16 %v2362
    %v2481 = vpack.c.b16 %v2421, %v2417
    %v2482 = vpack.c.b16 %v2422, %v2418
    %v2483 = vpack.c.b16 %v2423, %v2419
    %v2484 = vpack.c.b16 %v2424, %v2420
    %v2485 = vpack.c.b16 %v2429, %v2425
    %v2486 = vpack.c.b16 %v2430, %v2426
    %v2487 = vpack.c.b16 %v2431, %v2427
    %v2488 = vpack.c.b16 %v2432, %v2428
    %v2489 = vpack.c.b16 %v2437, %v2433
    %v2490 = vpack.c.b16 %v2438, %v2434
    %v2491 = vpack.c.b16 %v2439, %v2435
    %v2492 = vpack.c.b16 %v2440, %v2436
    %v2493 = vpack.c.b16 %v2445, %v2441
    %v2494 = vpack.c.b16 %v2446, %v2442
    %v2495 = vpack.c.b16 %v2447, %v2443
    %v2496 = vpack.c.b16 %v2448, %v2444
    %v2497 = vpack.c.b16 %v2453, %v2449
    %v2498 = vpack.c.b16 %v2454, %v2450
    %v2499 = vpack.c.b16 %v2455, %v2451
    %v2500 = vpack.c.b16 %v2456, %v2452
    %v2501 = vpack.c.b16 %v2461, %v2457
    %v2502 = vpack.c.b16 %v2462, %v2458
    %v2503 = vpack.c.b16 %v2463, %v2459
    %v2504 = vpack.c.b16 %v2464, %v2460
    %v2505 = vpack.c.b16 %v2469, %v2465
    %v2506 = vpack.c.b16 %v2470, %v2466
    %v2507 = vpack.c.b16 %v2471, %v2467
    %v2508 = vpack.c.b16 %v2472, %v2468
    %v2509 = vpack.c.b16 %v2477, %v2473
    %v2510 = vpack.c.b16 %v2478, %v2474
    %v2511 = vpack.c.b16 %v2479, %v2475
    %v2512 = vpack.c.b16 %v2480, %v2476
    %2545 = vmatprep.subr.bf16.mxu0 %v2510
    %2546 = vmatpush1.bf16.msra.mxu0 %v2509
    %2547 = vmatprep.subr.bf16.mxu0 %v2506
    %2548 = vmatpush1.bf16.msra.mxu0 %v2505
    %2549 = vmatprep.subr.bf16.mxu0 %v2502
    %2550 = vmatpush1.bf16.msra.mxu0 %v2501
    %2551 = vmatprep.subr.bf16.mxu0 %v2498
    %2552 = vmatpush1.bf16.msra.mxu0 %v2497
    %2553 = vmatprep.subr.bf16.mxu0 %v2494
    %2554 = vmatpush1.bf16.msra.mxu0 %v2493
    %2555 = vmatprep.subr.bf16.mxu0 %v2490
    %2556 = vmatpush1.bf16.msra.mxu0 %v2489
    %2557 = vmatprep.subr.bf16.mxu0 %v2486
    %2558 = vmatpush1.bf16.msra.mxu0 %v2485
    %2559 = vmatprep.subr.bf16.mxu0 %v2482
    %2560 = vmatpush1.bf16.msra.mxu0 %v2481
    %2561 = vmatprep.subr.bf16.mxu0 0
    %2562 = vmatpush2.bf16.msra.mxu0 0
    %2563 = vmatprep.subr.bf16.mxu0 0
    %2564 = vmatpush2.bf16.msra.mxu0 0
    %2565 = vmatprep.subr.bf16.mxu0 0
    %2566 = vmatpush2.bf16.msra.mxu0 0
    %2567 = vmatprep.subr.bf16.mxu0 0
    %2568 = vmatpush2.bf16.msra.mxu0 0
    %2569 = vmatprep.subr.bf16.mxu0 0
    %2570 = vmatpush2.bf16.msra.mxu0 0
    %2571 = vmatprep.subr.bf16.mxu0 0
    %2572 = vmatpush2.bf16.msra.mxu0 0
    %2573 = vmatprep.subr.bf16.mxu0 0
    %2574 = vmatpush2.bf16.msra.mxu0 0
    %2575 = vmatprep.subr.bf16.mxu0 0
    %2576 = vmatpush2.bf16.msra.mxu0 0
    %2577 = vmatprep.mubr.bf16.mxu0 0
    %2578 = vmatmul.mubr.bf16.gmra.mxu0 %v2330
    %v2579 = vpop.f32.mrf.mxu0
    %v2580 = vadd.f32 %v2368, %v2579
    %v2581 = vpop.f32.mrf.mxu0
    %v2582 = vadd.f32 %v2372, %v2581
    %v2583 = vpop.f32.mrf.mxu0
    %v2584 = vpop.f32.mrf.mxu0
    %2585 = vdwg.mxu0
    %2586 = vmatprep.subr.bf16.mxu0 %v2512
    %2587 = vmatpush1.bf16.msra.mxu0 %v2511
    %2588 = vmatprep.subr.bf16.mxu0 %v2508
    %2589 = vmatpush1.bf16.msra.mxu0 %v2507
    %2590 = vmatprep.subr.bf16.mxu0 %v2504
    %2591 = vmatpush1.bf16.msra.mxu0 %v2503
    %2592 = vmatprep.subr.bf16.mxu0 %v2500
    %2593 = vmatpush1.bf16.msra.mxu0 %v2499
    %2594 = vmatprep.subr.bf16.mxu0 %v2496
    %2595 = vmatpush1.bf16.msra.mxu0 %v2495
    %2596 = vmatprep.subr.bf16.mxu0 %v2492
    %2597 = vmatpush1.bf16.msra.mxu0 %v2491
    %2598 = vmatprep.subr.bf16.mxu0 %v2488
    %2599 = vmatpush1.bf16.msra.mxu0 %v2487
    %2600 = vmatprep.subr.bf16.mxu0 %v2484
    %2601 = vmatpush1.bf16.msra.mxu0 %v2483
    %2602 = vmatprep.subr.bf16.mxu0 0
    %2603 = vmatpush2.bf16.msra.mxu0 0
    %2604 = vmatprep.subr.bf16.mxu0 0
    %2605 = vmatpush2.bf16.msra.mxu0 0
    %2606 = vmatprep.subr.bf16.mxu0 0
    %2607 = vmatpush2.bf16.msra.mxu0 0
    %2608 = vmatprep.subr.bf16.mxu0 0
    %2609 = vmatpush2.bf16.msra.mxu0 0
    %2610 = vmatprep.subr.bf16.mxu0 0
    %2611 = vmatpush2.bf16.msra.mxu0 0
    %2612 = vmatprep.subr.bf16.mxu0 0
    %2613 = vmatpush2.bf16.msra.mxu0 0
    %2614 = vmatprep.subr.bf16.mxu0 0
    %2615 = vmatpush2.bf16.msra.mxu0 0
    %2616 = vmatprep.subr.bf16.mxu0 0
    %2617 = vmatpush2.bf16.msra.mxu0 0
    %2618 = vmatprep.mubr.bf16.mxu0 0
    %2619 = vmatmul.mubr.bf16.gmra.mxu0 %v2330
    %v2620 = vpop.f32.mrf.mxu0
    %v2621 = vadd.f32 %v2376, %v2620
    %v2622 = vpop.f32.mrf.mxu0
    %v2623 = vadd.f32 %v2380, %v2622
    %v2624 = vpop.f32.mrf.mxu0
    %v2625 = vpop.f32.mrf.mxu0
    %2626 = vdwg.mxu0
    %v2627 = vmax.f32 %v2580, 0.0
    %v2628 = vmax.f32 %v2582, 0.0
    %v2629 = vmax.f32 %v2621, 0.0
    %v2630 = vmax.f32 %v2623, 0.0
    %v2631 = vpack.c.bf16 %v2627, %v2627
    %v2632 = vpack.c.bf16 %v2628, %v2628
    %v2633 = vpack.c.bf16 %v2629, %v2629
    %v2634 = vpack.c.bf16 %v2630, %v2630
    %v2635 = vld [vmem:[#allocation13] sm:$0xff]
    %v2636 = vld [vmem:[#allocation13 + $0x8] sm:$0xff]
    %v2637 = vld [vmem:[#allocation13 + $0x10] sm:$0xff]
    %v2638 = vld [vmem:[#allocation13 + $0x18] sm:$0xf]
    %v2639 = vld [vmem:[#allocation13 + $0x1c] sm:$0xff]
    %v2640 = vld [vmem:[#allocation13 + $0x24] sm:$0xff]
    %v2641 = vld [vmem:[#allocation13 + $0x2c] sm:$0xff]
    %v2642 = vld [vmem:[#allocation13 + $0x34] sm:$0xf]
    %v2643 = vld [vmem:[#allocation13 + $0x38] sm:$0xff]
    %v2644 = vld [vmem:[#allocation13 + $0x40] sm:$0xff]
    %v2645 = vld [vmem:[#allocation13 + $0x48] sm:$0xff]
    %v2646 = vld [vmem:[#allocation13 + $0x50] sm:$0xf]
    %v2647 = vld [vmem:[#allocation13 + $0x54] sm:$0xff]
    %v2648 = vld [vmem:[#allocation13 + $0x5c] sm:$0xff]
    %v2649 = vld [vmem:[#allocation13 + $0x64] sm:$0xff]
    %v2650 = vld [vmem:[#allocation13 + $0x6c] sm:$0xf]
    %v2651 = vld [vmem:[#allocation13 + $0x70] sm:$0xff]
    %v2652 = vld [vmem:[#allocation13 + $0x78] sm:$0xff]
    %v2653 = vld [vmem:[#allocation13 + $0x80] sm:$0xff]
    %v2654 = vld [vmem:[#allocation13 + $0x88] sm:$0xf]
    %v2655 = vld [vmem:[#allocation13 + $0x8c] sm:$0xff]
    %v2656 = vld [vmem:[#allocation13 + $0x94] sm:$0xff]
    %v2657 = vld [vmem:[#allocation13 + $0x9c] sm:$0xff]
    %v2658 = vld [vmem:[#allocation13 + $0xa4] sm:$0xf]
    %v2659 = vld [vmem:[#allocation13 + $0xa8] sm:$0xff]
    %v2660 = vld [vmem:[#allocation13 + $0xb0] sm:$0xff]
    %v2661 = vld [vmem:[#allocation13 + $0xb8] sm:$0xff]
    %v2662 = vld [vmem:[#allocation13 + $0xc0] sm:$0xf]
    %v2663 = vld [vmem:[#allocation13 + $0xc4] sm:$0xff]
    %v2664 = vld [vmem:[#allocation13 + $0xcc] sm:$0xff]
    %v2665 = vld [vmem:[#allocation13 + $0xd4] sm:$0xff]
    %v2666 = vld [vmem:[#allocation13 + $0xdc] sm:$0xf]
    %v2667 = vld [vmem:[#allocation13 + $0xe0] sm:$0xff]
    %v2668 = vld [vmem:[#allocation13 + $0xe8] sm:$0xff]
    %v2669 = vld [vmem:[#allocation13 + $0xf0] sm:$0xff]
    %v2670 = vld [vmem:[#allocation13 + $0xf8] sm:$0xf]
    %v2671 = vld [vmem:[#allocation13 + $0xfc] sm:$0xff]
    %v2672 = vld [vmem:[#allocation13 + $0x104] sm:$0xff]
    %v2673 = vld [vmem:[#allocation13 + $0x10c] sm:$0xff]
    %v2674 = vld [vmem:[#allocation13 + $0x114] sm:$0xf]
    %v2675 = vld [vmem:[#allocation13 + $0x118] sm:$0xff]
    %v2676 = vld [vmem:[#allocation13 + $0x120] sm:$0xff]
    %v2677 = vld [vmem:[#allocation13 + $0x128] sm:$0xff]
    %v2678 = vld [vmem:[#allocation13 + $0x130] sm:$0xf]
    %v2679 = vld [vmem:[#allocation13 + $0x134] sm:$0xff]
    %v2680 = vld [vmem:[#allocation13 + $0x13c] sm:$0xff]
    %v2681 = vld [vmem:[#allocation13 + $0x144] sm:$0xff]
    %v2682 = vld [vmem:[#allocation13 + $0x14c] sm:$0xf]
    %v2683 = vld [vmem:[#allocation13 + $0x150] sm:$0xff]
    %v2684 = vld [vmem:[#allocation13 + $0x158] sm:$0xff]
    %v2685 = vld [vmem:[#allocation13 + $0x160] sm:$0xff]
    %v2686 = vld [vmem:[#allocation13 + $0x168] sm:$0xf]
    %v2687 = vld [vmem:[#allocation13 + $0x16c] sm:$0xff]
    %v2688 = vld [vmem:[#allocation13 + $0x174] sm:$0xff]
    %v2689 = vld [vmem:[#allocation13 + $0x17c] sm:$0xff]
    %v2690 = vld [vmem:[#allocation13 + $0x184] sm:$0xf]
    %v2691 = vld [vmem:[#allocation13 + $0x188] sm:$0xff]
    %v2692 = vld [vmem:[#allocation13 + $0x190] sm:$0xff]
    %v2693 = vld [vmem:[#allocation13 + $0x198] sm:$0xff]
    %v2694 = vld [vmem:[#allocation13 + $0x1a0] sm:$0xf]
    %v2695 = vld [vmem:[#allocation13 + $0x1a4] sm:$0xff]
    %v2696 = vld [vmem:[#allocation13 + $0x1ac] sm:$0xff]
    %v2697 = vld [vmem:[#allocation13 + $0x1b4] sm:$0xff]
    %v2698 = vld [vmem:[#allocation13 + $0x1bc] sm:$0xf]
    %v2699 = vld [vmem:[#allocation13 + $0x1c0] sm:$0xff]
    %v2700 = vld [vmem:[#allocation13 + $0x1c8] sm:$0xff]
    %v2701 = vld [vmem:[#allocation13 + $0x1d0] sm:$0xff]
    %v2702 = vld [vmem:[#allocation13 + $0x1d8] sm:$0xf]
    %v2703 = vld [vmem:[#allocation13 + $0x1dc] sm:$0xff]
    %v2704 = vld [vmem:[#allocation13 + $0x1e4] sm:$0xff]
    %v2705 = vld [vmem:[#allocation13 + $0x1ec] sm:$0xff]
    %v2706 = vld [vmem:[#allocation13 + $0x1f4] sm:$0xf]
    %v2707 = vld [vmem:[#allocation13 + $0x1f8] sm:$0xff]
    %v2708 = vld [vmem:[#allocation13 + $0x200] sm:$0xff]
    %v2709 = vld [vmem:[#allocation13 + $0x208] sm:$0xff]
    %v2710 = vld [vmem:[#allocation13 + $0x210] sm:$0xf]
    %v2711 = vld [vmem:[#allocation13 + $0x214] sm:$0xff]
    %v2712 = vld [vmem:[#allocation13 + $0x21c] sm:$0xff]
    %v2713 = vld [vmem:[#allocation13 + $0x224] sm:$0xff]
    %v2714 = vld [vmem:[#allocation13 + $0x22c] sm:$0xf]
    %v2715 = vld [vmem:[#allocation13 + $0x230] sm:$0xff]
    %v2716 = vld [vmem:[#allocation13 + $0x238] sm:$0xff]
    %v2717 = vld [vmem:[#allocation13 + $0x240] sm:$0xff]
    %v2718 = vld [vmem:[#allocation13 + $0x248] sm:$0xf]
    %v2719 = vld [vmem:[#allocation13 + $0x24c] sm:$0xff]
    %v2720 = vld [vmem:[#allocation13 + $0x254] sm:$0xff]
    %v2721 = vld [vmem:[#allocation13 + $0x25c] sm:$0xff]
    %v2722 = vld [vmem:[#allocation13 + $0x264] sm:$0xf]
    %v2723 = vld [vmem:[#allocation13 + $0x268] sm:$0xff]
    %v2724 = vld [vmem:[#allocation13 + $0x270] sm:$0xff]
    %v2725 = vld [vmem:[#allocation13 + $0x278] sm:$0xff]
    %v2726 = vld [vmem:[#allocation13 + $0x280] sm:$0xf]
    %v2727 = vld [vmem:[#allocation13 + $0x284] sm:$0xff]
    %v2728 = vld [vmem:[#allocation13 + $0x28c] sm:$0xff]
    %v2729 = vld [vmem:[#allocation13 + $0x294] sm:$0xff]
    %v2730 = vld [vmem:[#allocation13 + $0x29c] sm:$0xf]
    %v2731 = vld [vmem:[#allocation13 + $0x2a0] sm:$0xff]
    %v2732 = vld [vmem:[#allocation13 + $0x2a8] sm:$0xff]
    %v2733 = vld [vmem:[#allocation13 + $0x2b0] sm:$0xff]
    %v2734 = vld [vmem:[#allocation13 + $0x2b8] sm:$0xf]
    %v2735 = vld [vmem:[#allocation13 + $0x2bc] sm:$0xff]
    %v2736 = vld [vmem:[#allocation13 + $0x2c4] sm:$0xff]
    %v2737 = vld [vmem:[#allocation13 + $0x2cc] sm:$0xff]
    %v2738 = vld [vmem:[#allocation13 + $0x2d4] sm:$0xf]
    %v2739 = vld [vmem:[#allocation13 + $0x2d8] sm:$0xff]
    %v2740 = vld [vmem:[#allocation13 + $0x2e0] sm:$0xff]
    %v2741 = vld [vmem:[#allocation13 + $0x2e8] sm:$0xff]
    %v2742 = vld [vmem:[#allocation13 + $0x2f0] sm:$0xf]
    %v2743 = vld [vmem:[#allocation13 + $0x2f4] sm:$0xff]
    %v2744 = vld [vmem:[#allocation13 + $0x2fc] sm:$0xff]
    %v2745 = vld [vmem:[#allocation13 + $0x304] sm:$0xff]
    %v2746 = vld [vmem:[#allocation13 + $0x30c] sm:$0xf]
    %v2747 = vld [vmem:[#allocation13 + $0x310] sm:$0xff]
    %v2748 = vld [vmem:[#allocation13 + $0x318] sm:$0xff]
    %v2749 = vld [vmem:[#allocation13 + $0x320] sm:$0xff]
    %v2750 = vld [vmem:[#allocation13 + $0x328] sm:$0xf]
    %v2751 = vld [vmem:[#allocation13 + $0x32c] sm:$0xff]
    %v2752 = vld [vmem:[#allocation13 + $0x334] sm:$0xff]
    %v2753 = vld [vmem:[#allocation13 + $0x33c] sm:$0xff]
    %v2754 = vld [vmem:[#allocation13 + $0x344] sm:$0xf]
    %v2755 = vld [vmem:[#allocation13 + $0x348] sm:$0xff]
    %v2756 = vld [vmem:[#allocation13 + $0x350] sm:$0xff]
    %v2757 = vld [vmem:[#allocation13 + $0x358] sm:$0xff]
    %v2758 = vld [vmem:[#allocation13 + $0x360] sm:$0xf]
    %v2759 = vld [vmem:[#allocation13 + $0x364] sm:$0xff]
    %v2760 = vld [vmem:[#allocation13 + $0x36c] sm:$0xff]
    %v2761 = vld [vmem:[#allocation13 + $0x374] sm:$0xff]
    %v2762 = vld [vmem:[#allocation13 + $0x37c] sm:$0xf]
    %v2763 = vld [vmem:[#allocation13 + $0x380] sm:$0xff]
    %v2764 = vld [vmem:[#allocation13 + $0x388] sm:$0xff]
    %v2765 = vld [vmem:[#allocation13 + $0x390] sm:$0xff]
    %v2766 = vld [vmem:[#allocation13 + $0x398] sm:$0xf]
    %v2767 = vld [vmem:[#allocation13 + $0x39c] sm:$0xff]
    %v2768 = vld [vmem:[#allocation13 + $0x3a4] sm:$0xff]
    %v2769 = vld [vmem:[#allocation13 + $0x3ac] sm:$0xff]
    %v2770 = vld [vmem:[#allocation13 + $0x3b4] sm:$0xf]
    %v2771 = vld [vmem:[#allocation13 + $0x3b8] sm:$0xff]
    %v2772 = vld [vmem:[#allocation13 + $0x3c0] sm:$0xff]
    %v2773 = vld [vmem:[#allocation13 + $0x3c8] sm:$0xff]
    %v2774 = vld [vmem:[#allocation13 + $0x3d0] sm:$0xf]
    %v2775 = vld [vmem:[#allocation13 + $0x3d4] sm:$0xff]
    %v2776 = vld [vmem:[#allocation13 + $0x3dc] sm:$0xff]
    %v2777 = vld [vmem:[#allocation13 + $0x3e4] sm:$0xff]
    %v2778 = vld [vmem:[#allocation13 + $0x3ec] sm:$0xf]
    %v2779 = vld [vmem:[#allocation13 + $0x3f0] sm:$0xff]
    %v2780 = vld [vmem:[#allocation13 + $0x3f8] sm:$0xff]
    %v2781 = vld [vmem:[#allocation13 + $0x400] sm:$0xff]
    %v2782 = vld [vmem:[#allocation13 + $0x408] sm:$0xf]
    %v2783 = vld [vmem:[#allocation13 + $0x40c] sm:$0xff]
    %v2784 = vld [vmem:[#allocation13 + $0x414] sm:$0xff]
    %v2785 = vld [vmem:[#allocation13 + $0x41c] sm:$0xff]
    %v2786 = vld [vmem:[#allocation13 + $0x424] sm:$0xf]
    %v2787 = vld [vmem:[#allocation13 + $0x428] sm:$0xff]
    %v2788 = vld [vmem:[#allocation13 + $0x430] sm:$0xff]
    %v2789 = vld [vmem:[#allocation13 + $0x438] sm:$0xff]
    %v2790 = vld [vmem:[#allocation13 + $0x440] sm:$0xf]
    %v2791 = vld [vmem:[#allocation13 + $0x444] sm:$0xff]
    %v2792 = vld [vmem:[#allocation13 + $0x44c] sm:$0xff]
    %v2793 = vld [vmem:[#allocation13 + $0x454] sm:$0xff]
    %v2794 = vld [vmem:[#allocation13 + $0x45c] sm:$0xf]
    %v2795 = vld [vmem:[#allocation13 + $0x460] sm:$0xff]
    %v2796 = vld [vmem:[#allocation13 + $0x468] sm:$0xff]
    %v2797 = vld [vmem:[#allocation13 + $0x470] sm:$0xff]
    %v2798 = vld [vmem:[#allocation13 + $0x478] sm:$0xf]
    %v2799 = vld [vmem:[#allocation13 + $0x47c] sm:$0xff]
    %v2800 = vld [vmem:[#allocation13 + $0x484] sm:$0xff]
    %v2801 = vld [vmem:[#allocation13 + $0x48c] sm:$0xff]
    %v2802 = vld [vmem:[#allocation13 + $0x494] sm:$0xf]
    %v2803 = vld [vmem:[#allocation13 + $0x498] sm:$0xff]
    %v2804 = vld [vmem:[#allocation13 + $0x4a0] sm:$0xff]
    %v2805 = vld [vmem:[#allocation13 + $0x4a8] sm:$0xff]
    %v2806 = vld [vmem:[#allocation13 + $0x4b0] sm:$0xf]
    %v2807 = vld [vmem:[#allocation13 + $0x4b4] sm:$0xff]
    %v2808 = vld [vmem:[#allocation13 + $0x4bc] sm:$0xff]
    %v2809 = vld [vmem:[#allocation13 + $0x4c4] sm:$0xff]
    %v2810 = vld [vmem:[#allocation13 + $0x4cc] sm:$0xf]
    %v2811 = vld [vmem:[#allocation13 + $0x4d0] sm:$0xff]
    %v2812 = vld [vmem:[#allocation13 + $0x4d8] sm:$0xff]
    %v2813 = vld [vmem:[#allocation13 + $0x4e0] sm:$0xff]
    %v2814 = vld [vmem:[#allocation13 + $0x4e8] sm:$0xf]
    %v2815 = vld [vmem:[#allocation13 + $0x4ec] sm:$0xff]
    %v2816 = vld [vmem:[#allocation13 + $0x4f4] sm:$0xff]
    %v2817 = vld [vmem:[#allocation13 + $0x4fc] sm:$0xff]
    %v2818 = vld [vmem:[#allocation13 + $0x504] sm:$0xf]
    %v2819 = vld [vmem:[#allocation13 + $0x508] sm:$0xff]
    %v2820 = vld [vmem:[#allocation13 + $0x510] sm:$0xff]
    %v2821 = vld [vmem:[#allocation13 + $0x518] sm:$0xff]
    %v2822 = vld [vmem:[#allocation13 + $0x520] sm:$0xf]
    %v2823 = vld [vmem:[#allocation13 + $0x524] sm:$0xff]
    %v2824 = vld [vmem:[#allocation13 + $0x52c] sm:$0xff]
    %v2825 = vld [vmem:[#allocation13 + $0x534] sm:$0xff]
    %v2826 = vld [vmem:[#allocation13 + $0x53c] sm:$0xf]
    %v2827 = vld [vmem:[#allocation13 + $0x540] sm:$0xff]
    %v2828 = vld [vmem:[#allocation13 + $0x548] sm:$0xff]
    %v2829 = vld [vmem:[#allocation13 + $0x550] sm:$0xff]
    %v2830 = vld [vmem:[#allocation13 + $0x558] sm:$0xf]
    %v2831 = vld [vmem:[#allocation13 + $0x55c] sm:$0xff]
    %v2832 = vld [vmem:[#allocation13 + $0x564] sm:$0xff]
    %v2833 = vld [vmem:[#allocation13 + $0x56c] sm:$0xff]
    %v2834 = vld [vmem:[#allocation13 + $0x574] sm:$0xf]
    %v2835 = vld [vmem:[#allocation13 + $0x578] sm:$0xff]
    %v2836 = vld [vmem:[#allocation13 + $0x580] sm:$0xff]
    %v2837 = vld [vmem:[#allocation13 + $0x588] sm:$0xff]
    %v2838 = vld [vmem:[#allocation13 + $0x590] sm:$0xf]
    %v2839 = vld [vmem:[#allocation13 + $0x594] sm:$0xff]
    %v2840 = vld [vmem:[#allocation13 + $0x59c] sm:$0xff]
    %v2841 = vld [vmem:[#allocation13 + $0x5a4] sm:$0xff]
    %v2842 = vld [vmem:[#allocation13 + $0x5ac] sm:$0xf]
    %v2843 = vld [vmem:[#allocation13 + $0x5b0] sm:$0xff]
    %v2844 = vld [vmem:[#allocation13 + $0x5b8] sm:$0xff]
    %v2845 = vld [vmem:[#allocation13 + $0x5c0] sm:$0xff]
    %v2846 = vld [vmem:[#allocation13 + $0x5c8] sm:$0xf]
    %v2847 = vld [vmem:[#allocation13 + $0x5cc] sm:$0xff]
    %v2848 = vld [vmem:[#allocation13 + $0x5d4] sm:$0xff]
    %v2849 = vld [vmem:[#allocation13 + $0x5dc] sm:$0xff]
    %v2850 = vld [vmem:[#allocation13 + $0x5e4] sm:$0xf]
    %v2851 = vld [vmem:[#allocation13 + $0x5e8] sm:$0xff]
    %v2852 = vld [vmem:[#allocation13 + $0x5f0] sm:$0xff]
    %v2853 = vld [vmem:[#allocation13 + $0x5f8] sm:$0xff]
    %v2854 = vld [vmem:[#allocation13 + $0x600] sm:$0xf]
    %v2855 = vld [vmem:[#allocation13 + $0x604] sm:$0xff]
    %v2856 = vld [vmem:[#allocation13 + $0x60c] sm:$0xff]
    %v2857 = vld [vmem:[#allocation13 + $0x614] sm:$0xff]
    %v2858 = vld [vmem:[#allocation13 + $0x61c] sm:$0xf]
    %v2859 = vld [vmem:[#allocation13 + $0x620] sm:$0xff]
    %v2860 = vld [vmem:[#allocation13 + $0x628] sm:$0xff]
    %v2861 = vld [vmem:[#allocation13 + $0x630] sm:$0xff]
    %v2862 = vld [vmem:[#allocation13 + $0x638] sm:$0xf]
    %v2863 = vld [vmem:[#allocation13 + $0x63c] sm:$0xff]
    %v2864 = vld [vmem:[#allocation13 + $0x644] sm:$0xff]
    %v2865 = vld [vmem:[#allocation13 + $0x64c] sm:$0xff]
    %v2866 = vld [vmem:[#allocation13 + $0x654] sm:$0xf]
    %v2867 = vld [vmem:[#allocation13 + $0x658] sm:$0xff]
    %v2868 = vld [vmem:[#allocation13 + $0x660] sm:$0xff]
    %v2869 = vld [vmem:[#allocation13 + $0x668] sm:$0xff]
    %v2870 = vld [vmem:[#allocation13 + $0x670] sm:$0xf]
    %v2871 = vld [vmem:[#allocation13 + $0x674] sm:$0xff]
    %v2872 = vld [vmem:[#allocation13 + $0x67c] sm:$0xff]
    %v2873 = vld [vmem:[#allocation13 + $0x684] sm:$0xff]
    %v2874 = vld [vmem:[#allocation13 + $0x68c] sm:$0xf]
    %v2875 = vld [vmem:[#allocation13 + $0x690] sm:$0xff]
    %v2876 = vld [vmem:[#allocation13 + $0x698] sm:$0xff]
    %v2877 = vld [vmem:[#allocation13 + $0x6a0] sm:$0xff]
    %v2878 = vld [vmem:[#allocation13 + $0x6a8] sm:$0xf]
    %v2879 = vld [vmem:[#allocation13 + $0x6ac] sm:$0xff]
    %v2880 = vld [vmem:[#allocation13 + $0x6b4] sm:$0xff]
    %v2881 = vld [vmem:[#allocation13 + $0x6bc] sm:$0xff]
    %v2882 = vld [vmem:[#allocation13 + $0x6c4] sm:$0xf]
    %v2883 = vld [vmem:[#allocation13 + $0x6c8] sm:$0xff]
    %v2884 = vld [vmem:[#allocation13 + $0x6d0] sm:$0xff]
    %v2885 = vld [vmem:[#allocation13 + $0x6d8] sm:$0xff]
    %v2886 = vld [vmem:[#allocation13 + $0x6e0] sm:$0xf]
    %v2887 = vld [vmem:[#allocation13 + $0x6e4] sm:$0xff]
    %v2888 = vld [vmem:[#allocation13 + $0x6ec] sm:$0xff]
    %v2889 = vld [vmem:[#allocation13 + $0x6f4] sm:$0xff]
    %v2890 = vld [vmem:[#allocation13 + $0x6fc] sm:$0xf]
    %v2891 = vld [vmem:[%s9] sm:$0xff]
    %v2893 = vlaneseq
    %v2894 = vshrl.u32 %v2893, 7
    %v2895 = vsub.s32 0, %v2894
    %v2896 = vrot.slane %v2891, %v2895
    %v2897 = vlaneseq
    %v2898 = vshrl.u32 %v2897, 7
    %v2899 = vsub.s32 1, %v2898
    %v2900 = vrot.slane %v2891, %v2899
    %v2901 = vlaneseq
    %v2902 = vshrl.u32 %v2901, 7
    %v2903 = vsub.s32 2, %v2902
    %v2904 = vrot.slane %v2891, %v2903
    %v2905 = vlaneseq
    %v2906 = vshrl.u32 %v2905, 7
    %v2907 = vsub.s32 3, %v2906
    %v2908 = vrot.slane %v2891, %v2907
    %v2909 = vlaneseq
    %v2910 = vshrl.u32 %v2909, 7
    %v2911 = vsub.s32 4, %v2910
    %v2912 = vrot.slane %v2891, %v2911
    %v2913 = vlaneseq
    %v2914 = vshrl.u32 %v2913, 7
    %v2915 = vsub.s32 5, %v2914
    %v2916 = vrot.slane %v2891, %v2915
    %v2917 = vlaneseq
    %v2918 = vshrl.u32 %v2917, 7
    %v2919 = vsub.s32 6, %v2918
    %v2920 = vrot.slane %v2891, %v2919
    %v3184 = vunpack.c.l.b16 %v2635
    %v3185 = vunpack.c.h.b16 %v2635
    %v3186 = vunpack.c.l.b16 %v2636
    %v3187 = vunpack.c.h.b16 %v2636
    %v3188 = vunpack.c.l.b16 %v2637
    %v3189 = vunpack.c.h.b16 %v2637
    %v3190 = vunpack.c.l.b16 %v2638
    %v3191 = vunpack.c.l.b16 %v2639
    %v3192 = vunpack.c.h.b16 %v2639
    %v3193 = vunpack.c.l.b16 %v2640
    %v3194 = vunpack.c.h.b16 %v2640
    %v3195 = vunpack.c.l.b16 %v2641
    %v3196 = vunpack.c.h.b16 %v2641
    %v3197 = vunpack.c.l.b16 %v2642
    %v3198 = vunpack.c.l.b16 %v2643
    %v3199 = vunpack.c.h.b16 %v2643
    %v3200 = vunpack.c.l.b16 %v2644
    %v3201 = vunpack.c.h.b16 %v2644
    %v3202 = vunpack.c.l.b16 %v2645
    %v3203 = vunpack.c.h.b16 %v2645
    %v3204 = vunpack.c.l.b16 %v2646
    %v3205 = vunpack.c.l.b16 %v2647
    %v3206 = vunpack.c.h.b16 %v2647
    %v3207 = vunpack.c.l.b16 %v2648
    %v3208 = vunpack.c.h.b16 %v2648
    %v3209 = vunpack.c.l.b16 %v2649
    %v3210 = vunpack.c.h.b16 %v2649
    %v3211 = vunpack.c.l.b16 %v2650
    %v3212 = vunpack.c.l.b16 %v2651
    %v3213 = vunpack.c.h.b16 %v2651
    %v3214 = vunpack.c.l.b16 %v2652
    %v3215 = vunpack.c.h.b16 %v2652
    %v3216 = vunpack.c.l.b16 %v2653
    %v3217 = vunpack.c.h.b16 %v2653
    %v3218 = vunpack.c.l.b16 %v2654
    %v3219 = vunpack.c.l.b16 %v2655
    %v3220 = vunpack.c.h.b16 %v2655
    %v3221 = vunpack.c.l.b16 %v2656
    %v3222 = vunpack.c.h.b16 %v2656
    %v3223 = vunpack.c.l.b16 %v2657
    %v3224 = vunpack.c.h.b16 %v2657
    %v3225 = vunpack.c.l.b16 %v2658
    %v3226 = vunpack.c.l.b16 %v2659
    %v3227 = vunpack.c.h.b16 %v2659
    %v3228 = vunpack.c.l.b16 %v2660
    %v3229 = vunpack.c.h.b16 %v2660
    %v3230 = vunpack.c.l.b16 %v2661
    %v3231 = vunpack.c.h.b16 %v2661
    %v3232 = vunpack.c.l.b16 %v2662
    %v3233 = vunpack.c.l.b16 %v2663
    %v3234 = vunpack.c.h.b16 %v2663
    %v3235 = vunpack.c.l.b16 %v2664
    %v3236 = vunpack.c.h.b16 %v2664
    %v3237 = vunpack.c.l.b16 %v2665
    %v3238 = vunpack.c.h.b16 %v2665
    %v3239 = vunpack.c.l.b16 %v2666
    %v3240 = vunpack.c.l.b16 %v2667
    %v3241 = vunpack.c.h.b16 %v2667
    %v3242 = vunpack.c.l.b16 %v2668
    %v3243 = vunpack.c.h.b16 %v2668
    %v3244 = vunpack.c.l.b16 %v2669
    %v3245 = vunpack.c.h.b16 %v2669
    %v3246 = vunpack.c.l.b16 %v2670
    %v3247 = vunpack.c.l.b16 %v2671
    %v3248 = vunpack.c.h.b16 %v2671
    %v3249 = vunpack.c.l.b16 %v2672
    %v3250 = vunpack.c.h.b16 %v2672
    %v3251 = vunpack.c.l.b16 %v2673
    %v3252 = vunpack.c.h.b16 %v2673
    %v3253 = vunpack.c.l.b16 %v2674
    %v3254 = vunpack.c.l.b16 %v2675
    %v3255 = vunpack.c.h.b16 %v2675
    %v3256 = vunpack.c.l.b16 %v2676
    %v3257 = vunpack.c.h.b16 %v2676
    %v3258 = vunpack.c.l.b16 %v2677
    %v3259 = vunpack.c.h.b16 %v2677
    %v3260 = vunpack.c.l.b16 %v2678
    %v3261 = vunpack.c.l.b16 %v2679
    %v3262 = vunpack.c.h.b16 %v2679
    %v3263 = vunpack.c.l.b16 %v2680
    %v3264 = vunpack.c.h.b16 %v2680
    %v3265 = vunpack.c.l.b16 %v2681
    %v3266 = vunpack.c.h.b16 %v2681
    %v3267 = vunpack.c.l.b16 %v2682
    %v3268 = vunpack.c.l.b16 %v2683
    %v3269 = vunpack.c.h.b16 %v2683
    %v3270 = vunpack.c.l.b16 %v2684
    %v3271 = vunpack.c.h.b16 %v2684
    %v3272 = vunpack.c.l.b16 %v2685
    %v3273 = vunpack.c.h.b16 %v2685
    %v3274 = vunpack.c.l.b16 %v2686
    %v3275 = vunpack.c.l.b16 %v2687
    %v3276 = vunpack.c.h.b16 %v2687
    %v3277 = vunpack.c.l.b16 %v2688
    %v3278 = vunpack.c.h.b16 %v2688
    %v3279 = vunpack.c.l.b16 %v2689
    %v3280 = vunpack.c.h.b16 %v2689
    %v3281 = vunpack.c.l.b16 %v2690
    %v3282 = vunpack.c.l.b16 %v2691
    %v3283 = vunpack.c.h.b16 %v2691
    %v3284 = vunpack.c.l.b16 %v2692
    %v3285 = vunpack.c.h.b16 %v2692
    %v3286 = vunpack.c.l.b16 %v2693
    %v3287 = vunpack.c.h.b16 %v2693
    %v3288 = vunpack.c.l.b16 %v2694
    %v3289 = vunpack.c.l.b16 %v2695
    %v3290 = vunpack.c.h.b16 %v2695
    %v3291 = vunpack.c.l.b16 %v2696
    %v3292 = vunpack.c.h.b16 %v2696
    %v3293 = vunpack.c.l.b16 %v2697
    %v3294 = vunpack.c.h.b16 %v2697
    %v3295 = vunpack.c.l.b16 %v2698
    %v3296 = vunpack.c.l.b16 %v2699
    %v3297 = vunpack.c.h.b16 %v2699
    %v3298 = vunpack.c.l.b16 %v2700
    %v3299 = vunpack.c.h.b16 %v2700
    %v3300 = vunpack.c.l.b16 %v2701
    %v3301 = vunpack.c.h.b16 %v2701
    %v3302 = vunpack.c.l.b16 %v2702
    %v3303 = vunpack.c.l.b16 %v2703
    %v3304 = vunpack.c.h.b16 %v2703
    %v3305 = vunpack.c.l.b16 %v2704
    %v3306 = vunpack.c.h.b16 %v2704
    %v3307 = vunpack.c.l.b16 %v2705
    %v3308 = vunpack.c.h.b16 %v2705
    %v3309 = vunpack.c.l.b16 %v2706
    %v3310 = vunpack.c.l.b16 %v2707
    %v3311 = vunpack.c.h.b16 %v2707
    %v3312 = vunpack.c.l.b16 %v2708
    %v3313 = vunpack.c.h.b16 %v2708
    %v3314 = vunpack.c.l.b16 %v2709
    %v3315 = vunpack.c.h.b16 %v2709
    %v3316 = vunpack.c.l.b16 %v2710
    %v3317 = vunpack.c.l.b16 %v2711
    %v3318 = vunpack.c.h.b16 %v2711
    %v3319 = vunpack.c.l.b16 %v2712
    %v3320 = vunpack.c.h.b16 %v2712
    %v3321 = vunpack.c.l.b16 %v2713
    %v3322 = vunpack.c.h.b16 %v2713
    %v3323 = vunpack.c.l.b16 %v2714
    %v3324 = vunpack.c.l.b16 %v2715
    %v3325 = vunpack.c.h.b16 %v2715
    %v3326 = vunpack.c.l.b16 %v2716
    %v3327 = vunpack.c.h.b16 %v2716
    %v3328 = vunpack.c.l.b16 %v2717
    %v3329 = vunpack.c.h.b16 %v2717
    %v3330 = vunpack.c.l.b16 %v2718
    %v3331 = vunpack.c.l.b16 %v2719
    %v3332 = vunpack.c.h.b16 %v2719
    %v3333 = vunpack.c.l.b16 %v2720
    %v3334 = vunpack.c.h.b16 %v2720
    %v3335 = vunpack.c.l.b16 %v2721
    %v3336 = vunpack.c.h.b16 %v2721
    %v3337 = vunpack.c.l.b16 %v2722
    %v3338 = vunpack.c.l.b16 %v2723
    %v3339 = vunpack.c.h.b16 %v2723
    %v3340 = vunpack.c.l.b16 %v2724
    %v3341 = vunpack.c.h.b16 %v2724
    %v3342 = vunpack.c.l.b16 %v2725
    %v3343 = vunpack.c.h.b16 %v2725
    %v3344 = vunpack.c.l.b16 %v2726
    %v3345 = vunpack.c.l.b16 %v2727
    %v3346 = vunpack.c.h.b16 %v2727
    %v3347 = vunpack.c.l.b16 %v2728
    %v3348 = vunpack.c.h.b16 %v2728
    %v3349 = vunpack.c.l.b16 %v2729
    %v3350 = vunpack.c.h.b16 %v2729
    %v3351 = vunpack.c.l.b16 %v2730
    %v3352 = vunpack.c.l.b16 %v2731
    %v3353 = vunpack.c.h.b16 %v2731
    %v3354 = vunpack.c.l.b16 %v2732
    %v3355 = vunpack.c.h.b16 %v2732
    %v3356 = vunpack.c.l.b16 %v2733
    %v3357 = vunpack.c.h.b16 %v2733
    %v3358 = vunpack.c.l.b16 %v2734
    %v3359 = vunpack.c.l.b16 %v2735
    %v3360 = vunpack.c.h.b16 %v2735
    %v3361 = vunpack.c.l.b16 %v2736
    %v3362 = vunpack.c.h.b16 %v2736
    %v3363 = vunpack.c.l.b16 %v2737
    %v3364 = vunpack.c.h.b16 %v2737
    %v3365 = vunpack.c.l.b16 %v2738
    %v3366 = vunpack.c.l.b16 %v2739
    %v3367 = vunpack.c.h.b16 %v2739
    %v3368 = vunpack.c.l.b16 %v2740
    %v3369 = vunpack.c.h.b16 %v2740
    %v3370 = vunpack.c.l.b16 %v2741
    %v3371 = vunpack.c.h.b16 %v2741
    %v3372 = vunpack.c.l.b16 %v2742
    %v3373 = vunpack.c.l.b16 %v2743
    %v3374 = vunpack.c.h.b16 %v2743
    %v3375 = vunpack.c.l.b16 %v2744
    %v3376 = vunpack.c.h.b16 %v2744
    %v3377 = vunpack.c.l.b16 %v2745
    %v3378 = vunpack.c.h.b16 %v2745
    %v3379 = vunpack.c.l.b16 %v2746
    %v3380 = vunpack.c.l.b16 %v2747
    %v3381 = vunpack.c.h.b16 %v2747
    %v3382 = vunpack.c.l.b16 %v2748
    %v3383 = vunpack.c.h.b16 %v2748
    %v3384 = vunpack.c.l.b16 %v2749
    %v3385 = vunpack.c.h.b16 %v2749
    %v3386 = vunpack.c.l.b16 %v2750
    %v3387 = vunpack.c.l.b16 %v2751
    %v3388 = vunpack.c.h.b16 %v2751
    %v3389 = vunpack.c.l.b16 %v2752
    %v3390 = vunpack.c.h.b16 %v2752
    %v3391 = vunpack.c.l.b16 %v2753
    %v3392 = vunpack.c.h.b16 %v2753
    %v3393 = vunpack.c.l.b16 %v2754
    %v3394 = vunpack.c.l.b16 %v2755
    %v3395 = vunpack.c.h.b16 %v2755
    %v3396 = vunpack.c.l.b16 %v2756
    %v3397 = vunpack.c.h.b16 %v2756
    %v3398 = vunpack.c.l.b16 %v2757
    %v3399 = vunpack.c.h.b16 %v2757
    %v3400 = vunpack.c.l.b16 %v2758
    %v3401 = vunpack.c.l.b16 %v2759
    %v3402 = vunpack.c.h.b16 %v2759
    %v3403 = vunpack.c.l.b16 %v2760
    %v3404 = vunpack.c.h.b16 %v2760
    %v3405 = vunpack.c.l.b16 %v2761
    %v3406 = vunpack.c.h.b16 %v2761
    %v3407 = vunpack.c.l.b16 %v2762
    %v3408 = vunpack.c.l.b16 %v2763
    %v3409 = vunpack.c.h.b16 %v2763
    %v3410 = vunpack.c.l.b16 %v2764
    %v3411 = vunpack.c.h.b16 %v2764
    %v3412 = vunpack.c.l.b16 %v2765
    %v3413 = vunpack.c.h.b16 %v2765
    %v3414 = vunpack.c.l.b16 %v2766
    %v3415 = vunpack.c.l.b16 %v2767
    %v3416 = vunpack.c.h.b16 %v2767
    %v3417 = vunpack.c.l.b16 %v2768
    %v3418 = vunpack.c.h.b16 %v2768
    %v3419 = vunpack.c.l.b16 %v2769
    %v3420 = vunpack.c.h.b16 %v2769
    %v3421 = vunpack.c.l.b16 %v2770
    %v3422 = vunpack.c.l.b16 %v2771
    %v3423 = vunpack.c.h.b16 %v2771
    %v3424 = vunpack.c.l.b16 %v2772
    %v3425 = vunpack.c.h.b16 %v2772
    %v3426 = vunpack.c.l.b16 %v2773
    %v3427 = vunpack.c.h.b16 %v2773
    %v3428 = vunpack.c.l.b16 %v2774
    %v3429 = vunpack.c.l.b16 %v2775
    %v3430 = vunpack.c.h.b16 %v2775
    %v3431 = vunpack.c.l.b16 %v2776
    %v3432 = vunpack.c.h.b16 %v2776
    %v3433 = vunpack.c.l.b16 %v2777
    %v3434 = vunpack.c.h.b16 %v2777
    %v3435 = vunpack.c.l.b16 %v2778
    %v3436 = vunpack.c.l.b16 %v2779
    %v3437 = vunpack.c.h.b16 %v2779
    %v3438 = vunpack.c.l.b16 %v2780
    %v3439 = vunpack.c.h.b16 %v2780
    %v3440 = vunpack.c.l.b16 %v2781
    %v3441 = vunpack.c.h.b16 %v2781
    %v3442 = vunpack.c.l.b16 %v2782
    %v3443 = vunpack.c.l.b16 %v2783
    %v3444 = vunpack.c.h.b16 %v2783
    %v3445 = vunpack.c.l.b16 %v2784
    %v3446 = vunpack.c.h.b16 %v2784
    %v3447 = vunpack.c.l.b16 %v2785
    %v3448 = vunpack.c.h.b16 %v2785
    %v3449 = vunpack.c.l.b16 %v2786
    %v3450 = vunpack.c.l.b16 %v2787
    %v3451 = vunpack.c.h.b16 %v2787
    %v3452 = vunpack.c.l.b16 %v2788
    %v3453 = vunpack.c.h.b16 %v2788
    %v3454 = vunpack.c.l.b16 %v2789
    %v3455 = vunpack.c.h.b16 %v2789
    %v3456 = vunpack.c.l.b16 %v2790
    %v3457 = vunpack.c.l.b16 %v2791
    %v3458 = vunpack.c.h.b16 %v2791
    %v3459 = vunpack.c.l.b16 %v2792
    %v3460 = vunpack.c.h.b16 %v2792
    %v3461 = vunpack.c.l.b16 %v2793
    %v3462 = vunpack.c.h.b16 %v2793
    %v3463 = vunpack.c.l.b16 %v2794
    %v3464 = vunpack.c.l.b16 %v2795
    %v3465 = vunpack.c.h.b16 %v2795
    %v3466 = vunpack.c.l.b16 %v2796
    %v3467 = vunpack.c.h.b16 %v2796
    %v3468 = vunpack.c.l.b16 %v2797
    %v3469 = vunpack.c.h.b16 %v2797
    %v3470 = vunpack.c.l.b16 %v2798
    %v3471 = vunpack.c.l.b16 %v2799
    %v3472 = vunpack.c.h.b16 %v2799
    %v3473 = vunpack.c.l.b16 %v2800
    %v3474 = vunpack.c.h.b16 %v2800
    %v3475 = vunpack.c.l.b16 %v2801
    %v3476 = vunpack.c.h.b16 %v2801
    %v3477 = vunpack.c.l.b16 %v2802
    %v3478 = vunpack.c.l.b16 %v2803
    %v3479 = vunpack.c.h.b16 %v2803
    %v3480 = vunpack.c.l.b16 %v2804
    %v3481 = vunpack.c.h.b16 %v2804
    %v3482 = vunpack.c.l.b16 %v2805
    %v3483 = vunpack.c.h.b16 %v2805
    %v3484 = vunpack.c.l.b16 %v2806
    %v3485 = vunpack.c.l.b16 %v2807
    %v3486 = vunpack.c.h.b16 %v2807
    %v3487 = vunpack.c.l.b16 %v2808
    %v3488 = vunpack.c.h.b16 %v2808
    %v3489 = vunpack.c.l.b16 %v2809
    %v3490 = vunpack.c.h.b16 %v2809
    %v3491 = vunpack.c.l.b16 %v2810
    %v3492 = vunpack.c.l.b16 %v2811
    %v3493 = vunpack.c.h.b16 %v2811
    %v3494 = vunpack.c.l.b16 %v2812
    %v3495 = vunpack.c.h.b16 %v2812
    %v3496 = vunpack.c.l.b16 %v2813
    %v3497 = vunpack.c.h.b16 %v2813
    %v3498 = vunpack.c.l.b16 %v2814
    %v3499 = vunpack.c.l.b16 %v2815
    %v3500 = vunpack.c.h.b16 %v2815
    %v3501 = vunpack.c.l.b16 %v2816
    %v3502 = vunpack.c.h.b16 %v2816
    %v3503 = vunpack.c.l.b16 %v2817
    %v3504 = vunpack.c.h.b16 %v2817
    %v3505 = vunpack.c.l.b16 %v2818
    %v3506 = vunpack.c.l.b16 %v2819
    %v3507 = vunpack.c.h.b16 %v2819
    %v3508 = vunpack.c.l.b16 %v2820
    %v3509 = vunpack.c.h.b16 %v2820
    %v3510 = vunpack.c.l.b16 %v2821
    %v3511 = vunpack.c.h.b16 %v2821
    %v3512 = vunpack.c.l.b16 %v2822
    %v3513 = vunpack.c.l.b16 %v2823
    %v3514 = vunpack.c.h.b16 %v2823
    %v3515 = vunpack.c.l.b16 %v2824
    %v3516 = vunpack.c.h.b16 %v2824
    %v3517 = vunpack.c.l.b16 %v2825
    %v3518 = vunpack.c.h.b16 %v2825
    %v3519 = vunpack.c.l.b16 %v2826
    %v3520 = vunpack.c.l.b16 %v2827
    %v3521 = vunpack.c.h.b16 %v2827
    %v3522 = vunpack.c.l.b16 %v2828
    %v3523 = vunpack.c.h.b16 %v2828
    %v3524 = vunpack.c.l.b16 %v2829
    %v3525 = vunpack.c.h.b16 %v2829
    %v3526 = vunpack.c.l.b16 %v2830
    %v3527 = vunpack.c.l.b16 %v2831
    %v3528 = vunpack.c.h.b16 %v2831
    %v3529 = vunpack.c.l.b16 %v2832
    %v3530 = vunpack.c.h.b16 %v2832
    %v3531 = vunpack.c.l.b16 %v2833
    %v3532 = vunpack.c.h.b16 %v2833
    %v3533 = vunpack.c.l.b16 %v2834
    %v3534 = vunpack.c.l.b16 %v2835
    %v3535 = vunpack.c.h.b16 %v2835
    %v3536 = vunpack.c.l.b16 %v2836
    %v3537 = vunpack.c.h.b16 %v2836
    %v3538 = vunpack.c.l.b16 %v2837
    %v3539 = vunpack.c.h.b16 %v2837
    %v3540 = vunpack.c.l.b16 %v2838
    %v3541 = vunpack.c.l.b16 %v2839
    %v3542 = vunpack.c.h.b16 %v2839
    %v3543 = vunpack.c.l.b16 %v2840
    %v3544 = vunpack.c.h.b16 %v2840
    %v3545 = vunpack.c.l.b16 %v2841
    %v3546 = vunpack.c.h.b16 %v2841
    %v3547 = vunpack.c.l.b16 %v2842
    %v3548 = vunpack.c.l.b16 %v2843
    %v3549 = vunpack.c.h.b16 %v2843
    %v3550 = vunpack.c.l.b16 %v2844
    %v3551 = vunpack.c.h.b16 %v2844
    %v3552 = vunpack.c.l.b16 %v2845
    %v3553 = vunpack.c.h.b16 %v2845
    %v3554 = vunpack.c.l.b16 %v2846
    %v3555 = vunpack.c.l.b16 %v2847
    %v3556 = vunpack.c.h.b16 %v2847
    %v3557 = vunpack.c.l.b16 %v2848
    %v3558 = vunpack.c.h.b16 %v2848
    %v3559 = vunpack.c.l.b16 %v2849
    %v3560 = vunpack.c.h.b16 %v2849
    %v3561 = vunpack.c.l.b16 %v2850
    %v3562 = vunpack.c.l.b16 %v2851
    %v3563 = vunpack.c.h.b16 %v2851
    %v3564 = vunpack.c.l.b16 %v2852
    %v3565 = vunpack.c.h.b16 %v2852
    %v3566 = vunpack.c.l.b16 %v2853
    %v3567 = vunpack.c.h.b16 %v2853
    %v3568 = vunpack.c.l.b16 %v2854
    %v3569 = vunpack.c.l.b16 %v2855
    %v3570 = vunpack.c.h.b16 %v2855
    %v3571 = vunpack.c.l.b16 %v2856
    %v3572 = vunpack.c.h.b16 %v2856
    %v3573 = vunpack.c.l.b16 %v2857
    %v3574 = vunpack.c.h.b16 %v2857
    %v3575 = vunpack.c.l.b16 %v2858
    %v3576 = vunpack.c.l.b16 %v2859
    %v3577 = vunpack.c.h.b16 %v2859
    %v3578 = vunpack.c.l.b16 %v2860
    %v3579 = vunpack.c.h.b16 %v2860
    %v3580 = vunpack.c.l.b16 %v2861
    %v3581 = vunpack.c.h.b16 %v2861
    %v3582 = vunpack.c.l.b16 %v2862
    %v3583 = vunpack.c.l.b16 %v2863
    %v3584 = vunpack.c.h.b16 %v2863
    %v3585 = vunpack.c.l.b16 %v2864
    %v3586 = vunpack.c.h.b16 %v2864
    %v3587 = vunpack.c.l.b16 %v2865
    %v3588 = vunpack.c.h.b16 %v2865
    %v3589 = vunpack.c.l.b16 %v2866
    %v3590 = vunpack.c.l.b16 %v2867
    %v3591 = vunpack.c.h.b16 %v2867
    %v3592 = vunpack.c.l.b16 %v2868
    %v3593 = vunpack.c.h.b16 %v2868
    %v3594 = vunpack.c.l.b16 %v2869
    %v3595 = vunpack.c.h.b16 %v2869
    %v3596 = vunpack.c.l.b16 %v2870
    %v3597 = vunpack.c.l.b16 %v2871
    %v3598 = vunpack.c.h.b16 %v2871
    %v3599 = vunpack.c.l.b16 %v2872
    %v3600 = vunpack.c.h.b16 %v2872
    %v3601 = vunpack.c.l.b16 %v2873
    %v3602 = vunpack.c.h.b16 %v2873
    %v3603 = vunpack.c.l.b16 %v2874
    %v3604 = vunpack.c.l.b16 %v2875
    %v3605 = vunpack.c.h.b16 %v2875
    %v3606 = vunpack.c.l.b16 %v2876
    %v3607 = vunpack.c.h.b16 %v2876
    %v3608 = vunpack.c.l.b16 %v2877
    %v3609 = vunpack.c.h.b16 %v2877
    %v3610 = vunpack.c.l.b16 %v2878
    %v3611 = vunpack.c.l.b16 %v2879
    %v3612 = vunpack.c.h.b16 %v2879
    %v3613 = vunpack.c.l.b16 %v2880
    %v3614 = vunpack.c.h.b16 %v2880
    %v3615 = vunpack.c.l.b16 %v2881
    %v3616 = vunpack.c.h.b16 %v2881
    %v3617 = vunpack.c.l.b16 %v2882
    %v3618 = vunpack.c.l.b16 %v2883
    %v3619 = vunpack.c.h.b16 %v2883
    %v3620 = vunpack.c.l.b16 %v2884
    %v3621 = vunpack.c.h.b16 %v2884
    %v3622 = vunpack.c.l.b16 %v2885
    %v3623 = vunpack.c.h.b16 %v2885
    %v3624 = vunpack.c.l.b16 %v2886
    %v3625 = vunpack.c.l.b16 %v2887
    %v3626 = vunpack.c.h.b16 %v2887
    %v3627 = vunpack.c.l.b16 %v2888
    %v3628 = vunpack.c.h.b16 %v2888
    %v3629 = vunpack.c.l.b16 %v2889
    %v3630 = vunpack.c.h.b16 %v2889
    %v3631 = vunpack.c.l.b16 %v2890
    %v3632 = vpack.c.b16 %v3191, %v3184
    %v3633 = vpack.c.b16 %v3192, %v3185
    %v3634 = vpack.c.b16 %v3193, %v3186
    %v3635 = vpack.c.b16 %v3194, %v3187
    %v3636 = vpack.c.b16 %v3195, %v3188
    %v3637 = vpack.c.b16 %v3196, %v3189
    %v3638 = vpack.c.b16 %v3197, %v3190
    %v3639 = vpack.c.b16 %v3205, %v3198
    %v3640 = vpack.c.b16 %v3206, %v3199
    %v3641 = vpack.c.b16 %v3207, %v3200
    %v3642 = vpack.c.b16 %v3208, %v3201
    %v3643 = vpack.c.b16 %v3209, %v3202
    %v3644 = vpack.c.b16 %v3210, %v3203
    %v3645 = vpack.c.b16 %v3211, %v3204
    %v3646 = vpack.c.b16 %v3219, %v3212
    %v3647 = vpack.c.b16 %v3220, %v3213
    %v3648 = vpack.c.b16 %v3221, %v3214
    %v3649 = vpack.c.b16 %v3222, %v3215
    %v3650 = vpack.c.b16 %v3223, %v3216
    %v3651 = vpack.c.b16 %v3224, %v3217
    %v3652 = vpack.c.b16 %v3225, %v3218
    %v3653 = vpack.c.b16 %v3233, %v3226
    %v3654 = vpack.c.b16 %v3234, %v3227
    %v3655 = vpack.c.b16 %v3235, %v3228
    %v3656 = vpack.c.b16 %v3236, %v3229
    %v3657 = vpack.c.b16 %v3237, %v3230
    %v3658 = vpack.c.b16 %v3238, %v3231
    %v3659 = vpack.c.b16 %v3239, %v3232
    %v3660 = vpack.c.b16 %v3247, %v3240
    %v3661 = vpack.c.b16 %v3248, %v3241
    %v3662 = vpack.c.b16 %v3249, %v3242
    %v3663 = vpack.c.b16 %v3250, %v3243
    %v3664 = vpack.c.b16 %v3251, %v3244
    %v3665 = vpack.c.b16 %v3252, %v3245
    %v3666 = vpack.c.b16 %v3253, %v3246
    %v3667 = vpack.c.b16 %v3261, %v3254
    %v3668 = vpack.c.b16 %v3262, %v3255
    %v3669 = vpack.c.b16 %v3263, %v3256
    %v3670 = vpack.c.b16 %v3264, %v3257
    %v3671 = vpack.c.b16 %v3265, %v3258
    %v3672 = vpack.c.b16 %v3266, %v3259
    %v3673 = vpack.c.b16 %v3267, %v3260
    %v3674 = vpack.c.b16 %v3275, %v3268
    %v3675 = vpack.c.b16 %v3276, %v3269
    %v3676 = vpack.c.b16 %v3277, %v3270
    %v3677 = vpack.c.b16 %v3278, %v3271
    %v3678 = vpack.c.b16 %v3279, %v3272
    %v3679 = vpack.c.b16 %v3280, %v3273
    %v3680 = vpack.c.b16 %v3281, %v3274
    %v3681 = vpack.c.b16 %v3289, %v3282
    %v3682 = vpack.c.b16 %v3290, %v3283
    %v3683 = vpack.c.b16 %v3291, %v3284
    %v3684 = vpack.c.b16 %v3292, %v3285
    %v3685 = vpack.c.b16 %v3293, %v3286
    %v3686 = vpack.c.b16 %v3294, %v3287
    %v3687 = vpack.c.b16 %v3295, %v3288
    %v3688 = vpack.c.b16 %v3303, %v3296
    %v3689 = vpack.c.b16 %v3304, %v3297
    %v3690 = vpack.c.b16 %v3305, %v3298
    %v3691 = vpack.c.b16 %v3306, %v3299
    %v3692 = vpack.c.b16 %v3307, %v3300
    %v3693 = vpack.c.b16 %v3308, %v3301
    %v3694 = vpack.c.b16 %v3309, %v3302
    %v3695 = vpack.c.b16 %v3317, %v3310
    %v3696 = vpack.c.b16 %v3318, %v3311
    %v3697 = vpack.c.b16 %v3319, %v3312
    %v3698 = vpack.c.b16 %v3320, %v3313
    %v3699 = vpack.c.b16 %v3321, %v3314
    %v3700 = vpack.c.b16 %v3322, %v3315
    %v3701 = vpack.c.b16 %v3323, %v3316
    %v3702 = vpack.c.b16 %v3331, %v3324
    %v3703 = vpack.c.b16 %v3332, %v3325
    %v3704 = vpack.c.b16 %v3333, %v3326
    %v3705 = vpack.c.b16 %v3334, %v3327
    %v3706 = vpack.c.b16 %v3335, %v3328
    %v3707 = vpack.c.b16 %v3336, %v3329
    %v3708 = vpack.c.b16 %v3337, %v3330
    %v3709 = vpack.c.b16 %v3345, %v3338
    %v3710 = vpack.c.b16 %v3346, %v3339
    %v3711 = vpack.c.b16 %v3347, %v3340
    %v3712 = vpack.c.b16 %v3348, %v3341
    %v3713 = vpack.c.b16 %v3349, %v3342
    %v3714 = vpack.c.b16 %v3350, %v3343
    %v3715 = vpack.c.b16 %v3351, %v3344
    %v3716 = vpack.c.b16 %v3359, %v3352
    %v3717 = vpack.c.b16 %v3360, %v3353
    %v3718 = vpack.c.b16 %v3361, %v3354
    %v3719 = vpack.c.b16 %v3362, %v3355
    %v3720 = vpack.c.b16 %v3363, %v3356
    %v3721 = vpack.c.b16 %v3364, %v3357
    %v3722 = vpack.c.b16 %v3365, %v3358
    %v3723 = vpack.c.b16 %v3373, %v3366
    %v3724 = vpack.c.b16 %v3374, %v3367
    %v3725 = vpack.c.b16 %v3375, %v3368
    %v3726 = vpack.c.b16 %v3376, %v3369
    %v3727 = vpack.c.b16 %v3377, %v3370
    %v3728 = vpack.c.b16 %v3378, %v3371
    %v3729 = vpack.c.b16 %v3379, %v3372
    %v3730 = vpack.c.b16 %v3387, %v3380
    %v3731 = vpack.c.b16 %v3388, %v3381
    %v3732 = vpack.c.b16 %v3389, %v3382
    %v3733 = vpack.c.b16 %v3390, %v3383
    %v3734 = vpack.c.b16 %v3391, %v3384
    %v3735 = vpack.c.b16 %v3392, %v3385
    %v3736 = vpack.c.b16 %v3393, %v3386
    %v3737 = vpack.c.b16 %v3401, %v3394
    %v3738 = vpack.c.b16 %v3402, %v3395
    %v3739 = vpack.c.b16 %v3403, %v3396
    %v3740 = vpack.c.b16 %v3404, %v3397
    %v3741 = vpack.c.b16 %v3405, %v3398
    %v3742 = vpack.c.b16 %v3406, %v3399
    %v3743 = vpack.c.b16 %v3407, %v3400
    %v3744 = vpack.c.b16 %v3415, %v3408
    %v3745 = vpack.c.b16 %v3416, %v3409
    %v3746 = vpack.c.b16 %v3417, %v3410
    %v3747 = vpack.c.b16 %v3418, %v3411
    %v3748 = vpack.c.b16 %v3419, %v3412
    %v3749 = vpack.c.b16 %v3420, %v3413
    %v3750 = vpack.c.b16 %v3421, %v3414
    %v3751 = vpack.c.b16 %v3429, %v3422
    %v3752 = vpack.c.b16 %v3430, %v3423
    %v3753 = vpack.c.b16 %v3431, %v3424
    %v3754 = vpack.c.b16 %v3432, %v3425
    %v3755 = vpack.c.b16 %v3433, %v3426
    %v3756 = vpack.c.b16 %v3434, %v3427
    %v3757 = vpack.c.b16 %v3435, %v3428
    %v3758 = vpack.c.b16 %v3443, %v3436
    %v3759 = vpack.c.b16 %v3444, %v3437
    %v3760 = vpack.c.b16 %v3445, %v3438
    %v3761 = vpack.c.b16 %v3446, %v3439
    %v3762 = vpack.c.b16 %v3447, %v3440
    %v3763 = vpack.c.b16 %v3448, %v3441
    %v3764 = vpack.c.b16 %v3449, %v3442
    %v3765 = vpack.c.b16 %v3457, %v3450
    %v3766 = vpack.c.b16 %v3458, %v3451
    %v3767 = vpack.c.b16 %v3459, %v3452
    %v3768 = vpack.c.b16 %v3460, %v3453
    %v3769 = vpack.c.b16 %v3461, %v3454
    %v3770 = vpack.c.b16 %v3462, %v3455
    %v3771 = vpack.c.b16 %v3463, %v3456
    %v3772 = vpack.c.b16 %v3471, %v3464
    %v3773 = vpack.c.b16 %v3472, %v3465
    %v3774 = vpack.c.b16 %v3473, %v3466
    %v3775 = vpack.c.b16 %v3474, %v3467
    %v3776 = vpack.c.b16 %v3475, %v3468
    %v3777 = vpack.c.b16 %v3476, %v3469
    %v3778 = vpack.c.b16 %v3477, %v3470
    %v3779 = vpack.c.b16 %v3485, %v3478
    %v3780 = vpack.c.b16 %v3486, %v3479
    %v3781 = vpack.c.b16 %v3487, %v3480
    %v3782 = vpack.c.b16 %v3488, %v3481
    %v3783 = vpack.c.b16 %v3489, %v3482
    %v3784 = vpack.c.b16 %v3490, %v3483
    %v3785 = vpack.c.b16 %v3491, %v3484
    %v3786 = vpack.c.b16 %v3499, %v3492
    %v3787 = vpack.c.b16 %v3500, %v3493
    %v3788 = vpack.c.b16 %v3501, %v3494
    %v3789 = vpack.c.b16 %v3502, %v3495
    %v3790 = vpack.c.b16 %v3503, %v3496
    %v3791 = vpack.c.b16 %v3504, %v3497
    %v3792 = vpack.c.b16 %v3505, %v3498
    %v3793 = vpack.c.b16 %v3513, %v3506
    %v3794 = vpack.c.b16 %v3514, %v3507
    %v3795 = vpack.c.b16 %v3515, %v3508
    %v3796 = vpack.c.b16 %v3516, %v3509
    %v3797 = vpack.c.b16 %v3517, %v3510
    %v3798 = vpack.c.b16 %v3518, %v3511
    %v3799 = vpack.c.b16 %v3519, %v3512
    %v3800 = vpack.c.b16 %v3527, %v3520
    %v3801 = vpack.c.b16 %v3528, %v3521
    %v3802 = vpack.c.b16 %v3529, %v3522
    %v3803 = vpack.c.b16 %v3530, %v3523
    %v3804 = vpack.c.b16 %v3531, %v3524
    %v3805 = vpack.c.b16 %v3532, %v3525
    %v3806 = vpack.c.b16 %v3533, %v3526
    %v3807 = vpack.c.b16 %v3541, %v3534
    %v3808 = vpack.c.b16 %v3542, %v3535
    %v3809 = vpack.c.b16 %v3543, %v3536
    %v3810 = vpack.c.b16 %v3544, %v3537
    %v3811 = vpack.c.b16 %v3545, %v3538
    %v3812 = vpack.c.b16 %v3546, %v3539
    %v3813 = vpack.c.b16 %v3547, %v3540
    %v3814 = vpack.c.b16 %v3555, %v3548
    %v3815 = vpack.c.b16 %v3556, %v3549
    %v3816 = vpack.c.b16 %v3557, %v3550
    %v3817 = vpack.c.b16 %v3558, %v3551
    %v3818 = vpack.c.b16 %v3559, %v3552
    %v3819 = vpack.c.b16 %v3560, %v3553
    %v3820 = vpack.c.b16 %v3561, %v3554
    %v3821 = vpack.c.b16 %v3569, %v3562
    %v3822 = vpack.c.b16 %v3570, %v3563
    %v3823 = vpack.c.b16 %v3571, %v3564
    %v3824 = vpack.c.b16 %v3572, %v3565
    %v3825 = vpack.c.b16 %v3573, %v3566
    %v3826 = vpack.c.b16 %v3574, %v3567
    %v3827 = vpack.c.b16 %v3575, %v3568
    %v3828 = vpack.c.b16 %v3583, %v3576
    %v3829 = vpack.c.b16 %v3584, %v3577
    %v3830 = vpack.c.b16 %v3585, %v3578
    %v3831 = vpack.c.b16 %v3586, %v3579
    %v3832 = vpack.c.b16 %v3587, %v3580
    %v3833 = vpack.c.b16 %v3588, %v3581
    %v3834 = vpack.c.b16 %v3589, %v3582
    %v3835 = vpack.c.b16 %v3597, %v3590
    %v3836 = vpack.c.b16 %v3598, %v3591
    %v3837 = vpack.c.b16 %v3599, %v3592
    %v3838 = vpack.c.b16 %v3600, %v3593
    %v3839 = vpack.c.b16 %v3601, %v3594
    %v3840 = vpack.c.b16 %v3602, %v3595
    %v3841 = vpack.c.b16 %v3603, %v3596
    %v3842 = vpack.c.b16 %v3611, %v3604
    %v3843 = vpack.c.b16 %v3612, %v3605
    %v3844 = vpack.c.b16 %v3613, %v3606
    %v3845 = vpack.c.b16 %v3614, %v3607
    %v3846 = vpack.c.b16 %v3615, %v3608
    %v3847 = vpack.c.b16 %v3616, %v3609
    %v3848 = vpack.c.b16 %v3617, %v3610
    %v3849 = vpack.c.b16 %v3625, %v3618
    %v3850 = vpack.c.b16 %v3626, %v3619
    %v3851 = vpack.c.b16 %v3627, %v3620
    %v3852 = vpack.c.b16 %v3628, %v3621
    %v3853 = vpack.c.b16 %v3629, %v3622
    %v3854 = vpack.c.b16 %v3630, %v3623
    %v3855 = vpack.c.b16 %v3631, %v3624
    %4080 = vmatprep.subr.bf16.mxu0 %v3682
    %4081 = vmatpush1.bf16.msra.mxu0 %v3681
    %4082 = vmatprep.subr.bf16.mxu0 %v3675
    %4083 = vmatpush1.bf16.msra.mxu0 %v3674
    %4084 = vmatprep.subr.bf16.mxu0 %v3668
    %4085 = vmatpush1.bf16.msra.mxu0 %v3667
    %4086 = vmatprep.subr.bf16.mxu0 %v3661
    %4087 = vmatpush1.bf16.msra.mxu0 %v3660
    %4088 = vmatprep.subr.bf16.mxu0 %v3654
    %4089 = vmatpush1.bf16.msra.mxu0 %v3653
    %4090 = vmatprep.subr.bf16.mxu0 %v3647
    %4091 = vmatpush1.bf16.msra.mxu0 %v3646
    %4092 = vmatprep.subr.bf16.mxu0 %v3640
    %4093 = vmatpush1.bf16.msra.mxu0 %v3639
    %4094 = vmatprep.subr.bf16.mxu0 %v3633
    %4095 = vmatpush1.bf16.msra.mxu0 %v3632
    %4096 = vmatprep.subr.bf16.mxu0 %v3738
    %4097 = vmatpush2.bf16.msra.mxu0 %v3737
    %4098 = vmatprep.subr.bf16.mxu0 %v3731
    %4099 = vmatpush2.bf16.msra.mxu0 %v3730
    %4100 = vmatprep.subr.bf16.mxu0 %v3724
    %4101 = vmatpush2.bf16.msra.mxu0 %v3723
    %4102 = vmatprep.subr.bf16.mxu0 %v3717
    %4103 = vmatpush2.bf16.msra.mxu0 %v3716
    %4104 = vmatprep.subr.bf16.mxu0 %v3710
    %4105 = vmatpush2.bf16.msra.mxu0 %v3709
    %4106 = vmatprep.subr.bf16.mxu0 %v3703
    %4107 = vmatpush2.bf16.msra.mxu0 %v3702
    %4108 = vmatprep.subr.bf16.mxu0 %v3696
    %4109 = vmatpush2.bf16.msra.mxu0 %v3695
    %4110 = vmatprep.subr.bf16.mxu0 %v3689
    %4111 = vmatpush2.bf16.msra.mxu0 %v3688
    %4112 = vmatprep.mubr.bf16.mxu0 %v2632
    %4113 = vmatmul.mubr.bf16.gmra.mxu0 %v2631
    %v4114 = vpop.f32.mrf.mxu0
    %v4115 = vadd.f32 %v2896, %v4114
    %v4116 = vpop.f32.mrf.mxu0
    %v4117 = vadd.f32 %v2900, %v4116
    %v4118 = vpop.f32.mrf.mxu0
    %v4119 = vpop.f32.mrf.mxu0
    %4120 = vdwg.mxu0
    %4121 = vmatprep.subr.bf16.mxu0 %v3794
    %4122 = vmatpush1.bf16.msra.mxu0 %v3793
    %4123 = vmatprep.subr.bf16.mxu0 %v3787
    %4124 = vmatpush1.bf16.msra.mxu0 %v3786
    %4125 = vmatprep.subr.bf16.mxu0 %v3780
    %4126 = vmatpush1.bf16.msra.mxu0 %v3779
    %4127 = vmatprep.subr.bf16.mxu0 %v3773
    %4128 = vmatpush1.bf16.msra.mxu0 %v3772
    %4129 = vmatprep.subr.bf16.mxu0 %v3766
    %4130 = vmatpush1.bf16.msra.mxu0 %v3765
    %4131 = vmatprep.subr.bf16.mxu0 %v3759
    %4132 = vmatpush1.bf16.msra.mxu0 %v3758
    %4133 = vmatprep.subr.bf16.mxu0 %v3752
    %4134 = vmatpush1.bf16.msra.mxu0 %v3751
    %4135 = vmatprep.subr.bf16.mxu0 %v3745
    %4136 = vmatpush1.bf16.msra.mxu0 %v3744
    %4137 = vmatprep.subr.bf16.mxu0 %v3850
    %4138 = vmatpush2.bf16.msra.mxu0 %v3849
    %4139 = vmatprep.subr.bf16.mxu0 %v3843
    %4140 = vmatpush2.bf16.msra.mxu0 %v3842
    %4141 = vmatprep.subr.bf16.mxu0 %v3836
    %4142 = vmatpush2.bf16.msra.mxu0 %v3835
    %4143 = vmatprep.subr.bf16.mxu0 %v3829
    %4144 = vmatpush2.bf16.msra.mxu0 %v3828
    %4145 = vmatprep.subr.bf16.mxu0 %v3822
    %4146 = vmatpush2.bf16.msra.mxu0 %v3821
    %4147 = vmatprep.subr.bf16.mxu0 %v3815
    %4148 = vmatpush2.bf16.msra.mxu0 %v3814
    %4149 = vmatprep.subr.bf16.mxu0 %v3808
    %4150 = vmatpush2.bf16.msra.mxu0 %v3807
    %4151 = vmatprep.subr.bf16.mxu0 %v3801
    %4152 = vmatpush2.bf16.msra.mxu0 %v3800
    %4153 = vmatprep.mubr.bf16.mxu0 %v2634
    %4154 = vmatmul.mubr.bf16.gmra.mxu0 %v2633
    %v4155 = vpop.f32.mrf.mxu0
    %v4156 = vadd.f32 %v4115, %v4155
    %v4157 = vpop.f32.mrf.mxu0
    %v4158 = vadd.f32 %v4117, %v4157
    %v4159 = vpop.f32.mrf.mxu0
    %v4160 = vpop.f32.mrf.mxu0
    %4161 = vdwg.mxu0
    %4162 = vmatprep.subr.bf16.mxu0 %v3684
    %4163 = vmatpush1.bf16.msra.mxu0 %v3683
    %4164 = vmatprep.subr.bf16.mxu0 %v3677
    %4165 = vmatpush1.bf16.msra.mxu0 %v3676
    %4166 = vmatprep.subr.bf16.mxu0 %v3670
    %4167 = vmatpush1.bf16.msra.mxu0 %v3669
    %4168 = vmatprep.subr.bf16.mxu0 %v3663
    %4169 = vmatpush1.bf16.msra.mxu0 %v3662
    %4170 = vmatprep.subr.bf16.mxu0 %v3656
    %4171 = vmatpush1.bf16.msra.mxu0 %v3655
    %4172 = vmatprep.subr.bf16.mxu0 %v3649
    %4173 = vmatpush1.bf16.msra.mxu0 %v3648
    %4174 = vmatprep.subr.bf16.mxu0 %v3642
    %4175 = vmatpush1.bf16.msra.mxu0 %v3641
    %4176 = vmatprep.subr.bf16.mxu0 %v3635
    %4177 = vmatpush1.bf16.msra.mxu0 %v3634
    %4178 = vmatprep.subr.bf16.mxu0 %v3740
    %4179 = vmatpush2.bf16.msra.mxu0 %v3739
    %4180 = vmatprep.subr.bf16.mxu0 %v3733
    %4181 = vmatpush2.bf16.msra.mxu0 %v3732
    %4182 = vmatprep.subr.bf16.mxu0 %v3726
    %4183 = vmatpush2.bf16.msra.mxu0 %v3725
    %4184 = vmatprep.subr.bf16.mxu0 %v3719
    %4185 = vmatpush2.bf16.msra.mxu0 %v3718
    %4186 = vmatprep.subr.bf16.mxu0 %v3712
    %4187 = vmatpush2.bf16.msra.mxu0 %v3711
    %4188 = vmatprep.subr.bf16.mxu0 %v3705
    %4189 = vmatpush2.bf16.msra.mxu0 %v3704
    %4190 = vmatprep.subr.bf16.mxu0 %v3698
    %4191 = vmatpush2.bf16.msra.mxu0 %v3697
    %4192 = vmatprep.subr.bf16.mxu0 %v3691
    %4193 = vmatpush2.bf16.msra.mxu0 %v3690
    %4194 = vmatprep.mubr.bf16.mxu0 %v2632
    %4195 = vmatmul.mubr.bf16.gmra.mxu0 %v2631
    %v4196 = vpop.f32.mrf.mxu0
    %v4197 = vadd.f32 %v2904, %v4196
    %v4198 = vpop.f32.mrf.mxu0
    %v4199 = vadd.f32 %v2908, %v4198
    %v4200 = vpop.f32.mrf.mxu0
    %v4201 = vpop.f32.mrf.mxu0
    %4202 = vdwg.mxu0
    %4203 = vmatprep.subr.bf16.mxu0 %v3796
    %4204 = vmatpush1.bf16.msra.mxu0 %v3795
    %4205 = vmatprep.subr.bf16.mxu0 %v3789
    %4206 = vmatpush1.bf16.msra.mxu0 %v3788
    %4207 = vmatprep.subr.bf16.mxu0 %v3782
    %4208 = vmatpush1.bf16.msra.mxu0 %v3781
    %4209 = vmatprep.subr.bf16.mxu0 %v3775
    %4210 = vmatpush1.bf16.msra.mxu0 %v3774
    %4211 = vmatprep.subr.bf16.mxu0 %v3768
    %4212 = vmatpush1.bf16.msra.mxu0 %v3767
    %4213 = vmatprep.subr.bf16.mxu0 %v3761
    %4214 = vmatpush1.bf16.msra.mxu0 %v3760
    %4215 = vmatprep.subr.bf16.mxu0 %v3754
    %4216 = vmatpush1.bf16.msra.mxu0 %v3753
    %4217 = vmatprep.subr.bf16.mxu0 %v3747
    %4218 = vmatpush1.bf16.msra.mxu0 %v3746
    %4219 = vmatprep.subr.bf16.mxu0 %v3852
    %4220 = vmatpush2.bf16.msra.mxu0 %v3851
    %4221 = vmatprep.subr.bf16.mxu0 %v3845
    %4222 = vmatpush2.bf16.msra.mxu0 %v3844
    %4223 = vmatprep.subr.bf16.mxu0 %v3838
    %4224 = vmatpush2.bf16.msra.mxu0 %v3837
    %4225 = vmatprep.subr.bf16.mxu0 %v3831
    %4226 = vmatpush2.bf16.msra.mxu0 %v3830
    %4227 = vmatprep.subr.bf16.mxu0 %v3824
    %4228 = vmatpush2.bf16.msra.mxu0 %v3823
    %4229 = vmatprep.subr.bf16.mxu0 %v3817
    %4230 = vmatpush2.bf16.msra.mxu0 %v3816
    %4231 = vmatprep.subr.bf16.mxu0 %v3810
    %4232 = vmatpush2.bf16.msra.mxu0 %v3809
    %4233 = vmatprep.subr.bf16.mxu0 %v3803
    %4234 = vmatpush2.bf16.msra.mxu0 %v3802
    %4235 = vmatprep.mubr.bf16.mxu0 %v2634
    %4236 = vmatmul.mubr.bf16.gmra.mxu0 %v2633
    %v4237 = vpop.f32.mrf.mxu0
    %v4238 = vadd.f32 %v4197, %v4237
    %v4239 = vpop.f32.mrf.mxu0
    %v4240 = vadd.f32 %v4199, %v4239
    %v4241 = vpop.f32.mrf.mxu0
    %v4242 = vpop.f32.mrf.mxu0
    %4243 = vdwg.mxu0
    %4244 = vmatprep.subr.bf16.mxu0 %v3686
    %4245 = vmatpush1.bf16.msra.mxu0 %v3685
    %4246 = vmatprep.subr.bf16.mxu0 %v3679
    %4247 = vmatpush1.bf16.msra.mxu0 %v3678
    %4248 = vmatprep.subr.bf16.mxu0 %v3672
    %4249 = vmatpush1.bf16.msra.mxu0 %v3671
    %4250 = vmatprep.subr.bf16.mxu0 %v3665
    %4251 = vmatpush1.bf16.msra.mxu0 %v3664
    %4252 = vmatprep.subr.bf16.mxu0 %v3658
    %4253 = vmatpush1.bf16.msra.mxu0 %v3657
    %4254 = vmatprep.subr.bf16.mxu0 %v3651
    %4255 = vmatpush1.bf16.msra.mxu0 %v3650
    %4256 = vmatprep.subr.bf16.mxu0 %v3644
    %4257 = vmatpush1.bf16.msra.mxu0 %v3643
    %4258 = vmatprep.subr.bf16.mxu0 %v3637
    %4259 = vmatpush1.bf16.msra.mxu0 %v3636
    %4260 = vmatprep.subr.bf16.mxu0 %v3742
    %4261 = vmatpush2.bf16.msra.mxu0 %v3741
    %4262 = vmatprep.subr.bf16.mxu0 %v3735
    %4263 = vmatpush2.bf16.msra.mxu0 %v3734
    %4264 = vmatprep.subr.bf16.mxu0 %v3728
    %4265 = vmatpush2.bf16.msra.mxu0 %v3727
    %4266 = vmatprep.subr.bf16.mxu0 %v3721
    %4267 = vmatpush2.bf16.msra.mxu0 %v3720
    %4268 = vmatprep.subr.bf16.mxu0 %v3714
    %4269 = vmatpush2.bf16.msra.mxu0 %v3713
    %4270 = vmatprep.subr.bf16.mxu0 %v3707
    %4271 = vmatpush2.bf16.msra.mxu0 %v3706
    %4272 = vmatprep.subr.bf16.mxu0 %v3700
    %4273 = vmatpush2.bf16.msra.mxu0 %v3699
    %4274 = vmatprep.subr.bf16.mxu0 %v3693
    %4275 = vmatpush2.bf16.msra.mxu0 %v3692
    %4276 = vmatprep.mubr.bf16.mxu0 %v2632
    %4277 = vmatmul.mubr.bf16.gmra.mxu0 %v2631
    %v4278 = vpop.f32.mrf.mxu0
    %v4279 = vadd.f32 %v2912, %v4278
    %v4280 = vpop.f32.mrf.mxu0
    %v4281 = vadd.f32 %v2916, %v4280
    %v4282 = vpop.f32.mrf.mxu0
    %v4283 = vpop.f32.mrf.mxu0
    %4284 = vdwg.mxu0
    %4285 = vmatprep.subr.bf16.mxu0 %v3798
    %4286 = vmatpush1.bf16.msra.mxu0 %v3797
    %4287 = vmatprep.subr.bf16.mxu0 %v3791
    %4288 = vmatpush1.bf16.msra.mxu0 %v3790
    %4289 = vmatprep.subr.bf16.mxu0 %v3784
    %4290 = vmatpush1.bf16.msra.mxu0 %v3783
    %4291 = vmatprep.subr.bf16.mxu0 %v3777
    %4292 = vmatpush1.bf16.msra.mxu0 %v3776
    %4293 = vmatprep.subr.bf16.mxu0 %v3770
    %4294 = vmatpush1.bf16.msra.mxu0 %v3769
    %4295 = vmatprep.subr.bf16.mxu0 %v3763
    %4296 = vmatpush1.bf16.msra.mxu0 %v3762
    %4297 = vmatprep.subr.bf16.mxu0 %v3756
    %4298 = vmatpush1.bf16.msra.mxu0 %v3755
    %4299 = vmatprep.subr.bf16.mxu0 %v3749
    %4300 = vmatpush1.bf16.msra.mxu0 %v3748
    %4301 = vmatprep.subr.bf16.mxu0 %v3854
    %4302 = vmatpush2.bf16.msra.mxu0 %v3853
    %4303 = vmatprep.subr.bf16.mxu0 %v3847
    %4304 = vmatpush2.bf16.msra.mxu0 %v3846
    %4305 = vmatprep.subr.bf16.mxu0 %v3840
    %4306 = vmatpush2.bf16.msra.mxu0 %v3839
    %4307 = vmatprep.subr.bf16.mxu0 %v3833
    %4308 = vmatpush2.bf16.msra.mxu0 %v3832
    %4309 = vmatprep.subr.bf16.mxu0 %v3826
    %4310 = vmatpush2.bf16.msra.mxu0 %v3825
    %4311 = vmatprep.subr.bf16.mxu0 %v3819
    %4312 = vmatpush2.bf16.msra.mxu0 %v3818
    %4313 = vmatprep.subr.bf16.mxu0 %v3812
    %4314 = vmatpush2.bf16.msra.mxu0 %v3811
    %4315 = vmatprep.subr.bf16.mxu0 %v3805
    %4316 = vmatpush2.bf16.msra.mxu0 %v3804
    %4317 = vmatprep.mubr.bf16.mxu0 %v2634
    %4318 = vmatmul.mubr.bf16.gmra.mxu0 %v2633
    %v4319 = vpop.f32.mrf.mxu0
    %v4320 = vadd.f32 %v4279, %v4319
    %v4321 = vpop.f32.mrf.mxu0
    %v4322 = vadd.f32 %v4281, %v4321
    %v4323 = vpop.f32.mrf.mxu0
    %v4324 = vpop.f32.mrf.mxu0
    %4325 = vdwg.mxu0
    %4326 = vmatprep.subr.bf16.mxu0 0
    %4327 = vmatpush1.bf16.msra.mxu0 %v3687
    %4328 = vmatprep.subr.bf16.mxu0 0
    %4329 = vmatpush1.bf16.msra.mxu0 %v3680
    %4330 = vmatprep.subr.bf16.mxu0 0
    %4331 = vmatpush1.bf16.msra.mxu0 %v3673
    %4332 = vmatprep.subr.bf16.mxu0 0
    %4333 = vmatpush1.bf16.msra.mxu0 %v3666
    %4334 = vmatprep.subr.bf16.mxu0 0
    %4335 = vmatpush1.bf16.msra.mxu0 %v3659
    %4336 = vmatprep.subr.bf16.mxu0 0
    %4337 = vmatpush1.bf16.msra.mxu0 %v3652
    %4338 = vmatprep.subr.bf16.mxu0 0
    %4339 = vmatpush1.bf16.msra.mxu0 %v3645
    %4340 = vmatprep.subr.bf16.mxu0 0
    %4341 = vmatpush1.bf16.msra.mxu0 %v3638
    %4342 = vmatprep.subr.bf16.mxu0 0
    %4343 = vmatpush2.bf16.msra.mxu0 %v3743
    %4344 = vmatprep.subr.bf16.mxu0 0
    %4345 = vmatpush2.bf16.msra.mxu0 %v3736
    %4346 = vmatprep.subr.bf16.mxu0 0
    %4347 = vmatpush2.bf16.msra.mxu0 %v3729
    %4348 = vmatprep.subr.bf16.mxu0 0
    %4349 = vmatpush2.bf16.msra.mxu0 %v3722
    %4350 = vmatprep.subr.bf16.mxu0 0
    %4351 = vmatpush2.bf16.msra.mxu0 %v3715
    %4352 = vmatprep.subr.bf16.mxu0 0
    %4353 = vmatpush2.bf16.msra.mxu0 %v3708
    %4354 = vmatprep.subr.bf16.mxu0 0
    %4355 = vmatpush2.bf16.msra.mxu0 %v3701
    %4356 = vmatprep.subr.bf16.mxu0 0
    %4357 = vmatpush2.bf16.msra.mxu0 %v3694
    %4358 = vmatprep.mubr.bf16.mxu0 %v2632
    %4359 = vmatmul.mubr.bf16.gmra.mxu0 %v2631
    %v4360 = vpop.f32.mrf.mxu0
    %v4361 = vadd.f32 %v2920, %v4360
    %v4362 = vpop.f32.mrf.mxu0
    %v4363 = vpop.f32.mrf.mxu0
    %v4364 = vpop.f32.mrf.mxu0
    %4365 = vdwg.mxu0
    %4366 = vmatprep.subr.bf16.mxu0 0
    %4367 = vmatpush1.bf16.msra.mxu0 %v3799
    %4368 = vmatprep.subr.bf16.mxu0 0
    %4369 = vmatpush1.bf16.msra.mxu0 %v3792
    %4370 = vmatprep.subr.bf16.mxu0 0
    %4371 = vmatpush1.bf16.msra.mxu0 %v3785
    %4372 = vmatprep.subr.bf16.mxu0 0
    %4373 = vmatpush1.bf16.msra.mxu0 %v3778
    %4374 = vmatprep.subr.bf16.mxu0 0
    %4375 = vmatpush1.bf16.msra.mxu0 %v3771
    %4376 = vmatprep.subr.bf16.mxu0 0
    %4377 = vmatpush1.bf16.msra.mxu0 %v3764
    %4378 = vmatprep.subr.bf16.mxu0 0
    %4379 = vmatpush1.bf16.msra.mxu0 %v3757
    %4380 = vmatprep.subr.bf16.mxu0 0
    %4381 = vmatpush1.bf16.msra.mxu0 %v3750
    %4382 = vmatprep.subr.bf16.mxu0 0
    %4383 = vmatpush2.bf16.msra.mxu0 %v3855
    %4384 = vmatprep.subr.bf16.mxu0 0
    %4385 = vmatpush2.bf16.msra.mxu0 %v3848
    %4386 = vmatprep.subr.bf16.mxu0 0
    %4387 = vmatpush2.bf16.msra.mxu0 %v3841
    %4388 = vmatprep.subr.bf16.mxu0 0
    %4389 = vmatpush2.bf16.msra.mxu0 %v3834
    %4390 = vmatprep.subr.bf16.mxu0 0
    %4391 = vmatpush2.bf16.msra.mxu0 %v3827
    %4392 = vmatprep.subr.bf16.mxu0 0
    %4393 = vmatpush2.bf16.msra.mxu0 %v3820
    %4394 = vmatprep.subr.bf16.mxu0 0
    %4395 = vmatpush2.bf16.msra.mxu0 %v3813
    %4396 = vmatprep.subr.bf16.mxu0 0
    %4397 = vmatpush2.bf16.msra.mxu0 %v3806
    %4398 = vmatprep.mubr.bf16.mxu0 %v2634
    %4399 = vmatmul.mubr.bf16.gmra.mxu0 %v2633
    %v4400 = vpop.f32.mrf.mxu0
    %v4401 = vadd.f32 %v4361, %v4400
    %v4402 = vpop.f32.mrf.mxu0
    %v4403 = vpop.f32.mrf.mxu0
    %v4404 = vpop.f32.mrf.mxu0
    %4405 = vdwg.mxu0
    %v4406 = vtanh.pop %v4156
    %v4407 = vtanh.pop %v4158
    %v4408 = vtanh.pop %v4238
    %v4409 = vtanh.pop %v4240
    %v4410 = vtanh.pop %v4320
    %v4411 = vtanh.pop %v4322
    %v4412 = vtanh.pop %v4401
    %4413 = vst [vmem:[#allocation14] sm:$0xff] %v4406
    %4414 = vst [vmem:[#allocation14 + $0x8] sm:$0xff] %v4407
    %4415 = vst [vmem:[#allocation14 + $0x10] sm:$0xff] %v4408
    %4416 = vst [vmem:[#allocation14 + $0x18] sm:$0xff] %v4409
    %4417 = vst [vmem:[#allocation14 + $0x20] sm:$0xff] %v4410
    %4418 = vst [vmem:[#allocation14 + $0x28] sm:$0xff] %v4411
    %4419 = vst [vmem:[#allocation14 + $0x30] sm:$0xff] %v4412
    %4420 = vst [vmem:[#allocation15] sm:$0xff] %v2318
    %4421 = vst [vmem:[#allocation17] sm:$0xff] %v2320
    // Predicated region
    $region70: #{tpu_custom_call.1} parent=1 // pred_check
      _
    $region71: #{tpu_custom_call.1} parent=1 // pred_check_branch
      %4423 = sbr.rel (0) target = $region73
    $region72: #{tpu_custom_call.1} parent=1 // pred_region
      %s4425 = ssub.s32 896, 896
      %4426 = vsyncadd [#allocation4], %s4425
      %s4428 = sshll.u32 [#allocation14], 4
      %s4429 = int_to_ptr.vmem [resolvable:$true] %s4428
      %4431 = dma.vmem_to_hbm [thread:$0]  %s4429, 896, %s10, [#allocation4]
    $region73: #{tpu_custom_call.1} parent=1 // pred_fallthru
      _
    // Predicated region
    $region74: #{tpu_custom_call.1} parent=1 // pred_check
      _
    $region75: #{tpu_custom_call.1} parent=1 // pred_check_branch
      %4433 = sbr.rel (0) target = $region77
    $region76: #{tpu_custom_call.1} parent=1 // pred_region
      %s4435 = ssub.s32 128, 128
      %4436 = vsyncadd [#allocation16], %s4435
      %s4438 = sshll.u32 [#allocation15], 4
      %s4439 = int_to_ptr.vmem [resolvable:$true] %s4438
      %4441 = dma.vmem_to_hbm [thread:$0]  %s4439, 128, %s11, [#allocation16]
    $region77: #{tpu_custom_call.1} parent=1 // pred_fallthru
      _
    // Predicated region
    $region78: #{tpu_custom_call.1} parent=1 // pred_check
      _
    $region79: #{tpu_custom_call.1} parent=1 // pred_check_branch
      %4443 = sbr.rel (0) target = $region81
    $region80: #{tpu_custom_call.1} parent=1 // pred_region
      %s4445 = ssub.s32 128, 128
      %4446 = vsyncadd [#allocation16], %s4445
      %s4448 = sshll.u32 [#allocation17], 4
      %s4449 = int_to_ptr.vmem [resolvable:$true] %s4448
      %4451 = dma.vmem_to_hbm [thread:$0]  %s4449, 128, %s12, [#allocation16]
    $region81: #{tpu_custom_call.1} parent=1 // pred_fallthru
      _
    // Predicated region
    $region82: #{tpu_custom_call.1} parent=1 // pred_check
      _
    $region83: #{tpu_custom_call.1} parent=1 // pred_check_branch
      %4453 = sbr.rel (0) target = $region85
    $region84: #{tpu_custom_call.1} parent=1 // pred_region
      %4454 = dma.done [#allocation4], 896
    $region85: #{tpu_custom_call.1} parent=1 // pred_fallthru
      _
    // Predicated region
    $region86: #{tpu_custom_call.1} parent=1 // pred_check
      _
    $region87: #{tpu_custom_call.1} parent=1 // pred_check_branch
      %4456 = sbr.rel (0) target = $region89
    $region88: #{tpu_custom_call.1} parent=1 // pred_region
      %4457 = dma.done [#allocation16], 128
    $region89: #{tpu_custom_call.1} parent=1 // pred_fallthru
      _
    // Predicated region
    $region90: #{tpu_custom_call.1} parent=1 // pred_check
      _
    $region91: #{tpu_custom_call.1} parent=1 // pred_check_branch
      %4459 = sbr.rel (0) target = $region93
    $region92: #{tpu_custom_call.1} parent=1 // pred_region
      %4460 = dma.done [#allocation16], 128
    $region93: #{tpu_custom_call.1} parent=1 // pred_fallthru
      _
    %4461 = vsyncpa [#allocation3], 1
    %4462 = vsyncpa [#allocation6], 1
    %4463 = vsyncpa [#allocation9], 1
    %4464 = vsyncpa [#allocation12], 1
    %4465 = vsyncpa [#allocation4], 1
    %4466 = vsyncpa [#allocation16], 1

</llo_original>
